<compile_context>
chip_gen: v7x
topology: tpu7x:2x2x1
jax: 0.10.0
libtpu: 0.0.40
codegen_flags: <defaults>
</compile_context>

<pallas_src>
import math
import functools

import jax
import jax.numpy as jnp
from jax.experimental import pallas as pl
from jax.experimental.pallas import tpu as pltpu


# ---------------------------------------------------------------------------
# Kernel: one transformer encoder layer, Q-tiled
# ---------------------------------------------------------------------------

def encoder_layer_kernel(x_ref, *rest, num_heads, s_valid, add_pos, tq):
    if add_pos:
        pos_ref = rest[0]
        rest = rest[1:]
    else:
        pos_ref = None
    (wq_ref, wk_ref, wv_ref, bq_ref, bk_ref, bv_ref,
     wo_ref, bo_ref, ln1_g_ref, ln1_b_ref,
     w1_ref, b1_ref, w2_ref, b2_ref, ln2_g_ref, ln2_b_ref,
     o_ref, k_sc, v_sc) = rest

    qi = pl.program_id(1)
    S_pad, C = k_sc.shape
    dk = C // num_heads

    # --- K/V projection for the full sequence, once per batch element -----
    @pl.when(qi == 0)
    def _():
        xf = x_ref[0]                                     # (S_pad, C) f32
        if add_pos:
            xf = xf + pos_ref[...]
        xb = xf.astype(jnp.bfloat16)
        k_sc[...] = (jnp.dot(xb, wk_ref[...],
                             preferred_element_type=jnp.float32)
                     + bk_ref[...]).astype(jnp.bfloat16)
        v_sc[...] = (jnp.dot(xb, wv_ref[...],
                             preferred_element_type=jnp.float32)
                     + bv_ref[...]).astype(jnp.bfloat16)

    # --- Q tile -------------------------------------------------------------
    row0 = pl.multiple_of(qi * tq, tq)
    xt = x_ref[0, pl.ds(row0, tq), :]                     # (TQ, C) f32
    if add_pos:
        xt = xt + pos_ref[pl.ds(row0, tq), :]
    xtb = xt.astype(jnp.bfloat16)
    # 1/sqrt(dk) already folded into wq / bq.
    q = jnp.dot(xtb, wq_ref[...], preferred_element_type=jnp.float32) + bq_ref[...]
    qb = q.astype(jnp.bfloat16)

    kf = k_sc[...]                                        # (S_pad, C) bf16
    vf = v_sc[...]
    wo = wo_ref[...]                                      # (C, C) bf16

    # mask for padded key positions
    key_ids = jax.lax.broadcasted_iota(jnp.int32, (1, S_pad), 1)
    key_bias = jnp.where(key_ids < s_valid, 0.0, -1e30).astype(jnp.float32)

    dn = (((1,), (1,)), ((), ()))                         # contract on dim 1 of both
    attn = jnp.zeros((tq, C), jnp.float32)
    for h in range(num_heads):                            # static unroll over heads
        sl = slice(h * dk, (h + 1) * dk)
        s = jax.lax.dot_general(qb[:, sl], kf[:, sl], dn,
                                preferred_element_type=jnp.float32)  # (TQ, S_pad)
        s = s + key_bias
        p = jnp.exp(s - jnp.max(s, axis=-1, keepdims=True))
        p = p * pl.reciprocal(jnp.sum(p, axis=-1, keepdims=True), approx=True)
        ctx_h = jnp.dot(p.astype(jnp.bfloat16), vf[:, sl],
                        preferred_element_type=jnp.float32)          # (TQ, dk)
        # fused output projection: accumulate per-head rank-dk update
        attn = attn + jnp.dot(ctx_h.astype(jnp.bfloat16), wo[sl, :],
                              preferred_element_type=jnp.float32)
    attn = attn + bo_ref[...]

    # --- residual + LayerNorm(eps=1e-6), f32 --------------------------------
    y = xt + attn
    mu = jnp.mean(y, axis=-1, keepdims=True)
    var = jnp.mean(jnp.square(y - mu), axis=-1, keepdims=True)
    y = (y - mu) * jax.lax.rsqrt(var + 1e-6) * ln1_g_ref[...] + ln1_b_ref[...]

    # --- position-wise FFN: LayerNorm(y + W2 relu(W1 y)) --------------------
    h1 = jnp.maximum(
        jnp.dot(y.astype(jnp.bfloat16), w1_ref[...],
                preferred_element_type=jnp.float32) + b1_ref[...], 0.0)
    f = jnp.dot(h1.astype(jnp.bfloat16), w2_ref[...],
                preferred_element_type=jnp.float32) + b2_ref[...]
    z = y + f
    mu2 = jnp.mean(z, axis=-1, keepdims=True)
    var2 = jnp.mean(jnp.square(z - mu2), axis=-1, keepdims=True)
    z = (z - mu2) * jax.lax.rsqrt(var2 + 1e-6) * ln2_g_ref[...] + ln2_b_ref[...]

    o_ref[0] = z.astype(o_ref.dtype)


# ---------------------------------------------------------------------------
# pallas_call wrapper
# ---------------------------------------------------------------------------

def _const_spec(shape):
    """Whole array resident in VMEM; same block for every grid step."""
    nd = len(shape)
    return pl.BlockSpec(shape, lambda *args, _nd=nd: (0,) * _nd)


def run_encoder_layer(x_bsc, pos_sc, layer_params, num_heads, s_valid, tq, add_pos):
    B, S_pad, C = x_bsc.shape
    nq = S_pad // tq

    xfull_spec = pl.BlockSpec((1, S_pad, C), lambda b, qi: (b, 0, 0))
    out_spec = pl.BlockSpec((1, tq, C), lambda b, qi: (b, qi, 0))

    in_specs = [xfull_spec]
    inputs = [x_bsc]
    if add_pos:
        in_specs.append(_const_spec(pos_sc.shape))
        inputs.append(pos_sc)
    in_specs += [_const_spec(p.shape) for p in layer_params]
    inputs += list(layer_params)

    return pl.pallas_call(
        functools.partial(encoder_layer_kernel, num_heads=num_heads,
                          s_valid=s_valid, add_pos=add_pos, tq=tq),
        out_shape=jax.ShapeDtypeStruct((B, S_pad, C), jnp.float32),
        grid=(B, nq),
        in_specs=in_specs,
        out_specs=out_spec,
        scratch_shapes=[pltpu.VMEM((S_pad, C), jnp.bfloat16),   # K cache
                        pltpu.VMEM((S_pad, C), jnp.bfloat16)],  # V cache
        compiler_params=pltpu.CompilerParams(
            dimension_semantics=("arbitrary", "arbitrary"),
            vmem_limit_bytes=48 * 1024 * 1024),
    )(*inputs)


# ---------------------------------------------------------------------------
# Parameter init (deterministic, synthetic) -- matmul weights stored as bf16
# ---------------------------------------------------------------------------

def init_params(key, d_model, d_inner, num_heads, num_layers, score_size):
    assert d_model % num_heads == 0 and d_model % 2 == 0
    keys = jax.random.split(key, 2 + num_layers)
    half = d_model // 2
    row_embed = 0.1 * jax.random.normal(keys[0], (score_size, half), jnp.float32)
    col_embed = 0.1 * jax.random.normal(keys[1], (score_size, half), jnp.float32)

    dk = d_model // num_heads
    q_scale = 1.0 / math.sqrt(dk)

    layers = []
    for l in range(num_layers):
        lk = jax.random.split(keys[2 + l], 6)
        s_in = 1.0 / math.sqrt(d_model)
        s_hid = 1.0 / math.sqrt(d_inner)

        # nn.MultiheadAttention: in_proj (3C, C), out_proj (C, C)  (torch layout)
        in_proj_w = jax.random.uniform(lk[0], (3 * d_model, d_model),
                                       jnp.float32, -s_in, s_in)
        in_proj_b = jax.random.uniform(lk[1], (3 * d_model,),
                                       jnp.float32, -s_in, s_in)
        out_w = jax.random.uniform(lk[2], (d_model, d_model),
                                   jnp.float32, -s_in, s_in)
        out_b = jnp.zeros((1, d_model), jnp.float32)

        # pre-transpose so kernels compute x @ W; fold 1/sqrt(dk) into Wq, bq
        wq_t = (in_proj_w[:d_model].T * q_scale).astype(jnp.bfloat16)
        wk_t = in_proj_w[d_model:2 * d_model].T.astype(jnp.bfloat16)
        wv_t = in_proj_w[2 * d_model:].T.astype(jnp.bfloat16)
        bq = (in_proj_b[:d_model] * q_scale).reshape(1, d_model)
        bk = in_proj_b[d_model:2 * d_model].reshape(1, d_model)
        bv = in_proj_b[2 * d_model:].reshape(1, d_model)
        wo_t = out_w.T.astype(jnp.bfloat16)

        # LayerNorm after attention
        ln1_g = jnp.ones((1, d_model), jnp.float32)
        ln1_b = jnp.zeros((1, d_model), jnp.float32)

        # PositionWiseFeedForward: w1 (d_inner, d_model), w2 (d_model, d_inner)
        w1 = jax.random.uniform(lk[3], (d_inner, d_model), jnp.float32, -s_in, s_in)
        b1 = jnp.zeros((1, d_inner), jnp.float32)
        w2 = jax.random.uniform(lk[4], (d_model, d_inner), jnp.float32, -s_hid, s_hid)
        b2 = jnp.zeros((1, d_model), jnp.float32)
        ln2_g = jnp.ones((1, d_model), jnp.float32)
        ln2_b = jnp.zeros((1, d_model), jnp.float32)

        layers.append([wq_t, wk_t, wv_t, bq, bk, bv,
                       wo_t, out_b,
                       ln1_g, ln1_b,
                       w1.T.astype(jnp.bfloat16), b1,
                       w2.T.astype(jnp.bfloat16), b2,
                       ln2_g, ln2_b])

    return row_embed, col_embed, layers


# ---------------------------------------------------------------------------
# Encoder forward (matches Encoder.forward)
# ---------------------------------------------------------------------------

def encoder_forward(x_nchw, params, num_heads):
    row_embed, col_embed, layers = params
    B, C, H, W = x_nchw.shape
    S = H * W
    S_pad = ((S + 127) // 128) * 128          # lane-dense score tiles
    tq = 128                                  # query-row tile

    # SpatialPositionEncodingLearned (DETR-style): pos[:, h, w] = [col(w), row(h)]
    col = jnp.broadcast_to(col_embed[None, :, :], (H, W, col_embed.shape[-1]))
    row = jnp.broadcast_to(row_embed[:, None, :], (H, W, row_embed.shape[-1]))
    pos_sc = jnp.concatenate([col, row], axis=-1).reshape(S, C)     # (S, C)
    pos_sc = jnp.pad(pos_sc, ((0, S_pad - S), (0, 0)))

    # x.view(B, C, H*W).permute(2, 0, 1) uses the same (h, w) flatten order.
    x_bsc = x_nchw.reshape(B, C, S).transpose(0, 2, 1)              # (B, S, C)
    x_bsc = jnp.pad(x_bsc, ((0, 0), (0, S_pad - S), (0, 0)))        # (B, S_pad, C)

    for li, layer_params in enumerate(layers):
        x_bsc = run_encoder_layer(x_bsc, pos_sc, layer_params, num_heads,
                                  s_valid=S, tq=tq, add_pos=(li == 0))

    # strip padding and return the module's (S, B, C) layout
    return x_bsc[:, :S, :].transpose(1, 0, 2)


# ---------------------------------------------------------------------------

if __name__ == "__main__":
    # small shapes consistent with the module (scaled down from 256/2048/8/8/33)
    d_model, d_inner, num_heads, num_layers, score_size = 32, 64, 4, 2, 8
    B = 2

    key = jax.random.PRNGKey(0)
    kx, kp = jax.random.split(key)
    x = jax.random.normal(kx, (B, d_model, score_size, score_size), jnp.float32)
    params = init_params(kp, d_model, d_inner, num_heads, num_layers, score_size)

    out = encoder_forward(x, params, num_heads)
    out = jax.block_until_ready(out)

    assert out.shape == (score_size * score_size, B, d_model), out.shape
    assert bool(jnp.all(jnp.isfinite(out)))
    print("KERNEL_OK")
</pallas_src>

<mosaic_0001>
module attributes {stable_mosaic.version = 11 : i64} {
  func.func @encoder_layer_kernel(%arg0: i32, %arg1: i32, %arg2: memref<1x128x32xf32, #tpu.memory_space<vmem>>, %arg3: memref<128x32xf32, #tpu.memory_space<vmem>>, %arg4: memref<32x32xbf16, #tpu.memory_space<vmem>>, %arg5: memref<32x32xbf16, #tpu.memory_space<vmem>>, %arg6: memref<32x32xbf16, #tpu.memory_space<vmem>>, %arg7: memref<1x32xf32, #tpu.memory_space<vmem>>, %arg8: memref<1x32xf32, #tpu.memory_space<vmem>>, %arg9: memref<1x32xf32, #tpu.memory_space<vmem>>, %arg10: memref<32x32xbf16, #tpu.memory_space<vmem>>, %arg11: memref<1x32xf32, #tpu.memory_space<vmem>>, %arg12: memref<1x32xf32, #tpu.memory_space<vmem>>, %arg13: memref<1x32xf32, #tpu.memory_space<vmem>>, %arg14: memref<32x64xbf16, #tpu.memory_space<vmem>>, %arg15: memref<1x64xf32, #tpu.memory_space<vmem>>, %arg16: memref<64x32xbf16, #tpu.memory_space<vmem>>, %arg17: memref<1x32xf32, #tpu.memory_space<vmem>>, %arg18: memref<1x32xf32, #tpu.memory_space<vmem>>, %arg19: memref<1x32xf32, #tpu.memory_space<vmem>>, %arg20: memref<1x128x32xf32, #tpu.memory_space<vmem>>, %arg21: memref<128x32xbf16, #tpu.memory_space<vmem>>, %arg22: memref<128x32xbf16, #tpu.memory_space<vmem>>) attributes {dimension_semantics = [#tpu.dimension_semantics<arbitrary>, #tpu.dimension_semantics<arbitrary>], iteration_bounds = array<i64: 2, 1>, scalar_prefetch = 0 : i64, scratch_operands = 2 : i64, tpu.core_type = #tpu.core_type<tc>, window_params = [{transform_indices = @transform_0, window_bounds = array<i64: 1, 128, 32>}, {pipeline_mode = #tpu.pipeline_mode<synchronous>, transform_indices = @transform_1, window_bounds = array<i64: 128, 32>}, {pipeline_mode = #tpu.pipeline_mode<synchronous>, transform_indices = @transform_2, window_bounds = array<i64: 32, 32>}, {pipeline_mode = #tpu.pipeline_mode<synchronous>, transform_indices = @transform_3, window_bounds = array<i64: 32, 32>}, {pipeline_mode = #tpu.pipeline_mode<synchronous>, transform_indices = @transform_4, window_bounds = array<i64: 32, 32>}, {pipeline_mode = #tpu.pipeline_mode<synchronous>, transform_indices = @transform_5, window_bounds = array<i64: 1, 32>}, {pipeline_mode = #tpu.pipeline_mode<synchronous>, transform_indices = @transform_6, window_bounds = array<i64: 1, 32>}, {pipeline_mode = #tpu.pipeline_mode<synchronous>, transform_indices = @transform_7, window_bounds = array<i64: 1, 32>}, {pipeline_mode = #tpu.pipeline_mode<synchronous>, transform_indices = @transform_8, window_bounds = array<i64: 32, 32>}, {pipeline_mode = #tpu.pipeline_mode<synchronous>, transform_indices = @transform_9, window_bounds = array<i64: 1, 32>}, {pipeline_mode = #tpu.pipeline_mode<synchronous>, transform_indices = @transform_10, window_bounds = array<i64: 1, 32>}, {pipeline_mode = #tpu.pipeline_mode<synchronous>, transform_indices = @transform_11, window_bounds = array<i64: 1, 32>}, {pipeline_mode = #tpu.pipeline_mode<synchronous>, transform_indices = @transform_12, window_bounds = array<i64: 32, 64>}, {pipeline_mode = #tpu.pipeline_mode<synchronous>, transform_indices = @transform_13, window_bounds = array<i64: 1, 64>}, {pipeline_mode = #tpu.pipeline_mode<synchronous>, transform_indices = @transform_14, window_bounds = array<i64: 64, 32>}, {pipeline_mode = #tpu.pipeline_mode<synchronous>, transform_indices = @transform_15, window_bounds = array<i64: 1, 32>}, {pipeline_mode = #tpu.pipeline_mode<synchronous>, transform_indices = @transform_16, window_bounds = array<i64: 1, 32>}, {pipeline_mode = #tpu.pipeline_mode<synchronous>, transform_indices = @transform_17, window_bounds = array<i64: 1, 32>}, {transform_indices = @transform_18, window_bounds = array<i64: 1, 128, 32>}]} {
    %c0_i32 = arith.constant 0 : i32
    %0 = arith.cmpi eq, %arg1, %c0_i32 : i32
    %1 = arith.extui %0 : i1 to i32
    %c0_i32_0 = arith.constant 0 : i32
    %2 = arith.cmpi ne, %1, %c0_i32_0 : i32
    scf.if %2 {
      %c0_70 = arith.constant 0 : index
      %c0_71 = arith.constant 0 : index
      %c0_72 = arith.constant 0 : index
      %186 = vector.load %arg2[%c0_70, %c0_71, %c0_72] : memref<1x128x32xf32, #tpu.memory_space<vmem>>, vector<1x128x32xf32>
      %187 = vector.shape_cast %186 : vector<1x128x32xf32> to vector<128x32xf32>
      %c0_73 = arith.constant 0 : index
      %c0_74 = arith.constant 0 : index
      %188 = vector.load %arg3[%c0_73, %c0_74] : memref<128x32xf32, #tpu.memory_space<vmem>>, vector<128x32xf32>
      %189 = arith.addf %187, %188 : vector<128x32xf32>
      %190 = arith.truncf %189 : vector<128x32xf32> to vector<128x32xbf16>
      %c0_75 = arith.constant 0 : index
      %c0_76 = arith.constant 0 : index
      %191 = vector.load %arg5[%c0_75, %c0_76] : memref<32x32xbf16, #tpu.memory_space<vmem>>, vector<32x32xbf16>
      %cst_77 = arith.constant dense<0.000000e+00> : vector<128x32xf32>
      %192 = tpu.matmul %190, %191, %cst_77 {dimension_numbers = #tpu.dot_dimension_numbers<[1], [0], [0], [1], [0, 0, 1, 1], [], []>} : vector<128x32xbf16>, vector<32x32xbf16>, vector<128x32xf32> -> vector<128x32xf32>
      %c0_78 = arith.constant 0 : index
      %c0_79 = arith.constant 0 : index
      %193 = vector.load %arg8[%c0_78, %c0_79] : memref<1x32xf32, #tpu.memory_space<vmem>>, vector<1x32xf32>
      %194 = vector.broadcast %193 : vector<1x32xf32> to vector<128x32xf32>
      %195 = arith.addf %192, %194 : vector<128x32xf32>
      %196 = arith.truncf %195 : vector<128x32xf32> to vector<128x32xbf16>
      %c0_80 = arith.constant 0 : index
      %c0_81 = arith.constant 0 : index
      %197 = vector.load %arg21[%c0_80, %c0_81] : memref<128x32xbf16, #tpu.memory_space<vmem>>, vector<128x32xbf16>
      tpu.vector_store %arg21[%c0_80, %c0_81], %196 {strides = array<i32>} : memref<128x32xbf16, #tpu.memory_space<vmem>>, vector<128x32xbf16>,
      %c0_82 = arith.constant 0 : index
      %c0_83 = arith.constant 0 : index
      %198 = vector.load %arg6[%c0_82, %c0_83] : memref<32x32xbf16, #tpu.memory_space<vmem>>, vector<32x32xbf16>
      %cst_84 = arith.constant dense<0.000000e+00> : vector<128x32xf32>
      %199 = tpu.matmul %190, %198, %cst_84 {dimension_numbers = #tpu.dot_dimension_numbers<[1], [0], [0], [1], [0, 0, 1, 1], [], []>} : vector<128x32xbf16>, vector<32x32xbf16>, vector<128x32xf32> -> vector<128x32xf32>
      %c0_85 = arith.constant 0 : index
      %c0_86 = arith.constant 0 : index
      %200 = vector.load %arg9[%c0_85, %c0_86] : memref<1x32xf32, #tpu.memory_space<vmem>>, vector<1x32xf32>
      %201 = vector.broadcast %200 : vector<1x32xf32> to vector<128x32xf32>
      %202 = arith.addf %199, %201 : vector<128x32xf32>
      %203 = arith.truncf %202 : vector<128x32xf32> to vector<128x32xbf16>
      %c0_87 = arith.constant 0 : index
      %c0_88 = arith.constant 0 : index
      %204 = vector.load %arg22[%c0_87, %c0_88] : memref<128x32xbf16, #tpu.memory_space<vmem>>, vector<128x32xbf16>
      tpu.vector_store %arg22[%c0_87, %c0_88], %203 {strides = array<i32>} : memref<128x32xbf16, #tpu.memory_space<vmem>>, vector<128x32xbf16>,
    } else {
    }
    %c128_i32 = arith.constant 128 : i32
    %3 = arith.muli %arg1, %c128_i32 : i32
    %4 = tpu.assume_multiple %3, 128 : i32
    %c0 = arith.constant 0 : index
    %5 = arith.index_cast %4 : i32 to index
    %c0_1 = arith.constant 0 : index
    %6 = vector.load %arg2[%c0, %5, %c0_1] : memref<1x128x32xf32, #tpu.memory_space<vmem>>, vector<1x128x32xf32>
    %7 = vector.shape_cast %6 : vector<1x128x32xf32> to vector<128x32xf32>
    %8 = arith.index_cast %4 : i32 to index
    %c0_2 = arith.constant 0 : index
    %9 = vector.load %arg3[%8, %c0_2] : memref<128x32xf32, #tpu.memory_space<vmem>>, vector<128x32xf32>
    %10 = arith.addf %7, %9 : vector<128x32xf32>
    %11 = arith.truncf %10 : vector<128x32xf32> to vector<128x32xbf16>
    %c0_3 = arith.constant 0 : index
    %c0_4 = arith.constant 0 : index
    %12 = vector.load %arg4[%c0_3, %c0_4] : memref<32x32xbf16, #tpu.memory_space<vmem>>, vector<32x32xbf16>
    %cst = arith.constant dense<0.000000e+00> : vector<128x32xf32>
    %13 = tpu.matmul %11, %12, %cst {dimension_numbers = #tpu.dot_dimension_numbers<[1], [0], [0], [1], [0, 0, 1, 1], [], []>} : vector<128x32xbf16>, vector<32x32xbf16>, vector<128x32xf32> -> vector<128x32xf32>
    %c0_5 = arith.constant 0 : index
    %c0_6 = arith.constant 0 : index
    %14 = vector.load %arg7[%c0_5, %c0_6] : memref<1x32xf32, #tpu.memory_space<vmem>>, vector<1x32xf32>
    %15 = vector.broadcast %14 : vector<1x32xf32> to vector<128x32xf32>
    %16 = arith.addf %13, %15 : vector<128x32xf32>
    %17 = arith.truncf %16 : vector<128x32xf32> to vector<128x32xbf16>
    %c0_7 = arith.constant 0 : index
    %c0_8 = arith.constant 0 : index
    %18 = vector.load %arg21[%c0_7, %c0_8] : memref<128x32xbf16, #tpu.memory_space<vmem>>, vector<128x32xbf16>
    %c0_9 = arith.constant 0 : index
    %c0_10 = arith.constant 0 : index
    %19 = vector.load %arg22[%c0_9, %c0_10] : memref<128x32xbf16, #tpu.memory_space<vmem>>, vector<128x32xbf16>
    %c0_11 = arith.constant 0 : index
    %c0_12 = arith.constant 0 : index
    %20 = vector.load %arg10[%c0_11, %c0_12] : memref<32x32xbf16, #tpu.memory_space<vmem>>, vector<32x32xbf16>
    %21 = tpu.iota {dimensions = array<i32: 1>} : vector<1x128xi32>
    %c64_i32 = arith.constant 64 : i32
    %22 = vector.broadcast %c64_i32 : i32 to vector<1x128xi32>
    %23 = arith.cmpi slt, %21, %22 : vector<1x128xi32>
    %cst_13 = arith.constant 0.000000e+00 : f32
    %cst_14 = arith.constant -1.000000e+30 : f32
    %24 = vector.broadcast %cst_13 : f32 to vector<1x128xf32>
    %25 = vector.broadcast %cst_14 : f32 to vector<1x128xf32>
    %26 = arith.select %23, %24, %25 : vector<1x128xi1>, vector<1x128xf32>
    %cst_15 = arith.constant 0.000000e+00 : f32
    %27 = vector.broadcast %cst_15 : f32 to vector<128x32xf32>
    %28 = vector.extract_strided_slice %17 {offsets = [0, 0], sizes = [128, 8], strides = [1, 1]} : vector<128x32xbf16> to vector<128x8xbf16>
    %29 = vector.extract_strided_slice %18 {offsets = [0, 0], sizes = [128, 8], strides = [1, 1]} : vector<128x32xbf16> to vector<128x8xbf16>
    %cst_16 = arith.constant dense<0.000000e+00> : vector<128x128xf32>
    %30 = tpu.matmul %28, %29, %cst_16 {dimension_numbers = #tpu.dot_dimension_numbers<[1], [1], [0], [0], [0, 0, 1, 0], [], []>} : vector<128x8xbf16>, vector<128x8xbf16>, vector<128x128xf32> -> vector<128x128xf32>
    %31 = vector.broadcast %26 : vector<1x128xf32> to vector<128x128xf32>
    %32 = arith.addf %30, %31 : vector<128x128xf32>
    %cst_17 = arith.constant dense<0xFF800000> : vector<128xf32>
    %33 = vector.multi_reduction <maximumf>, %32, %cst_17 [1] : vector<128x128xf32> to vector<128xf32>
    %34 = vector.shape_cast %33 : vector<128xf32> to vector<128x1xf32>
    %35 = vector.broadcast %34 : vector<128x1xf32> to vector<128x128xf32>
    %36 = arith.subf %32, %35 : vector<128x128xf32>
    %37 = math.exp %36 : vector<128x128xf32>
    %cst_18 = arith.constant dense<0.000000e+00> : vector<128xf32>
    %38 = vector.multi_reduction <add>, %37, %cst_18 [1] : vector<128x128xf32> to vector<128xf32>
    %39 = vector.shape_cast %38 : vector<128xf32> to vector<128x1xf32>
    %40 = tpu.reciprocal %39 {approx = true} : vector<128x1xf32> -> vector<128x1xf32>
    %41 = vector.broadcast %40 : vector<128x1xf32> to vector<128x128xf32>
    %42 = arith.mulf %37, %41 : vector<128x128xf32>
    %43 = arith.truncf %42 : vector<128x128xf32> to vector<128x128xbf16>
    %44 = vector.extract_strided_slice %19 {offsets = [0, 0], sizes = [128, 8], strides = [1, 1]} : vector<128x32xbf16> to vector<128x8xbf16>
    %cst_19 = arith.constant dense<0.000000e+00> : vector<128x8xf32>
    %45 = tpu.matmul %43, %44, %cst_19 {dimension_numbers = #tpu.dot_dimension_numbers<[1], [0], [0], [1], [0, 0, 1, 1], [], []>} : vector<128x128xbf16>, vector<128x8xbf16>, vector<128x8xf32> -> vector<128x8xf32>
    %46 = arith.truncf %45 : vector<128x8xf32> to vector<128x8xbf16>
    %47 = vector.extract_strided_slice %20 {offsets = [0, 0], sizes = [8, 32], strides = [1, 1]} : vector<32x32xbf16> to vector<8x32xbf16>
    %cst_20 = arith.constant dense<0.000000e+00> : vector<128x32xf32>
    %48 = tpu.matmul %46, %47, %cst_20 {dimension_numbers = #tpu.dot_dimension_numbers<[1], [0], [0], [1], [0, 0, 1, 1], [], []>} : vector<128x8xbf16>, vector<8x32xbf16>, vector<128x32xf32> -> vector<128x32xf32>
    %49 = arith.addf %27, %48 : vector<128x32xf32>
    %50 = vector.extract_strided_slice %17 {offsets = [0, 8], sizes = [128, 8], strides = [1, 1]} : vector<128x32xbf16> to vector<128x8xbf16>
    %51 = vector.extract_strided_slice %18 {offsets = [0, 8], sizes = [128, 8], strides = [1, 1]} : vector<128x32xbf16> to vector<128x8xbf16>
    %cst_21 = arith.constant dense<0.000000e+00> : vector<128x128xf32>
    %52 = tpu.matmul %50, %51, %cst_21 {dimension_numbers = #tpu.dot_dimension_numbers<[1], [1], [0], [0], [0, 0, 1, 0], [], []>} : vector<128x8xbf16>, vector<128x8xbf16>, vector<128x128xf32> -> vector<128x128xf32>
    %53 = vector.broadcast %26 : vector<1x128xf32> to vector<128x128xf32>
    %54 = arith.addf %52, %53 : vector<128x128xf32>
    %cst_22 = arith.constant dense<0xFF800000> : vector<128xf32>
    %55 = vector.multi_reduction <maximumf>, %54, %cst_22 [1] : vector<128x128xf32> to vector<128xf32>
    %56 = vector.shape_cast %55 : vector<128xf32> to vector<128x1xf32>
    %57 = vector.broadcast %56 : vector<128x1xf32> to vector<128x128xf32>
    %58 = arith.subf %54, %57 : vector<128x128xf32>
    %59 = math.exp %58 : vector<128x128xf32>
    %cst_23 = arith.constant dense<0.000000e+00> : vector<128xf32>
    %60 = vector.multi_reduction <add>, %59, %cst_23 [1] : vector<128x128xf32> to vector<128xf32>
    %61 = vector.shape_cast %60 : vector<128xf32> to vector<128x1xf32>
    %62 = tpu.reciprocal %61 {approx = true} : vector<128x1xf32> -> vector<128x1xf32>
    %63 = vector.broadcast %62 : vector<128x1xf32> to vector<128x128xf32>
    %64 = arith.mulf %59, %63 : vector<128x128xf32>
    %65 = arith.truncf %64 : vector<128x128xf32> to vector<128x128xbf16>
    %66 = vector.extract_strided_slice %19 {offsets = [0, 8], sizes = [128, 8], strides = [1, 1]} : vector<128x32xbf16> to vector<128x8xbf16>
    %cst_24 = arith.constant dense<0.000000e+00> : vector<128x8xf32>
    %67 = tpu.matmul %65, %66, %cst_24 {dimension_numbers = #tpu.dot_dimension_numbers<[1], [0], [0], [1], [0, 0, 1, 1], [], []>} : vector<128x128xbf16>, vector<128x8xbf16>, vector<128x8xf32> -> vector<128x8xf32>
    %68 = arith.truncf %67 : vector<128x8xf32> to vector<128x8xbf16>
    %69 = vector.extract_strided_slice %20 {offsets = [8, 0], sizes = [8, 32], strides = [1, 1]} : vector<32x32xbf16> to vector<8x32xbf16>
    %cst_25 = arith.constant dense<0.000000e+00> : vector<128x32xf32>
    %70 = tpu.matmul %68, %69, %cst_25 {dimension_numbers = #tpu.dot_dimension_numbers<[1], [0], [0], [1], [0, 0, 1, 1], [], []>} : vector<128x8xbf16>, vector<8x32xbf16>, vector<128x32xf32> -> vector<128x32xf32>
    %71 = arith.addf %49, %70 : vector<128x32xf32>
    %72 = vector.extract_strided_slice %17 {offsets = [0, 16], sizes = [128, 8], strides = [1, 1]} : vector<128x32xbf16> to vector<128x8xbf16>
    %73 = vector.extract_strided_slice %18 {offsets = [0, 16], sizes = [128, 8], strides = [1, 1]} : vector<128x32xbf16> to vector<128x8xbf16>
    %cst_26 = arith.constant dense<0.000000e+00> : vector<128x128xf32>
    %74 = tpu.matmul %72, %73, %cst_26 {dimension_numbers = #tpu.dot_dimension_numbers<[1], [1], [0], [0], [0, 0, 1, 0], [], []>} : vector<128x8xbf16>, vector<128x8xbf16>, vector<128x128xf32> -> vector<128x128xf32>
    %75 = vector.broadcast %26 : vector<1x128xf32> to vector<128x128xf32>
    %76 = arith.addf %74, %75 : vector<128x128xf32>
    %cst_27 = arith.constant dense<0xFF800000> : vector<128xf32>
    %77 = vector.multi_reduction <maximumf>, %76, %cst_27 [1] : vector<128x128xf32> to vector<128xf32>
    %78 = vector.shape_cast %77 : vector<128xf32> to vector<128x1xf32>
    %79 = vector.broadcast %78 : vector<128x1xf32> to vector<128x128xf32>
    %80 = arith.subf %76, %79 : vector<128x128xf32>
    %81 = math.exp %80 : vector<128x128xf32>
    %cst_28 = arith.constant dense<0.000000e+00> : vector<128xf32>
    %82 = vector.multi_reduction <add>, %81, %cst_28 [1] : vector<128x128xf32> to vector<128xf32>
    %83 = vector.shape_cast %82 : vector<128xf32> to vector<128x1xf32>
    %84 = tpu.reciprocal %83 {approx = true} : vector<128x1xf32> -> vector<128x1xf32>
    %85 = vector.broadcast %84 : vector<128x1xf32> to vector<128x128xf32>
    %86 = arith.mulf %81, %85 : vector<128x128xf32>
    %87 = arith.truncf %86 : vector<128x128xf32> to vector<128x128xbf16>
    %88 = vector.extract_strided_slice %19 {offsets = [0, 16], sizes = [128, 8], strides = [1, 1]} : vector<128x32xbf16> to vector<128x8xbf16>
    %cst_29 = arith.constant dense<0.000000e+00> : vector<128x8xf32>
    %89 = tpu.matmul %87, %88, %cst_29 {dimension_numbers = #tpu.dot_dimension_numbers<[1], [0], [0], [1], [0, 0, 1, 1], [], []>} : vector<128x128xbf16>, vector<128x8xbf16>, vector<128x8xf32> -> vector<128x8xf32>
    %90 = arith.truncf %89 : vector<128x8xf32> to vector<128x8xbf16>
    %91 = vector.extract_strided_slice %20 {offsets = [16, 0], sizes = [8, 32], strides = [1, 1]} : vector<32x32xbf16> to vector<8x32xbf16>
    %cst_30 = arith.constant dense<0.000000e+00> : vector<128x32xf32>
    %92 = tpu.matmul %90, %91, %cst_30 {dimension_numbers = #tpu.dot_dimension_numbers<[1], [0], [0], [1], [0, 0, 1, 1], [], []>} : vector<128x8xbf16>, vector<8x32xbf16>, vector<128x32xf32> -> vector<128x32xf32>
    %93 = arith.addf %71, %92 : vector<128x32xf32>
    %94 = vector.extract_strided_slice %17 {offsets = [0, 24], sizes = [128, 8], strides = [1, 1]} : vector<128x32xbf16> to vector<128x8xbf16>
    %95 = vector.extract_strided_slice %18 {offsets = [0, 24], sizes = [128, 8], strides = [1, 1]} : vector<128x32xbf16> to vector<128x8xbf16>
    %cst_31 = arith.constant dense<0.000000e+00> : vector<128x128xf32>
    %96 = tpu.matmul %94, %95, %cst_31 {dimension_numbers = #tpu.dot_dimension_numbers<[1], [1], [0], [0], [0, 0, 1, 0], [], []>} : vector<128x8xbf16>, vector<128x8xbf16>, vector<128x128xf32> -> vector<128x128xf32>
    %97 = vector.broadcast %26 : vector<1x128xf32> to vector<128x128xf32>
    %98 = arith.addf %96, %97 : vector<128x128xf32>
    %cst_32 = arith.constant dense<0xFF800000> : vector<128xf32>
    %99 = vector.multi_reduction <maximumf>, %98, %cst_32 [1] : vector<128x128xf32> to vector<128xf32>
    %100 = vector.shape_cast %99 : vector<128xf32> to vector<128x1xf32>
    %101 = vector.broadcast %100 : vector<128x1xf32> to vector<128x128xf32>
    %102 = arith.subf %98, %101 : vector<128x128xf32>
    %103 = math.exp %102 : vector<128x128xf32>
    %cst_33 = arith.constant dense<0.000000e+00> : vector<128xf32>
    %104 = vector.multi_reduction <add>, %103, %cst_33 [1] : vector<128x128xf32> to vector<128xf32>
    %105 = vector.shape_cast %104 : vector<128xf32> to vector<128x1xf32>
    %106 = tpu.reciprocal %105 {approx = true} : vector<128x1xf32> -> vector<128x1xf32>
    %107 = vector.broadcast %106 : vector<128x1xf32> to vector<128x128xf32>
    %108 = arith.mulf %103, %107 : vector<128x128xf32>
    %109 = arith.truncf %108 : vector<128x128xf32> to vector<128x128xbf16>
    %110 = vector.extract_strided_slice %19 {offsets = [0, 24], sizes = [128, 8], strides = [1, 1]} : vector<128x32xbf16> to vector<128x8xbf16>
    %cst_34 = arith.constant dense<0.000000e+00> : vector<128x8xf32>
    %111 = tpu.matmul %109, %110, %cst_34 {dimension_numbers = #tpu.dot_dimension_numbers<[1], [0], [0], [1], [0, 0, 1, 1], [], []>} : vector<128x128xbf16>, vector<128x8xbf16>, vector<128x8xf32> -> vector<128x8xf32>
    %112 = arith.truncf %111 : vector<128x8xf32> to vector<128x8xbf16>
    %113 = vector.extract_strided_slice %20 {offsets = [24, 0], sizes = [8, 32], strides = [1, 1]} : vector<32x32xbf16> to vector<8x32xbf16>
    %cst_35 = arith.constant dense<0.000000e+00> : vector<128x32xf32>
    %114 = tpu.matmul %112, %113, %cst_35 {dimension_numbers = #tpu.dot_dimension_numbers<[1], [0], [0], [1], [0, 0, 1, 1], [], []>} : vector<128x8xbf16>, vector<8x32xbf16>, vector<128x32xf32> -> vector<128x32xf32>
    %115 = arith.addf %93, %114 : vector<128x32xf32>
    %c0_36 = arith.constant 0 : index
    %c0_37 = arith.constant 0 : index
    %116 = vector.load %arg11[%c0_36, %c0_37] : memref<1x32xf32, #tpu.memory_space<vmem>>, vector<1x32xf32>
    %117 = vector.broadcast %116 : vector<1x32xf32> to vector<128x32xf32>
    %118 = arith.addf %115, %117 : vector<128x32xf32>
    %119 = arith.addf %10, %118 : vector<128x32xf32>
    %cst_38 = arith.constant dense<0.000000e+00> : vector<128xf32>
    %120 = vector.multi_reduction <add>, %119, %cst_38 [1] : vector<128x32xf32> to vector<128xf32>
    %121 = vector.shape_cast %120 : vector<128xf32> to vector<128x1xf32>
    %cst_39 = arith.constant 3.200000e+01 : f32
    %122 = vector.broadcast %cst_39 : f32 to vector<128x1xf32>
    %123 = arith.divf %121, %122 : vector<128x1xf32>
    %124 = vector.broadcast %123 : vector<128x1xf32> to vector<128x32xf32>
    %125 = arith.subf %119, %124 : vector<128x32xf32>
    %126 = arith.mulf %125, %125 : vector<128x32xf32>
    %cst_40 = arith.constant dense<0.000000e+00> : vector<128xf32>
    %127 = vector.multi_reduction <add>, %126, %cst_40 [1] : vector<128x32xf32> to vector<128xf32>
    %128 = vector.shape_cast %127 : vector<128xf32> to vector<128x1xf32>
    %cst_41 = arith.constant 3.200000e+01 : f32
    %129 = vector.broadcast %cst_41 : f32 to vector<128x1xf32>
    %130 = arith.divf %128, %129 : vector<128x1xf32>
    %131 = vector.broadcast %123 : vector<128x1xf32> to vector<128x32xf32>
    %132 = arith.subf %119, %131 : vector<128x32xf32>
    %cst_42 = arith.constant 9.99999997E-7 : f32
    %133 = vector.broadcast %cst_42 : f32 to vector<128x1xf32>
    %134 = arith.addf %130, %133 : vector<128x1xf32>
    %135 = math.rsqrt %134 : vector<128x1xf32>
    %136 = vector.broadcast %135 : vector<128x1xf32> to vector<128x32xf32>
    %137 = arith.mulf %132, %136 : vector<128x32xf32>
    %c0_43 = arith.constant 0 : index
    %c0_44 = arith.constant 0 : index
    %138 = vector.load %arg12[%c0_43, %c0_44] : memref<1x32xf32, #tpu.memory_space<vmem>>, vector<1x32xf32>
    %139 = vector.broadcast %138 : vector<1x32xf32> to vector<128x32xf32>
    %140 = arith.mulf %137, %139 : vector<128x32xf32>
    %c0_45 = arith.constant 0 : index
    %c0_46 = arith.constant 0 : index
    %141 = vector.load %arg13[%c0_45, %c0_46] : memref<1x32xf32, #tpu.memory_space<vmem>>, vector<1x32xf32>
    %142 = vector.broadcast %141 : vector<1x32xf32> to vector<128x32xf32>
    %143 = arith.addf %140, %142 : vector<128x32xf32>
    %144 = arith.truncf %143 : vector<128x32xf32> to vector<128x32xbf16>
    %c0_47 = arith.constant 0 : index
    %c0_48 = arith.constant 0 : index
    %145 = vector.load %arg14[%c0_47, %c0_48] : memref<32x64xbf16, #tpu.memory_space<vmem>>, vector<32x64xbf16>
    %cst_49 = arith.constant dense<0.000000e+00> : vector<128x64xf32>
    %146 = tpu.matmul %144, %145, %cst_49 {dimension_numbers = #tpu.dot_dimension_numbers<[1], [0], [0], [1], [0, 0, 1, 1], [], []>} : vector<128x32xbf16>, vector<32x64xbf16>, vector<128x64xf32> -> vector<128x64xf32>
    %c0_50 = arith.constant 0 : index
    %c0_51 = arith.constant 0 : index
    %147 = vector.load %arg15[%c0_50, %c0_51] : memref<1x64xf32, #tpu.memory_space<vmem>>, vector<1x64xf32>
    %148 = vector.broadcast %147 : vector<1x64xf32> to vector<128x64xf32>
    %149 = arith.addf %146, %148 : vector<128x64xf32>
    %cst_52 = arith.constant 0.000000e+00 : f32
    %150 = vector.broadcast %cst_52 : f32 to vector<128x64xf32>
    %151 = arith.maximumf %149, %150 : vector<128x64xf32>
    %152 = arith.truncf %151 : vector<128x64xf32> to vector<128x64xbf16>
    %c0_53 = arith.constant 0 : index
    %c0_54 = arith.constant 0 : index
    %153 = vector.load %arg16[%c0_53, %c0_54] : memref<64x32xbf16, #tpu.memory_space<vmem>>, vector<64x32xbf16>
    %cst_55 = arith.constant dense<0.000000e+00> : vector<128x32xf32>
    %154 = tpu.matmul %152, %153, %cst_55 {dimension_numbers = #tpu.dot_dimension_numbers<[1], [0], [0], [1], [0, 0, 1, 1], [], []>} : vector<128x64xbf16>, vector<64x32xbf16>, vector<128x32xf32> -> vector<128x32xf32>
    %c0_56 = arith.constant 0 : index
    %c0_57 = arith.constant 0 : index
    %155 = vector.load %arg17[%c0_56, %c0_57] : memref<1x32xf32, #tpu.memory_space<vmem>>, vector<1x32xf32>
    %156 = vector.broadcast %155 : vector<1x32xf32> to vector<128x32xf32>
    %157 = arith.addf %154, %156 : vector<128x32xf32>
    %158 = arith.addf %143, %157 : vector<128x32xf32>
    %cst_58 = arith.constant dense<0.000000e+00> : vector<128xf32>
    %159 = vector.multi_reduction <add>, %158, %cst_58 [1] : vector<128x32xf32> to vector<128xf32>
    %160 = vector.shape_cast %159 : vector<128xf32> to vector<128x1xf32>
    %cst_59 = arith.constant 3.200000e+01 : f32
    %161 = vector.broadcast %cst_59 : f32 to vector<128x1xf32>
    %162 = arith.divf %160, %161 : vector<128x1xf32>
    %163 = vector.broadcast %162 : vector<128x1xf32> to vector<128x32xf32>
    %164 = arith.subf %158, %163 : vector<128x32xf32>
    %165 = arith.mulf %164, %164 : vector<128x32xf32>
    %cst_60 = arith.constant dense<0.000000e+00> : vector<128xf32>
    %166 = vector.multi_reduction <add>, %165, %cst_60 [1] : vector<128x32xf32> to vector<128xf32>
    %167 = vector.shape_cast %166 : vector<128xf32> to vector<128x1xf32>
    %cst_61 = arith.constant 3.200000e+01 : f32
    %168 = vector.broadcast %cst_61 : f32 to vector<128x1xf32>
    %169 = arith.divf %167, %168 : vector<128x1xf32>
    %170 = vector.broadcast %162 : vector<128x1xf32> to vector<128x32xf32>
    %171 = arith.subf %158, %170 : vector<128x32xf32>
    %cst_62 = arith.constant 9.99999997E-7 : f32
    %172 = vector.broadcast %cst_62 : f32 to vector<128x1xf32>
    %173 = arith.addf %169, %172 : vector<128x1xf32>
    %174 = math.rsqrt %173 : vector<128x1xf32>
    %175 = vector.broadcast %174 : vector<128x1xf32> to vector<128x32xf32>
    %176 = arith.mulf %171, %175 : vector<128x32xf32>
    %c0_63 = arith.constant 0 : index
    %c0_64 = arith.constant 0 : index
    %177 = vector.load %arg18[%c0_63, %c0_64] : memref<1x32xf32, #tpu.memory_space<vmem>>, vector<1x32xf32>
    %178 = vector.broadcast %177 : vector<1x32xf32> to vector<128x32xf32>
    %179 = arith.mulf %176, %178 : vector<128x32xf32>
    %c0_65 = arith.constant 0 : index
    %c0_66 = arith.constant 0 : index
    %180 = vector.load %arg19[%c0_65, %c0_66] : memref<1x32xf32, #tpu.memory_space<vmem>>, vector<1x32xf32>
    %181 = vector.broadcast %180 : vector<1x32xf32> to vector<128x32xf32>
    %182 = arith.addf %179, %181 : vector<128x32xf32>
    %c0_67 = arith.constant 0 : index
    %c0_68 = arith.constant 0 : index
    %c0_69 = arith.constant 0 : index
    %183 = vector.load %arg20[%c0_67, %c0_68, %c0_69] : memref<1x128x32xf32, #tpu.memory_space<vmem>>, vector<1x128x32xf32>
    %184 = vector.shape_cast %183 : vector<1x128x32xf32> to vector<128x32xf32>
    %185 = vector.shape_cast %182 : vector<128x32xf32> to vector<1x128x32xf32>
    tpu.vector_store %arg20[%c0_67, %c0_68, %c0_69], %185 {strides = array<i32>} : memref<1x128x32xf32, #tpu.memory_space<vmem>>, vector<1x128x32xf32>,
    return
  }
  func.func @transform_0(%arg0: i32, %arg1: i32) -> (i32, i32, i32) {
    %c0_i32 = arith.constant 0 : i32
    %c0_i32_0 = arith.constant 0 : i32
    %c0_i32_1 = arith.constant 0 : i32
    return %arg0, %c0_i32, %c0_i32_0 : i32, i32, i32
  }
  func.func @transform_1(%arg0: i32, %arg1: i32) -> (i32, i32) {
    %c0_i32 = arith.constant 0 : i32
    %c0_i32_0 = arith.constant 0 : i32
    %c0_i32_1 = arith.constant 0 : i32
    return %c0_i32, %c0_i32_0 : i32, i32
  }
  func.func @transform_2(%arg0: i32, %arg1: i32) -> (i32, i32) {
    %c0_i32 = arith.constant 0 : i32
    %c0_i32_0 = arith.constant 0 : i32
    %c0_i32_1 = arith.constant 0 : i32
    return %c0_i32, %c0_i32_0 : i32, i32
  }
  func.func @transform_3(%arg0: i32, %arg1: i32) -> (i32, i32) {
    %c0_i32 = arith.constant 0 : i32
    %c0_i32_0 = arith.constant 0 : i32
    %c0_i32_1 = arith.constant 0 : i32
    return %c0_i32, %c0_i32_0 : i32, i32
  }
  func.func @transform_4(%arg0: i32, %arg1: i32) -> (i32, i32) {
    %c0_i32 = arith.constant 0 : i32
    %c0_i32_0 = arith.constant 0 : i32
    %c0_i32_1 = arith.constant 0 : i32
    return %c0_i32, %c0_i32_0 : i32, i32
  }
  func.func @transform_5(%arg0: i32, %arg1: i32) -> (i32, i32) {
    %c0_i32 = arith.constant 0 : i32
    %c0_i32_0 = arith.constant 0 : i32
    %c0_i32_1 = arith.constant 0 : i32
    return %c0_i32, %c0_i32_0 : i32, i32
  }
  func.func @transform_6(%arg0: i32, %arg1: i32) -> (i32, i32) {
    %c0_i32 = arith.constant 0 : i32
    %c0_i32_0 = arith.constant 0 : i32
    %c0_i32_1 = arith.constant 0 : i32
    return %c0_i32, %c0_i32_0 : i32, i32
  }
  func.func @transform_7(%arg0: i32, %arg1: i32) -> (i32, i32) {
    %c0_i32 = arith.constant 0 : i32
    %c0_i32_0 = arith.constant 0 : i32
    %c0_i32_1 = arith.constant 0 : i32
    return %c0_i32, %c0_i32_0 : i32, i32
  }
  func.func @transform_8(%arg0: i32, %arg1: i32) -> (i32, i32) {
    %c0_i32 = arith.constant 0 : i32
    %c0_i32_0 = arith.constant 0 : i32
    %c0_i32_1 = arith.constant 0 : i32
    return %c0_i32, %c0_i32_0 : i32, i32
  }
  func.func @transform_9(%arg0: i32, %arg1: i32) -> (i32, i32) {
    %c0_i32 = arith.constant 0 : i32
    %c0_i32_0 = arith.constant 0 : i32
    %c0_i32_1 = arith.constant 0 : i32
    return %c0_i32, %c0_i32_0 : i32, i32
  }
  func.func @transform_10(%arg0: i32, %arg1: i32) -> (i32, i32) {
    %c0_i32 = arith.constant 0 : i32
    %c0_i32_0 = arith.constant 0 : i32
    %c0_i32_1 = arith.constant 0 : i32
    return %c0_i32, %c0_i32_0 : i32, i32
  }
  func.func @transform_11(%arg0: i32, %arg1: i32) -> (i32, i32) {
    %c0_i32 = arith.constant 0 : i32
    %c0_i32_0 = arith.constant 0 : i32
    %c0_i32_1 = arith.constant 0 : i32
    return %c0_i32, %c0_i32_0 : i32, i32
  }
  func.func @transform_12(%arg0: i32, %arg1: i32) -> (i32, i32) {
    %c0_i32 = arith.constant 0 : i32
    %c0_i32_0 = arith.constant 0 : i32
    %c0_i32_1 = arith.constant 0 : i32
    return %c0_i32, %c0_i32_0 : i32, i32
  }
  func.func @transform_13(%arg0: i32, %arg1: i32) -> (i32, i32) {
    %c0_i32 = arith.constant 0 : i32
    %c0_i32_0 = arith.constant 0 : i32
    %c0_i32_1 = arith.constant 0 : i32
    return %c0_i32, %c0_i32_0 : i32, i32
  }
  func.func @transform_14(%arg0: i32, %arg1: i32) -> (i32, i32) {
    %c0_i32 = arith.constant 0 : i32
    %c0_i32_0 = arith.constant 0 : i32
    %c0_i32_1 = arith.constant 0 : i32
    return %c0_i32, %c0_i32_0 : i32, i32
  }
  func.func @transform_15(%arg0: i32, %arg1: i32) -> (i32, i32) {
    %c0_i32 = arith.constant 0 : i32
    %c0_i32_0 = arith.constant 0 : i32
    %c0_i32_1 = arith.constant 0 : i32
    return %c0_i32, %c0_i32_0 : i32, i32
  }
  func.func @transform_16(%arg0: i32, %arg1: i32) -> (i32, i32) {
    %c0_i32 = arith.constant 0 : i32
    %c0_i32_0 = arith.constant 0 : i32
    %c0_i32_1 = arith.constant 0 : i32
    return %c0_i32, %c0_i32_0 : i32, i32
  }
  func.func @transform_17(%arg0: i32, %arg1: i32) -> (i32, i32) {
    %c0_i32 = arith.constant 0 : i32
    %c0_i32_0 = arith.constant 0 : i32
    %c0_i32_1 = arith.constant 0 : i32
    return %c0_i32, %c0_i32_0 : i32, i32
  }
  func.func @transform_18(%arg0: i32, %arg1: i32) -> (i32, i32, i32) {
    %c0_i32 = arith.constant 0 : i32
    %c0_i32_0 = arith.constant 0 : i32
    return %arg0, %arg1, %c0_i32 : i32, i32, i32
  }
}

</mosaic_0001>

<llo_original>
// kernel: tpu_custom_call.1
$region0: #{tpu_custom_call.1}
  #allocation0 [shape = 'u32[]', space=smem, size = 0x4, offset = 0x4, fixed_abs, tag = 'smem constant byte address 0x4 - core index']
  #allocation1 [shape = 'u32[144,128]{1,0:T(1,128)}', space=vmem, size = 0x12000, scoped, tag = 'internal scratch']
  #allocation2 [shape = 'bf16[128,32]{1,0:T(16,128)(2,1)}', space=vmem, size = 0x8000, scoped, tag = 'scratch operand']
  #allocation3 [shape = 'bf16[128,32]{1,0:T(16,128)(2,1)}', space=vmem, size = 0x8000, scoped, tag = 'scratch operand']
  %s0 = inlined_call_operand.vmem [shape: f32[2,128,32], index: 0, kind: input, shape index: {}]
  %s1 = inlined_call_operand.vmem [shape: f32[128,32], index: 1, kind: input, shape index: {}]
  %s2 = inlined_call_operand.vmem [shape: bf16[32,32], index: 2, kind: input, shape index: {}]
  %s3 = inlined_call_operand.vmem [shape: bf16[32,32], index: 3, kind: input, shape index: {}]
  %s4 = inlined_call_operand.vmem [shape: bf16[32,32], index: 4, kind: input, shape index: {}]
  %s5 = inlined_call_operand.vmem [shape: f32[1,32], index: 5, kind: input, shape index: {}]
  %s6 = inlined_call_operand.vmem [shape: f32[1,32], index: 6, kind: input, shape index: {}]
  %s7 = inlined_call_operand.vmem [shape: f32[1,32], index: 7, kind: input, shape index: {}]
  %s8 = inlined_call_operand.vmem [shape: bf16[32,32], index: 8, kind: input, shape index: {}]
  %s9 = inlined_call_operand.vmem [shape: f32[1,32], index: 9, kind: input, shape index: {}]
  %s10 = inlined_call_operand.vmem [shape: f32[1,32], index: 10, kind: input, shape index: {}]
  %s11 = inlined_call_operand.vmem [shape: f32[1,32], index: 11, kind: input, shape index: {}]
  %s12 = inlined_call_operand.vmem [shape: bf16[32,64], index: 12, kind: input, shape index: {}]
  %s13 = inlined_call_operand.vmem [shape: f32[1,64], index: 13, kind: input, shape index: {}]
  %s14 = inlined_call_operand.vmem [shape: bf16[64,32], index: 14, kind: input, shape index: {}]
  %s15 = inlined_call_operand.vmem [shape: f32[1,32], index: 15, kind: input, shape index: {}]
  %s16 = inlined_call_operand.vmem [shape: f32[1,32], index: 16, kind: input, shape index: {}]
  %s17 = inlined_call_operand.vmem [shape: f32[1,32], index: 17, kind: input, shape index: {}]
  %s18 = inlined_call_operand.vmem [shape: f32[2,128,32], index: 18, kind: output, shape index: {}]
  %s19 = sld [smem:[#allocation0]]
  $region109: #{tpu_custom_call.1} parent=0
    _
  %s21 = ssub.s32 1, %s19
  %s22 = scalar_select 0, %s21, %s19
  loop: start=0, step=1, limit=4
  $region2: #{tpu_custom_call.1} parent=0 // loop_pre_header
    _
  $region3: #{tpu_custom_call.1} parent=0 // loop_header
    %s24 = sphi 0, %s28
    %p25 = scmp.ge.s32.totalorder %s24, 4
    %s31 = sphi 0, %s43
    %s32 = sphi 0, %s39
    %s33 = sphi 0, %s31
    %s34 = sphi 0, %s32
    %s35 = sphi 0, %s33
    %s36 = sphi 0, %s34
    %s46 = sphi 0, %s48
    %s49 = sphi 0, %s46
    %s50 = sphi 0, %s49
    %s66 = sphi 0, %s50
    %s70 = sphi 0, %s70
    %s72 = sphi 0, %s70
    %s73 = sphi 0, %s72
    %s87 = sphi 0, %s73
    %s91 = sphi 0, %s91
    %s93 = sphi 0, %s91
    %s94 = sphi 0, %s93
    %s108 = sphi 0, %s94
    %s112 = sphi 0, %s112
    %s114 = sphi 0, %s112
    %s115 = sphi 0, %s114
    %s129 = sphi 0, %s115
    %s133 = sphi 0, %s133
    %s135 = sphi 0, %s133
    %s136 = sphi 0, %s135
    %s150 = sphi 0, %s136
    %s154 = sphi 0, %s154
    %s156 = sphi 0, %s154
    %s157 = sphi 0, %s156
    %s171 = sphi 0, %s157
    %s175 = sphi 0, %s175
    %s177 = sphi 0, %s175
    %s178 = sphi 0, %s177
    %s192 = sphi 0, %s178
    %s196 = sphi 0, %s196
    %s198 = sphi 0, %s196
    %s199 = sphi 0, %s198
    %s213 = sphi 0, %s199
    %s217 = sphi 0, %s217
    %s219 = sphi 0, %s217
    %s220 = sphi 0, %s219
    %s234 = sphi 0, %s220
    %s238 = sphi 0, %s238
    %s240 = sphi 0, %s238
    %s241 = sphi 0, %s240
    %s255 = sphi 0, %s241
    %s259 = sphi 0, %s259
    %s261 = sphi 0, %s259
    %s262 = sphi 0, %s261
    %s276 = sphi 0, %s262
    %s280 = sphi 0, %s280
    %s282 = sphi 0, %s280
    %s283 = sphi 0, %s282
    %s297 = sphi 0, %s283
    %s301 = sphi 0, %s301
    %s303 = sphi 0, %s301
    %s304 = sphi 0, %s303
    %s318 = sphi 0, %s304
    %s322 = sphi 0, %s322
    %s324 = sphi 0, %s322
    %s325 = sphi 0, %s324
    %s339 = sphi 0, %s325
    %s343 = sphi 0, %s343
    %s345 = sphi 0, %s343
    %s346 = sphi 0, %s345
    %s360 = sphi 0, %s346
    %s364 = sphi 0, %s364
    %s366 = sphi 0, %s364
    %s367 = sphi 0, %s366
    %s381 = sphi 0, %s367
    %s385 = sphi 0, %s385
    %s387 = sphi 0, %s385
    %s388 = sphi 0, %s387
    %s402 = sphi 0, %s388
    %s406 = sphi 0, %s406
    %s408 = sphi 0, %s406
    %s409 = sphi 0, %s408
    %s423 = sphi 0, %s409
    %s431 = sphi 0, %s433
    %s434 = sphi 0, %s431
    %s435 = sphi 0, %s434
    %s451 = sphi 0, %s435
  $region4: #{tpu_custom_call.1} parent=0 // loop_header_branch
    %27 = sbr.rel (%p25) target = $region8
  $region5: #{tpu_custom_call.1} parent=0 // loop_body
    %s29 = ssub.s32 %s24, 1
    %s30 = ssub.s32 %s24, 2
    %s37 = sadd.s32 1, %s32
    %p38 = scmp.ge.s32.totalorder %s37, 1
    %s39 = scalar_select %p38, 0, %s37
    %s40 = sadd.s32 1, %s31
    %s41 = scalar_select %p38, %s40, %s31
    %p42 = scmp.ge.s32.totalorder %s41, 2
    %s43 = scalar_select %p42, 0, %s41
    %s44 = ssub.s32 %s31, %s43
    %p45 = scmp.eq.s32.totalorder %s44, 0
    %s47 = sadd.s32 %s46, 1
    %s48 = scalar_select %p45, %s46, %s47
    %p51 = pneg %p45
    %p52 = scmp.eq.s32.totalorder %s24, 1
    %p53 = por %p51, %p52
    %p54 = scmp.ne.s32.totalorder %s46, %s49
    %p55 = scmp.eq.s32.totalorder %s24, 0
    %p56 = por %p54, %p55
    %p57 = scmp.ne.s32.totalorder %s46, %s49
    %p58 = scmp.eq.s32.totalorder %s29, 1
    %p59 = por %p57, %p58
    %p60 = scmp.ne.s32.totalorder %s49, %s50
    %p61 = scmp.eq.s32.totalorder %s29, 0
    %p62 = por %p60, %p61
    %p63 = scmp.ne.s32.totalorder %s49, %s50
    %p64 = scmp.eq.s32.totalorder %s30, 1
    %p65 = por %p63, %p64
    %p67 = scmp.ne.s32.totalorder %s50, %s66
    %p68 = scmp.eq.s32.totalorder %s30, 0
    %p69 = por %p67, %p68
    %s71 = sadd.s32 %s70, 1
    %p74 = scmp.eq.s32.totalorder %s24, 1
    %p75 = scmp.ne.s32.totalorder %s70, %s72
    %p76 = scmp.eq.s32.totalorder %s24, 0
    %p77 = por %p75, %p76
    %p78 = scmp.ne.s32.totalorder %s70, %s72
    %p79 = scmp.eq.s32.totalorder %s29, 1
    %p80 = por %p78, %p79
    %p81 = scmp.ne.s32.totalorder %s72, %s73
    %p82 = scmp.eq.s32.totalorder %s29, 0
    %p83 = por %p81, %p82
    %p84 = scmp.ne.s32.totalorder %s72, %s73
    %p85 = scmp.eq.s32.totalorder %s30, 1
    %p86 = por %p84, %p85
    %p88 = scmp.ne.s32.totalorder %s73, %s87
    %p89 = scmp.eq.s32.totalorder %s30, 0
    %p90 = por %p88, %p89
    %s92 = sadd.s32 %s91, 1
    %p95 = scmp.eq.s32.totalorder %s24, 1
    %p96 = scmp.ne.s32.totalorder %s91, %s93
    %p97 = scmp.eq.s32.totalorder %s24, 0
    %p98 = por %p96, %p97
    %p99 = scmp.ne.s32.totalorder %s91, %s93
    %p100 = scmp.eq.s32.totalorder %s29, 1
    %p101 = por %p99, %p100
    %p102 = scmp.ne.s32.totalorder %s93, %s94
    %p103 = scmp.eq.s32.totalorder %s29, 0
    %p104 = por %p102, %p103
    %p105 = scmp.ne.s32.totalorder %s93, %s94
    %p106 = scmp.eq.s32.totalorder %s30, 1
    %p107 = por %p105, %p106
    %p109 = scmp.ne.s32.totalorder %s94, %s108
    %p110 = scmp.eq.s32.totalorder %s30, 0
    %p111 = por %p109, %p110
    %s113 = sadd.s32 %s112, 1
    %p116 = scmp.eq.s32.totalorder %s24, 1
    %p117 = scmp.ne.s32.totalorder %s112, %s114
    %p118 = scmp.eq.s32.totalorder %s24, 0
    %p119 = por %p117, %p118
    %p120 = scmp.ne.s32.totalorder %s112, %s114
    %p121 = scmp.eq.s32.totalorder %s29, 1
    %p122 = por %p120, %p121
    %p123 = scmp.ne.s32.totalorder %s114, %s115
    %p124 = scmp.eq.s32.totalorder %s29, 0
    %p125 = por %p123, %p124
    %p126 = scmp.ne.s32.totalorder %s114, %s115
    %p127 = scmp.eq.s32.totalorder %s30, 1
    %p128 = por %p126, %p127
    %p130 = scmp.ne.s32.totalorder %s115, %s129
    %p131 = scmp.eq.s32.totalorder %s30, 0
    %p132 = por %p130, %p131
    %s134 = sadd.s32 %s133, 1
    %p137 = scmp.eq.s32.totalorder %s24, 1
    %p138 = scmp.ne.s32.totalorder %s133, %s135
    %p139 = scmp.eq.s32.totalorder %s24, 0
    %p140 = por %p138, %p139
    %p141 = scmp.ne.s32.totalorder %s133, %s135
    %p142 = scmp.eq.s32.totalorder %s29, 1
    %p143 = por %p141, %p142
    %p144 = scmp.ne.s32.totalorder %s135, %s136
    %p145 = scmp.eq.s32.totalorder %s29, 0
    %p146 = por %p144, %p145
    %p147 = scmp.ne.s32.totalorder %s135, %s136
    %p148 = scmp.eq.s32.totalorder %s30, 1
    %p149 = por %p147, %p148
    %p151 = scmp.ne.s32.totalorder %s136, %s150
    %p152 = scmp.eq.s32.totalorder %s30, 0
    %p153 = por %p151, %p152
    %s155 = sadd.s32 %s154, 1
    %p158 = scmp.eq.s32.totalorder %s24, 1
    %p159 = scmp.ne.s32.totalorder %s154, %s156
    %p160 = scmp.eq.s32.totalorder %s24, 0
    %p161 = por %p159, %p160
    %p162 = scmp.ne.s32.totalorder %s154, %s156
    %p163 = scmp.eq.s32.totalorder %s29, 1
    %p164 = por %p162, %p163
    %p165 = scmp.ne.s32.totalorder %s156, %s157
    %p166 = scmp.eq.s32.totalorder %s29, 0
    %p167 = por %p165, %p166
    %p168 = scmp.ne.s32.totalorder %s156, %s157
    %p169 = scmp.eq.s32.totalorder %s30, 1
    %p170 = por %p168, %p169
    %p172 = scmp.ne.s32.totalorder %s157, %s171
    %p173 = scmp.eq.s32.totalorder %s30, 0
    %p174 = por %p172, %p173
    %s176 = sadd.s32 %s175, 1
    %p179 = scmp.eq.s32.totalorder %s24, 1
    %p180 = scmp.ne.s32.totalorder %s175, %s177
    %p181 = scmp.eq.s32.totalorder %s24, 0
    %p182 = por %p180, %p181
    %p183 = scmp.ne.s32.totalorder %s175, %s177
    %p184 = scmp.eq.s32.totalorder %s29, 1
    %p185 = por %p183, %p184
    %p186 = scmp.ne.s32.totalorder %s177, %s178
    %p187 = scmp.eq.s32.totalorder %s29, 0
    %p188 = por %p186, %p187
    %p189 = scmp.ne.s32.totalorder %s177, %s178
    %p190 = scmp.eq.s32.totalorder %s30, 1
    %p191 = por %p189, %p190
    %p193 = scmp.ne.s32.totalorder %s178, %s192
    %p194 = scmp.eq.s32.totalorder %s30, 0
    %p195 = por %p193, %p194
    %s197 = sadd.s32 %s196, 1
    %p200 = scmp.eq.s32.totalorder %s24, 1
    %p201 = scmp.ne.s32.totalorder %s196, %s198
    %p202 = scmp.eq.s32.totalorder %s24, 0
    %p203 = por %p201, %p202
    %p204 = scmp.ne.s32.totalorder %s196, %s198
    %p205 = scmp.eq.s32.totalorder %s29, 1
    %p206 = por %p204, %p205
    %p207 = scmp.ne.s32.totalorder %s198, %s199
    %p208 = scmp.eq.s32.totalorder %s29, 0
    %p209 = por %p207, %p208
    %p210 = scmp.ne.s32.totalorder %s198, %s199
    %p211 = scmp.eq.s32.totalorder %s30, 1
    %p212 = por %p210, %p211
    %p214 = scmp.ne.s32.totalorder %s199, %s213
    %p215 = scmp.eq.s32.totalorder %s30, 0
    %p216 = por %p214, %p215
    %s218 = sadd.s32 %s217, 1
    %p221 = scmp.eq.s32.totalorder %s24, 1
    %p222 = scmp.ne.s32.totalorder %s217, %s219
    %p223 = scmp.eq.s32.totalorder %s24, 0
    %p224 = por %p222, %p223
    %p225 = scmp.ne.s32.totalorder %s217, %s219
    %p226 = scmp.eq.s32.totalorder %s29, 1
    %p227 = por %p225, %p226
    %p228 = scmp.ne.s32.totalorder %s219, %s220
    %p229 = scmp.eq.s32.totalorder %s29, 0
    %p230 = por %p228, %p229
    %p231 = scmp.ne.s32.totalorder %s219, %s220
    %p232 = scmp.eq.s32.totalorder %s30, 1
    %p233 = por %p231, %p232
    %p235 = scmp.ne.s32.totalorder %s220, %s234
    %p236 = scmp.eq.s32.totalorder %s30, 0
    %p237 = por %p235, %p236
    %s239 = sadd.s32 %s238, 1
    %p242 = scmp.eq.s32.totalorder %s24, 1
    %p243 = scmp.ne.s32.totalorder %s238, %s240
    %p244 = scmp.eq.s32.totalorder %s24, 0
    %p245 = por %p243, %p244
    %p246 = scmp.ne.s32.totalorder %s238, %s240
    %p247 = scmp.eq.s32.totalorder %s29, 1
    %p248 = por %p246, %p247
    %p249 = scmp.ne.s32.totalorder %s240, %s241
    %p250 = scmp.eq.s32.totalorder %s29, 0
    %p251 = por %p249, %p250
    %p252 = scmp.ne.s32.totalorder %s240, %s241
    %p253 = scmp.eq.s32.totalorder %s30, 1
    %p254 = por %p252, %p253
    %p256 = scmp.ne.s32.totalorder %s241, %s255
    %p257 = scmp.eq.s32.totalorder %s30, 0
    %p258 = por %p256, %p257
    %s260 = sadd.s32 %s259, 1
    %p263 = scmp.eq.s32.totalorder %s24, 1
    %p264 = scmp.ne.s32.totalorder %s259, %s261
    %p265 = scmp.eq.s32.totalorder %s24, 0
    %p266 = por %p264, %p265
    %p267 = scmp.ne.s32.totalorder %s259, %s261
    %p268 = scmp.eq.s32.totalorder %s29, 1
    %p269 = por %p267, %p268
    %p270 = scmp.ne.s32.totalorder %s261, %s262
    %p271 = scmp.eq.s32.totalorder %s29, 0
    %p272 = por %p270, %p271
    %p273 = scmp.ne.s32.totalorder %s261, %s262
    %p274 = scmp.eq.s32.totalorder %s30, 1
    %p275 = por %p273, %p274
    %p277 = scmp.ne.s32.totalorder %s262, %s276
    %p278 = scmp.eq.s32.totalorder %s30, 0
    %p279 = por %p277, %p278
    %s281 = sadd.s32 %s280, 1
    %p284 = scmp.eq.s32.totalorder %s24, 1
    %p285 = scmp.ne.s32.totalorder %s280, %s282
    %p286 = scmp.eq.s32.totalorder %s24, 0
    %p287 = por %p285, %p286
    %p288 = scmp.ne.s32.totalorder %s280, %s282
    %p289 = scmp.eq.s32.totalorder %s29, 1
    %p290 = por %p288, %p289
    %p291 = scmp.ne.s32.totalorder %s282, %s283
    %p292 = scmp.eq.s32.totalorder %s29, 0
    %p293 = por %p291, %p292
    %p294 = scmp.ne.s32.totalorder %s282, %s283
    %p295 = scmp.eq.s32.totalorder %s30, 1
    %p296 = por %p294, %p295
    %p298 = scmp.ne.s32.totalorder %s283, %s297
    %p299 = scmp.eq.s32.totalorder %s30, 0
    %p300 = por %p298, %p299
    %s302 = sadd.s32 %s301, 1
    %p305 = scmp.eq.s32.totalorder %s24, 1
    %p306 = scmp.ne.s32.totalorder %s301, %s303
    %p307 = scmp.eq.s32.totalorder %s24, 0
    %p308 = por %p306, %p307
    %p309 = scmp.ne.s32.totalorder %s301, %s303
    %p310 = scmp.eq.s32.totalorder %s29, 1
    %p311 = por %p309, %p310
    %p312 = scmp.ne.s32.totalorder %s303, %s304
    %p313 = scmp.eq.s32.totalorder %s29, 0
    %p314 = por %p312, %p313
    %p315 = scmp.ne.s32.totalorder %s303, %s304
    %p316 = scmp.eq.s32.totalorder %s30, 1
    %p317 = por %p315, %p316
    %p319 = scmp.ne.s32.totalorder %s304, %s318
    %p320 = scmp.eq.s32.totalorder %s30, 0
    %p321 = por %p319, %p320
    %s323 = sadd.s32 %s322, 1
    %p326 = scmp.eq.s32.totalorder %s24, 1
    %p327 = scmp.ne.s32.totalorder %s322, %s324
    %p328 = scmp.eq.s32.totalorder %s24, 0
    %p329 = por %p327, %p328
    %p330 = scmp.ne.s32.totalorder %s322, %s324
    %p331 = scmp.eq.s32.totalorder %s29, 1
    %p332 = por %p330, %p331
    %p333 = scmp.ne.s32.totalorder %s324, %s325
    %p334 = scmp.eq.s32.totalorder %s29, 0
    %p335 = por %p333, %p334
    %p336 = scmp.ne.s32.totalorder %s324, %s325
    %p337 = scmp.eq.s32.totalorder %s30, 1
    %p338 = por %p336, %p337
    %p340 = scmp.ne.s32.totalorder %s325, %s339
    %p341 = scmp.eq.s32.totalorder %s30, 0
    %p342 = por %p340, %p341
    %s344 = sadd.s32 %s343, 1
    %p347 = scmp.eq.s32.totalorder %s24, 1
    %p348 = scmp.ne.s32.totalorder %s343, %s345
    %p349 = scmp.eq.s32.totalorder %s24, 0
    %p350 = por %p348, %p349
    %p351 = scmp.ne.s32.totalorder %s343, %s345
    %p352 = scmp.eq.s32.totalorder %s29, 1
    %p353 = por %p351, %p352
    %p354 = scmp.ne.s32.totalorder %s345, %s346
    %p355 = scmp.eq.s32.totalorder %s29, 0
    %p356 = por %p354, %p355
    %p357 = scmp.ne.s32.totalorder %s345, %s346
    %p358 = scmp.eq.s32.totalorder %s30, 1
    %p359 = por %p357, %p358
    %p361 = scmp.ne.s32.totalorder %s346, %s360
    %p362 = scmp.eq.s32.totalorder %s30, 0
    %p363 = por %p361, %p362
    %s365 = sadd.s32 %s364, 1
    %p368 = scmp.eq.s32.totalorder %s24, 1
    %p369 = scmp.ne.s32.totalorder %s364, %s366
    %p370 = scmp.eq.s32.totalorder %s24, 0
    %p371 = por %p369, %p370
    %p372 = scmp.ne.s32.totalorder %s364, %s366
    %p373 = scmp.eq.s32.totalorder %s29, 1
    %p374 = por %p372, %p373
    %p375 = scmp.ne.s32.totalorder %s366, %s367
    %p376 = scmp.eq.s32.totalorder %s29, 0
    %p377 = por %p375, %p376
    %p378 = scmp.ne.s32.totalorder %s366, %s367
    %p379 = scmp.eq.s32.totalorder %s30, 1
    %p380 = por %p378, %p379
    %p382 = scmp.ne.s32.totalorder %s367, %s381
    %p383 = scmp.eq.s32.totalorder %s30, 0
    %p384 = por %p382, %p383
    %s386 = sadd.s32 %s385, 1
    %p389 = scmp.eq.s32.totalorder %s24, 1
    %p390 = scmp.ne.s32.totalorder %s385, %s387
    %p391 = scmp.eq.s32.totalorder %s24, 0
    %p392 = por %p390, %p391
    %p393 = scmp.ne.s32.totalorder %s385, %s387
    %p394 = scmp.eq.s32.totalorder %s29, 1
    %p395 = por %p393, %p394
    %p396 = scmp.ne.s32.totalorder %s387, %s388
    %p397 = scmp.eq.s32.totalorder %s29, 0
    %p398 = por %p396, %p397
    %p399 = scmp.ne.s32.totalorder %s387, %s388
    %p400 = scmp.eq.s32.totalorder %s30, 1
    %p401 = por %p399, %p400
    %p403 = scmp.ne.s32.totalorder %s388, %s402
    %p404 = scmp.eq.s32.totalorder %s30, 0
    %p405 = por %p403, %p404
    %s407 = sadd.s32 %s406, 1
    %p410 = scmp.eq.s32.totalorder %s24, 1
    %p411 = scmp.ne.s32.totalorder %s406, %s408
    %p412 = scmp.eq.s32.totalorder %s24, 0
    %p413 = por %p411, %p412
    %p414 = scmp.ne.s32.totalorder %s406, %s408
    %p415 = scmp.eq.s32.totalorder %s29, 1
    %p416 = por %p414, %p415
    %p417 = scmp.ne.s32.totalorder %s408, %s409
    %p418 = scmp.eq.s32.totalorder %s29, 0
    %p419 = por %p417, %p418
    %p420 = scmp.ne.s32.totalorder %s408, %s409
    %p421 = scmp.eq.s32.totalorder %s30, 1
    %p422 = por %p420, %p421
    %p424 = scmp.ne.s32.totalorder %s409, %s423
    %p425 = scmp.eq.s32.totalorder %s30, 0
    %p426 = por %p424, %p425
    %s427 = ssub.s32 %s31, %s43
    %s428 = ssub.s32 %s32, %s39
    %s429 = sor.u32 %s427, %s428
    %p430 = scmp.eq.s32.totalorder %s429, 0
    %s432 = sadd.s32 %s431, 1
    %s433 = scalar_select %p430, %s431, %s432
    %p436 = pneg %p430
    %p437 = scmp.eq.s32.totalorder %s24, 1
    %p438 = por %p436, %p437
    %p439 = scmp.ne.s32.totalorder %s431, %s434
    %p440 = scmp.eq.s32.totalorder %s24, 0
    %p441 = por %p439, %p440
    %p442 = scmp.ne.s32.totalorder %s431, %s434
    %p443 = scmp.eq.s32.totalorder %s29, 1
    %p444 = por %p442, %p443
    %p445 = scmp.ne.s32.totalorder %s434, %s435
    %p446 = scmp.eq.s32.totalorder %s29, 0
    %p447 = por %p445, %p446
    %p448 = scmp.ne.s32.totalorder %s434, %s435
    %p449 = scmp.eq.s32.totalorder %s30, 1
    %p450 = por %p448, %p449
    %p452 = scmp.ne.s32.totalorder %s435, %s451
    %p453 = scmp.eq.s32.totalorder %s30, 0
    %p454 = por %p452, %p453
    %p455 = scmp.le.s32.totalorder 1, %s24
    %p456 = scmp.lt.s32.totalorder %s24, 3
    %p457 = pnand %p455, %p456
    %p458 = pneg %p457
    // Predicated region
    $region9: #{tpu_custom_call.1} parent=5 // pred_check
      _
    $region10: #{tpu_custom_call.1} parent=5 // pred_check_branch
      %460 = sbr.rel (%p457) target = $region12
    $region11: #{tpu_custom_call.1} parent=5 // pred_region
      %s461 = ssub.s32 %s24, 1
      // Predicated region
      $region13: #{tpu_custom_call.1} parent=11 // pred_check
        %p462 = pneg %p83
      $region14: #{tpu_custom_call.1} parent=11 // pred_check_branch
        %464 = sbr.rel (%p462) target = $region16
      $region15: #{tpu_custom_call.1} parent=11 // pred_region
        _
      $region16: #{tpu_custom_call.1} parent=11 // pred_fallthru
        _
      // Predicated region
      $region17: #{tpu_custom_call.1} parent=11 // pred_check
        %p465 = pneg %p104
      $region18: #{tpu_custom_call.1} parent=11 // pred_check_branch
        %467 = sbr.rel (%p465) target = $region20
      $region19: #{tpu_custom_call.1} parent=11 // pred_region
        _
      $region20: #{tpu_custom_call.1} parent=11 // pred_fallthru
        _
      // Predicated region
      $region21: #{tpu_custom_call.1} parent=11 // pred_check
        %p468 = pneg %p125
      $region22: #{tpu_custom_call.1} parent=11 // pred_check_branch
        %470 = sbr.rel (%p468) target = $region24
      $region23: #{tpu_custom_call.1} parent=11 // pred_region
        _
      $region24: #{tpu_custom_call.1} parent=11 // pred_fallthru
        _
      // Predicated region
      $region25: #{tpu_custom_call.1} parent=11 // pred_check
        %p471 = pneg %p146
      $region26: #{tpu_custom_call.1} parent=11 // pred_check_branch
        %473 = sbr.rel (%p471) target = $region28
      $region27: #{tpu_custom_call.1} parent=11 // pred_region
        _
      $region28: #{tpu_custom_call.1} parent=11 // pred_fallthru
        _
      // Predicated region
      $region29: #{tpu_custom_call.1} parent=11 // pred_check
        %p474 = pneg %p167
      $region30: #{tpu_custom_call.1} parent=11 // pred_check_branch
        %476 = sbr.rel (%p474) target = $region32
      $region31: #{tpu_custom_call.1} parent=11 // pred_region
        _
      $region32: #{tpu_custom_call.1} parent=11 // pred_fallthru
        _
      // Predicated region
      $region33: #{tpu_custom_call.1} parent=11 // pred_check
        %p477 = pneg %p188
      $region34: #{tpu_custom_call.1} parent=11 // pred_check_branch
        %479 = sbr.rel (%p477) target = $region36
      $region35: #{tpu_custom_call.1} parent=11 // pred_region
        _
      $region36: #{tpu_custom_call.1} parent=11 // pred_fallthru
        _
      // Predicated region
      $region37: #{tpu_custom_call.1} parent=11 // pred_check
        %p480 = pneg %p209
      $region38: #{tpu_custom_call.1} parent=11 // pred_check_branch
        %482 = sbr.rel (%p480) target = $region40
      $region39: #{tpu_custom_call.1} parent=11 // pred_region
        _
      $region40: #{tpu_custom_call.1} parent=11 // pred_fallthru
        _
      // Predicated region
      $region41: #{tpu_custom_call.1} parent=11 // pred_check
        %p483 = pneg %p230
      $region42: #{tpu_custom_call.1} parent=11 // pred_check_branch
        %485 = sbr.rel (%p483) target = $region44
      $region43: #{tpu_custom_call.1} parent=11 // pred_region
        _
      $region44: #{tpu_custom_call.1} parent=11 // pred_fallthru
        _
      // Predicated region
      $region45: #{tpu_custom_call.1} parent=11 // pred_check
        %p486 = pneg %p251
      $region46: #{tpu_custom_call.1} parent=11 // pred_check_branch
        %488 = sbr.rel (%p486) target = $region48
      $region47: #{tpu_custom_call.1} parent=11 // pred_region
        _
      $region48: #{tpu_custom_call.1} parent=11 // pred_fallthru
        _
      // Predicated region
      $region49: #{tpu_custom_call.1} parent=11 // pred_check
        %p489 = pneg %p272
      $region50: #{tpu_custom_call.1} parent=11 // pred_check_branch
        %491 = sbr.rel (%p489) target = $region52
      $region51: #{tpu_custom_call.1} parent=11 // pred_region
        _
      $region52: #{tpu_custom_call.1} parent=11 // pred_fallthru
        _
      // Predicated region
      $region53: #{tpu_custom_call.1} parent=11 // pred_check
        %p492 = pneg %p293
      $region54: #{tpu_custom_call.1} parent=11 // pred_check_branch
        %494 = sbr.rel (%p492) target = $region56
      $region55: #{tpu_custom_call.1} parent=11 // pred_region
        _
      $region56: #{tpu_custom_call.1} parent=11 // pred_fallthru
        _
      // Predicated region
      $region57: #{tpu_custom_call.1} parent=11 // pred_check
        %p495 = pneg %p314
      $region58: #{tpu_custom_call.1} parent=11 // pred_check_branch
        %497 = sbr.rel (%p495) target = $region60
      $region59: #{tpu_custom_call.1} parent=11 // pred_region
        _
      $region60: #{tpu_custom_call.1} parent=11 // pred_fallthru
        _
      // Predicated region
      $region61: #{tpu_custom_call.1} parent=11 // pred_check
        %p498 = pneg %p335
      $region62: #{tpu_custom_call.1} parent=11 // pred_check_branch
        %500 = sbr.rel (%p498) target = $region64
      $region63: #{tpu_custom_call.1} parent=11 // pred_region
        _
      $region64: #{tpu_custom_call.1} parent=11 // pred_fallthru
        _
      // Predicated region
      $region65: #{tpu_custom_call.1} parent=11 // pred_check
        %p501 = pneg %p356
      $region66: #{tpu_custom_call.1} parent=11 // pred_check_branch
        %503 = sbr.rel (%p501) target = $region68
      $region67: #{tpu_custom_call.1} parent=11 // pred_region
        _
      $region68: #{tpu_custom_call.1} parent=11 // pred_fallthru
        _
      // Predicated region
      $region69: #{tpu_custom_call.1} parent=11 // pred_check
        %p504 = pneg %p377
      $region70: #{tpu_custom_call.1} parent=11 // pred_check_branch
        %506 = sbr.rel (%p504) target = $region72
      $region71: #{tpu_custom_call.1} parent=11 // pred_region
        _
      $region72: #{tpu_custom_call.1} parent=11 // pred_fallthru
        _
      // Predicated region
      $region73: #{tpu_custom_call.1} parent=11 // pred_check
        %p507 = pneg %p398
      $region74: #{tpu_custom_call.1} parent=11 // pred_check_branch
        %509 = sbr.rel (%p507) target = $region76
      $region75: #{tpu_custom_call.1} parent=11 // pred_region
        _
      $region76: #{tpu_custom_call.1} parent=11 // pred_fallthru
        _
      // Predicated region
      $region77: #{tpu_custom_call.1} parent=11 // pred_check
        %p510 = pneg %p419
      $region78: #{tpu_custom_call.1} parent=11 // pred_check_branch
        %512 = sbr.rel (%p510) target = $region80
      $region79: #{tpu_custom_call.1} parent=11 // pred_region
        _
      $region80: #{tpu_custom_call.1} parent=11 // pred_fallthru
        _
    $region12: #{tpu_custom_call.1} parent=5 // pred_fallthru
      _
    %p513 = scmp.lt.s32.totalorder %s24, 2
    // Predicated region
    $region81: #{tpu_custom_call.1} parent=5 // pred_check
      %p514 = pneg %p513
    $region82: #{tpu_custom_call.1} parent=5 // pred_check_branch
      %516 = sbr.rel (%p514) target = $region84
    $region83: #{tpu_custom_call.1} parent=5 // pred_region
      // Predicated region
      $region85: #{tpu_custom_call.1} parent=83 // pred_check
        %p517 = pneg %p56
      $region86: #{tpu_custom_call.1} parent=83 // pred_check_branch
        %519 = sbr.rel (%p517) target = $region88
      $region87: #{tpu_custom_call.1} parent=83 // pred_region
        %p520 = scmp.lt.s32.totalorder %s31, 1
        %s521 = scalar_select %p520, %s31, 1
        %s522 = smul.addr %s521, 16
        %s523 = smul.addr %s522, 8
        %s524 = scalar_lea.vmem %s0, %s523
      $region88: #{tpu_custom_call.1} parent=83 // pred_fallthru
        _
    $region84: #{tpu_custom_call.1} parent=5 // pred_fallthru
      _
    %p525 = scmp.le.s32.totalorder 1, %s24
    %p526 = scmp.lt.s32.totalorder %s24, 3
    %p527 = pnand %p525, %p526
    %p528 = pneg %p527
    // Predicated region
    $region89: #{tpu_custom_call.1} parent=5 // pred_check
      _
    $region90: #{tpu_custom_call.1} parent=5 // pred_check_branch
      %530 = sbr.rel (%p527) target = $region92
    $region91: #{tpu_custom_call.1} parent=5 // pred_region
      %s531 = ssub.s32 %s24, 1
      %p532 = scmp.lt.s32.totalorder %s33, 1
      %s533 = scalar_select %p532, %s33, 1
      %s534 = smul.addr %s533, 16
      %s535 = smul.addr %s534, 8
      %s536 = scalar_lea.vmem %s0, %s535
      %p537 = pneg %p62
      %p538 = pneg %p59
      %p539 = pneg %p83
      %p540 = pneg %p80
      %p541 = pneg %p104
      %p542 = pneg %p101
      %p543 = pneg %p125
      %p544 = pneg %p122
      %p545 = pneg %p146
      %p546 = pneg %p143
      %p547 = pneg %p167
      %p548 = pneg %p164
      %p549 = pneg %p188
      %p550 = pneg %p185
      %p551 = pneg %p209
      %p552 = pneg %p206
      %p553 = pneg %p230
      %p554 = pneg %p227
      %p555 = pneg %p251
      %p556 = pneg %p248
      %p557 = pneg %p272
      %p558 = pneg %p269
      %p559 = pneg %p293
      %p560 = pneg %p290
      %p561 = pneg %p314
      %p562 = pneg %p311
      %p563 = pneg %p335
      %p564 = pneg %p332
      %p565 = pneg %p356
      %p566 = pneg %p353
      %p567 = pneg %p377
      %p568 = pneg %p374
      %p569 = pneg %p398
      %p570 = pneg %p395
      %p571 = pneg %p419
      %p572 = pneg %p416
      %p573 = pneg %p447
      %p574 = pneg %p444
      %s575 = smul.u32 16, %s34
      %p576 = scmp.lt.s32.totalorder %s33, 1
      %s577 = scalar_select %p576, %s33, 1
      %p578 = scmp.lt.s32.totalorder %s575, 15
      %s579 = scalar_select %p578, %s575, 15
      %s580 = smul.addr %s577, 16
      %s581 = sadd.s32 %s579, %s580
      %s582 = smul.addr %s581, 8
      %s583 = scalar_lea.vmem %s18, %s582
      %p584 = scmp.lt.s32.totalorder %s33, 1
      %s585 = scalar_select %p584, %s33, 1
      %s586 = smul.addr %s585, 16
      %s587 = smul.addr %s586, 8
      %s588 = scalar_lea.vmem %s0, %s587
      %s589 = smul.u32 16, %s34
      %p590 = scmp.lt.s32.totalorder %s33, 1
      %s591 = scalar_select %p590, %s33, 1
      %p592 = scmp.lt.s32.totalorder %s589, 15
      %s593 = scalar_select %p592, %s589, 15
      %s594 = smul.addr %s591, 16
      %s595 = sadd.s32 %s593, %s594
      %s596 = smul.addr %s595, 8
      %s597 = scalar_lea.vmem %s18, %s596
      %s598 = smul.u32 16, %s34
      %p600 = scmp.eq.s32.totalorder %s34, 0
      // Predicated region
      $region93: #{tpu_custom_call.1} parent=91 // pred_check
        %p601 = pneg %p600
      $region94: #{tpu_custom_call.1} parent=91 // pred_check_branch
        %603 = sbr.rel (%p601) target = $region96
      $region95: #{tpu_custom_call.1} parent=91 // pred_region
        %v604 = vld [vmem:[%s588] sm:$0xff]
        %v605 = vld [vmem:[%s588 + $0x8] sm:$0xff]
        %v606 = vld [vmem:[%s588 + $0x10] sm:$0xff]
        %v607 = vld [vmem:[%s588 + $0x18] sm:$0xff]
        %v608 = vld [vmem:[%s588 + $0x20] sm:$0xff]
        %v609 = vld [vmem:[%s588 + $0x28] sm:$0xff]
        %v610 = vld [vmem:[%s588 + $0x30] sm:$0xff]
        %v611 = vld [vmem:[%s588 + $0x38] sm:$0xff]
        %v612 = vld [vmem:[%s588 + $0x40] sm:$0xff]
        %v613 = vld [vmem:[%s588 + $0x48] sm:$0xff]
        %v614 = vld [vmem:[%s588 + $0x50] sm:$0xff]
        %v615 = vld [vmem:[%s588 + $0x58] sm:$0xff]
        %v616 = vld [vmem:[%s588 + $0x60] sm:$0xff]
        %v617 = vld [vmem:[%s588 + $0x68] sm:$0xff]
        %v618 = vld [vmem:[%s588 + $0x70] sm:$0xff]
        %v619 = vld [vmem:[%s588 + $0x78] sm:$0xff]
        %v620 = vld [vmem:[%s1] sm:$0xff]
        %v621 = vld [vmem:[%s1 + $0x8] sm:$0xff]
        %v622 = vld [vmem:[%s1 + $0x10] sm:$0xff]
        %v623 = vld [vmem:[%s1 + $0x18] sm:$0xff]
        %v624 = vld [vmem:[%s1 + $0x20] sm:$0xff]
        %v625 = vld [vmem:[%s1 + $0x28] sm:$0xff]
        %v626 = vld [vmem:[%s1 + $0x30] sm:$0xff]
        %v627 = vld [vmem:[%s1 + $0x38] sm:$0xff]
        %v628 = vld [vmem:[%s1 + $0x40] sm:$0xff]
        %v629 = vld [vmem:[%s1 + $0x48] sm:$0xff]
        %v630 = vld [vmem:[%s1 + $0x50] sm:$0xff]
        %v631 = vld [vmem:[%s1 + $0x58] sm:$0xff]
        %v632 = vld [vmem:[%s1 + $0x60] sm:$0xff]
        %v633 = vld [vmem:[%s1 + $0x68] sm:$0xff]
        %v634 = vld [vmem:[%s1 + $0x70] sm:$0xff]
        %v635 = vld [vmem:[%s1 + $0x78] sm:$0xff]
        %v636 = vadd.f32 %v604, %v620
        %v637 = vadd.f32 %v605, %v621
        %v638 = vadd.f32 %v606, %v622
        %v639 = vadd.f32 %v607, %v623
        %v640 = vadd.f32 %v608, %v624
        %v641 = vadd.f32 %v609, %v625
        %v642 = vadd.f32 %v610, %v626
        %v643 = vadd.f32 %v611, %v627
        %v644 = vadd.f32 %v612, %v628
        %v645 = vadd.f32 %v613, %v629
        %v646 = vadd.f32 %v614, %v630
        %v647 = vadd.f32 %v615, %v631
        %v648 = vadd.f32 %v616, %v632
        %v649 = vadd.f32 %v617, %v633
        %v650 = vadd.f32 %v618, %v634
        %v651 = vadd.f32 %v619, %v635
        %v652 = vpack.c.bf16 %v637, %v636
        %v653 = vpack.c.bf16 %v639, %v638
        %v654 = vpack.c.bf16 %v641, %v640
        %v655 = vpack.c.bf16 %v643, %v642
        %v656 = vpack.c.bf16 %v645, %v644
        %v657 = vpack.c.bf16 %v647, %v646
        %v658 = vpack.c.bf16 %v649, %v648
        %v659 = vpack.c.bf16 %v651, %v650
        %v660 = vld [vmem:[%s3] sm:$0xf]
        %v661 = vld [vmem:[%s3 + $0x4] sm:$0xf]
        %v662 = vld [vmem:[%s3 + $0x8] sm:$0xf]
        %v663 = vld [vmem:[%s3 + $0xc] sm:$0xf]
        %v664 = vld [vmem:[%s6] sm:$0x1]
        %v666 = vlaneseq
        %v667 = vshrl.u32 %v666, 7
        %v668 = vsub.s32 0, %v667
        %v669 = vrot.slane %v664, %v668
        %v675 = vunpack.c.l.b16 %v660
        %v676 = vunpack.c.l.b16 %v661
        %v677 = vunpack.c.l.b16 %v662
        %v678 = vunpack.c.l.b16 %v663
        %v679 = vpack.c.b16 %v676, %v675
        %v680 = vpack.c.b16 %v678, %v677
        %vm683 = vcmask 261120
        %v685 = vsel %vm683, %v652, 0
        %v688 = vsel %vm683, %v653, 0
        %v691 = vsel %vm683, %v654, 0
        %v694 = vsel %vm683, %v655, 0
        %v697 = vsel %vm683, %v656, 0
        %v700 = vsel %vm683, %v657, 0
        %v703 = vsel %vm683, %v658, 0
        %v706 = vsel %vm683, %v659, 0
        %708 = vmatprep.subr.bf16.mxu0 0
        %709 = vmatpush1.bf16.msra.mxu0 %v679
        %710 = vmatprep.subr.bf16.mxu0 0
        %711 = vmatpush1.bf16.msra.mxu0 %v680
        %712 = vmatprep.subr.bf16.mxu0 0
        %713 = vmatpush1.bf16.msra.mxu0 0
        %714 = vmatprep.subr.bf16.mxu0 0
        %715 = vmatpush1.bf16.msra.mxu0 0
        %716 = vmatprep.subr.bf16.mxu0 0
        %717 = vmatpush1.bf16.msra.mxu0 0
        %718 = vmatprep.subr.bf16.mxu0 0
        %719 = vmatpush1.bf16.msra.mxu0 0
        %720 = vmatprep.subr.bf16.mxu0 0
        %721 = vmatpush1.bf16.msra.mxu0 0
        %722 = vmatprep.subr.bf16.mxu0 0
        %723 = vmatpush1.bf16.msra.mxu0 0
        %724 = vmatprep.subr.bf16.mxu0 0
        %725 = vmatpush1.bf16.msra.mxu0 0
        %726 = vmatprep.subr.bf16.mxu0 0
        %727 = vmatpush1.bf16.msra.mxu0 0
        %728 = vmatprep.subr.bf16.mxu0 0
        %729 = vmatpush1.bf16.msra.mxu0 0
        %730 = vmatprep.subr.bf16.mxu0 0
        %731 = vmatpush1.bf16.msra.mxu0 0
        %732 = vmatprep.subr.bf16.mxu0 0
        %733 = vmatpush1.bf16.msra.mxu0 0
        %734 = vmatprep.subr.bf16.mxu0 0
        %735 = vmatpush1.bf16.msra.mxu0 0
        %736 = vmatprep.subr.bf16.mxu0 0
        %737 = vmatpush1.bf16.msra.mxu0 0
        %738 = vmatprep.subr.bf16.mxu0 0
        %739 = vmatpush1.bf16.msra.mxu0 0
        %740 = vmatprep.mubr.bf16.mxu0 0
        %741 = vmatmul.mubr.bf16.gmra.mrb[0].mxu0 %v685
        %v742 = vpop.f32.mrb[0].mxu0
        %v743 = vadd.f32 %v669, %v742
        %v744 = vpop.f32.mrb[0].mxu0
        %v745 = vpop.f32.mrb[0].mxu0
        %v746 = vadd.f32 %v669, %v745
        %v747 = vpop.f32.mrb[0].mxu0
        %748 = vmatprep.mubr.bf16.mxu0 0
        %749 = vmatmul.mubr.bf16.gmra.mrb[0].mxu0 %v688
        %v750 = vpop.f32.mrb[0].mxu0
        %v751 = vadd.f32 %v669, %v750
        %v752 = vpop.f32.mrb[0].mxu0
        %v753 = vpop.f32.mrb[0].mxu0
        %v754 = vadd.f32 %v669, %v753
        %v755 = vpop.f32.mrb[0].mxu0
        %756 = vmatprep.mubr.bf16.mxu0 0
        %757 = vmatmul.mubr.bf16.gmra.mrb[0].mxu0 %v691
        %v758 = vpop.f32.mrb[0].mxu0
        %v759 = vadd.f32 %v669, %v758
        %v760 = vpop.f32.mrb[0].mxu0
        %v761 = vpop.f32.mrb[0].mxu0
        %v762 = vadd.f32 %v669, %v761
        %v763 = vpop.f32.mrb[0].mxu0
        %764 = vmatprep.mubr.bf16.mxu0 0
        %765 = vmatmul.mubr.bf16.gmra.mrb[0].mxu0 %v694
        %v766 = vpop.f32.mrb[0].mxu0
        %v767 = vadd.f32 %v669, %v766
        %v768 = vpop.f32.mrb[0].mxu0
        %v769 = vpop.f32.mrb[0].mxu0
        %v770 = vadd.f32 %v669, %v769
        %v771 = vpop.f32.mrb[0].mxu0
        %772 = vmatprep.mubr.bf16.mxu0 0
        %773 = vmatmul.mubr.bf16.gmra.mrb[0].mxu0 %v697
        %v774 = vpop.f32.mrb[0].mxu0
        %v775 = vadd.f32 %v669, %v774
        %v776 = vpop.f32.mrb[0].mxu0
        %v777 = vpop.f32.mrb[0].mxu0
        %v778 = vadd.f32 %v669, %v777
        %v779 = vpop.f32.mrb[0].mxu0
        %780 = vmatprep.mubr.bf16.mxu0 0
        %781 = vmatmul.mubr.bf16.gmra.mrb[0].mxu0 %v700
        %v782 = vpop.f32.mrb[0].mxu0
        %v783 = vadd.f32 %v669, %v782
        %v784 = vpop.f32.mrb[0].mxu0
        %v785 = vpop.f32.mrb[0].mxu0
        %v786 = vadd.f32 %v669, %v785
        %v787 = vpop.f32.mrb[0].mxu0
        %788 = vmatprep.mubr.bf16.mxu0 0
        %789 = vmatmul.mubr.bf16.gmra.mrb[0].mxu0 %v703
        %v790 = vpop.f32.mrb[0].mxu0
        %v791 = vadd.f32 %v669, %v790
        %v792 = vpop.f32.mrb[0].mxu0
        %v793 = vpop.f32.mrb[0].mxu0
        %v794 = vadd.f32 %v669, %v793
        %v795 = vpop.f32.mrb[0].mxu0
        %796 = vmatprep.mubr.bf16.mxu0 0
        %797 = vmatmul.mubr.bf16.gmra.mrb[0].mxu0 %v706
        %v798 = vpop.f32.mrb[0].mxu0
        %v799 = vadd.f32 %v669, %v798
        %v800 = vpop.f32.mrb[0].mxu0
        %v801 = vpop.f32.mrb[0].mxu0
        %v802 = vadd.f32 %v669, %v801
        %v803 = vpop.f32.mrb[0].mxu0
        %804 = vdwg.mxu0
        %v805 = vpack.c.bf16 %v746, %v743
        %v806 = vpack.c.bf16 %v754, %v751
        %v807 = vpack.c.bf16 %v762, %v759
        %v808 = vpack.c.bf16 %v770, %v767
        %v809 = vpack.c.bf16 %v778, %v775
        %v810 = vpack.c.bf16 %v786, %v783
        %v811 = vpack.c.bf16 %v794, %v791
        %v812 = vpack.c.bf16 %v802, %v799
        %813 = vst.msk [vmem:[#allocation2] sm:$0xff] %vm683, %v805
        %814 = vst.msk [vmem:[#allocation2 + $0x8] sm:$0xff] %vm683, %v806
        %815 = vst.msk [vmem:[#allocation2 + $0x10] sm:$0xff] %vm683, %v807
        %816 = vst.msk [vmem:[#allocation2 + $0x18] sm:$0xff] %vm683, %v808
        %817 = vst.msk [vmem:[#allocation2 + $0x20] sm:$0xff] %vm683, %v809
        %818 = vst.msk [vmem:[#allocation2 + $0x28] sm:$0xff] %vm683, %v810
        %819 = vst.msk [vmem:[#allocation2 + $0x30] sm:$0xff] %vm683, %v811
        %820 = vst.msk [vmem:[#allocation2 + $0x38] sm:$0xff] %vm683, %v812
        %v821 = vld [vmem:[%s4] sm:$0xf]
        %v822 = vld [vmem:[%s4 + $0x4] sm:$0xf]
        %v823 = vld [vmem:[%s4 + $0x8] sm:$0xf]
        %v824 = vld [vmem:[%s4 + $0xc] sm:$0xf]
        %v825 = vld [vmem:[%s7] sm:$0x1]
        %v827 = vlaneseq
        %v828 = vshrl.u32 %v827, 7
        %v829 = vsub.s32 0, %v828
        %v830 = vrot.slane %v825, %v829
        %v836 = vunpack.c.l.b16 %v821
        %v837 = vunpack.c.l.b16 %v822
        %v838 = vunpack.c.l.b16 %v823
        %v839 = vunpack.c.l.b16 %v824
        %v840 = vpack.c.b16 %v837, %v836
        %v841 = vpack.c.b16 %v839, %v838
        %844 = vmatprep.subr.bf16.mxu0 0
        %845 = vmatpush1.bf16.msra.mxu0 %v840
        %846 = vmatprep.subr.bf16.mxu0 0
        %847 = vmatpush1.bf16.msra.mxu0 %v841
        %848 = vmatprep.subr.bf16.mxu0 0
        %849 = vmatpush1.bf16.msra.mxu0 0
        %850 = vmatprep.subr.bf16.mxu0 0
        %851 = vmatpush1.bf16.msra.mxu0 0
        %852 = vmatprep.subr.bf16.mxu0 0
        %853 = vmatpush1.bf16.msra.mxu0 0
        %854 = vmatprep.subr.bf16.mxu0 0
        %855 = vmatpush1.bf16.msra.mxu0 0
        %856 = vmatprep.subr.bf16.mxu0 0
        %857 = vmatpush1.bf16.msra.mxu0 0
        %858 = vmatprep.subr.bf16.mxu0 0
        %859 = vmatpush1.bf16.msra.mxu0 0
        %860 = vmatprep.subr.bf16.mxu0 0
        %861 = vmatpush1.bf16.msra.mxu0 0
        %862 = vmatprep.subr.bf16.mxu0 0
        %863 = vmatpush1.bf16.msra.mxu0 0
        %864 = vmatprep.subr.bf16.mxu0 0
        %865 = vmatpush1.bf16.msra.mxu0 0
        %866 = vmatprep.subr.bf16.mxu0 0
        %867 = vmatpush1.bf16.msra.mxu0 0
        %868 = vmatprep.subr.bf16.mxu0 0
        %869 = vmatpush1.bf16.msra.mxu0 0
        %870 = vmatprep.subr.bf16.mxu0 0
        %871 = vmatpush1.bf16.msra.mxu0 0
        %872 = vmatprep.subr.bf16.mxu0 0
        %873 = vmatpush1.bf16.msra.mxu0 0
        %874 = vmatprep.subr.bf16.mxu0 0
        %875 = vmatpush1.bf16.msra.mxu0 0
        %876 = vmatprep.mubr.bf16.mxu0 0
        %877 = vmatmul.mubr.bf16.gmra.mrb[0].mxu0 %v685
        %v878 = vpop.f32.mrb[0].mxu0
        %v879 = vadd.f32 %v830, %v878
        %v880 = vpop.f32.mrb[0].mxu0
        %v881 = vpop.f32.mrb[0].mxu0
        %v882 = vadd.f32 %v830, %v881
        %v883 = vpop.f32.mrb[0].mxu0
        %884 = vmatprep.mubr.bf16.mxu0 0
        %885 = vmatmul.mubr.bf16.gmra.mrb[0].mxu0 %v688
        %v886 = vpop.f32.mrb[0].mxu0
        %v887 = vadd.f32 %v830, %v886
        %v888 = vpop.f32.mrb[0].mxu0
        %v889 = vpop.f32.mrb[0].mxu0
        %v890 = vadd.f32 %v830, %v889
        %v891 = vpop.f32.mrb[0].mxu0
        %892 = vmatprep.mubr.bf16.mxu0 0
        %893 = vmatmul.mubr.bf16.gmra.mrb[0].mxu0 %v691
        %v894 = vpop.f32.mrb[0].mxu0
        %v895 = vadd.f32 %v830, %v894
        %v896 = vpop.f32.mrb[0].mxu0
        %v897 = vpop.f32.mrb[0].mxu0
        %v898 = vadd.f32 %v830, %v897
        %v899 = vpop.f32.mrb[0].mxu0
        %900 = vmatprep.mubr.bf16.mxu0 0
        %901 = vmatmul.mubr.bf16.gmra.mrb[0].mxu0 %v694
        %v902 = vpop.f32.mrb[0].mxu0
        %v903 = vadd.f32 %v830, %v902
        %v904 = vpop.f32.mrb[0].mxu0
        %v905 = vpop.f32.mrb[0].mxu0
        %v906 = vadd.f32 %v830, %v905
        %v907 = vpop.f32.mrb[0].mxu0
        %908 = vmatprep.mubr.bf16.mxu0 0
        %909 = vmatmul.mubr.bf16.gmra.mrb[0].mxu0 %v697
        %v910 = vpop.f32.mrb[0].mxu0
        %v911 = vadd.f32 %v830, %v910
        %v912 = vpop.f32.mrb[0].mxu0
        %v913 = vpop.f32.mrb[0].mxu0
        %v914 = vadd.f32 %v830, %v913
        %v915 = vpop.f32.mrb[0].mxu0
        %916 = vmatprep.mubr.bf16.mxu0 0
        %917 = vmatmul.mubr.bf16.gmra.mrb[0].mxu0 %v700
        %v918 = vpop.f32.mrb[0].mxu0
        %v919 = vadd.f32 %v830, %v918
        %v920 = vpop.f32.mrb[0].mxu0
        %v921 = vpop.f32.mrb[0].mxu0
        %v922 = vadd.f32 %v830, %v921
        %v923 = vpop.f32.mrb[0].mxu0
        %924 = vmatprep.mubr.bf16.mxu0 0
        %925 = vmatmul.mubr.bf16.gmra.mrb[0].mxu0 %v703
        %v926 = vpop.f32.mrb[0].mxu0
        %v927 = vadd.f32 %v830, %v926
        %v928 = vpop.f32.mrb[0].mxu0
        %v929 = vpop.f32.mrb[0].mxu0
        %v930 = vadd.f32 %v830, %v929
        %v931 = vpop.f32.mrb[0].mxu0
        %932 = vmatprep.mubr.bf16.mxu0 0
        %933 = vmatmul.mubr.bf16.gmra.mrb[0].mxu0 %v706
        %v934 = vpop.f32.mrb[0].mxu0
        %v935 = vadd.f32 %v830, %v934
        %v936 = vpop.f32.mrb[0].mxu0
        %v937 = vpop.f32.mrb[0].mxu0
        %v938 = vadd.f32 %v830, %v937
        %v939 = vpop.f32.mrb[0].mxu0
        %940 = vdwg.mxu0
        %v941 = vpack.c.bf16 %v882, %v879
        %v942 = vpack.c.bf16 %v890, %v887
        %v943 = vpack.c.bf16 %v898, %v895
        %v944 = vpack.c.bf16 %v906, %v903
        %v945 = vpack.c.bf16 %v914, %v911
        %v946 = vpack.c.bf16 %v922, %v919
        %v947 = vpack.c.bf16 %v930, %v927
        %v948 = vpack.c.bf16 %v938, %v935
        %949 = vst.msk [vmem:[#allocation3] sm:$0xff] %vm683, %v941
        %950 = vst.msk [vmem:[#allocation3 + $0x8] sm:$0xff] %vm683, %v942
        %951 = vst.msk [vmem:[#allocation3 + $0x10] sm:$0xff] %vm683, %v943
        %952 = vst.msk [vmem:[#allocation3 + $0x18] sm:$0xff] %vm683, %v944
        %953 = vst.msk [vmem:[#allocation3 + $0x20] sm:$0xff] %vm683, %v945
        %954 = vst.msk [vmem:[#allocation3 + $0x28] sm:$0xff] %vm683, %v946
        %955 = vst.msk [vmem:[#allocation3 + $0x30] sm:$0xff] %vm683, %v947
        %956 = vst.msk [vmem:[#allocation3 + $0x38] sm:$0xff] %vm683, %v948
      $region96: #{tpu_custom_call.1} parent=91 // pred_fallthru
        _
      %s957 = smul.u32 %s34, 128
      %s958 = scalar_lea.vmem %s588, %s957
      %v959 = vld [vmem:[%s958] sm:$0xff]
      %v960 = vld [vmem:[%s958 + $0x8] sm:$0xff]
      %v961 = vld [vmem:[%s958 + $0x10] sm:$0xff]
      %v962 = vld [vmem:[%s958 + $0x18] sm:$0xff]
      %v963 = vld [vmem:[%s958 + $0x20] sm:$0xff]
      %v964 = vld [vmem:[%s958 + $0x28] sm:$0xff]
      %v965 = vld [vmem:[%s958 + $0x30] sm:$0xff]
      %v966 = vld [vmem:[%s958 + $0x38] sm:$0xff]
      %v967 = vld [vmem:[%s958 + $0x40] sm:$0xff]
      %v968 = vld [vmem:[%s958 + $0x48] sm:$0xff]
      %v969 = vld [vmem:[%s958 + $0x50] sm:$0xff]
      %v970 = vld [vmem:[%s958 + $0x58] sm:$0xff]
      %v971 = vld [vmem:[%s958 + $0x60] sm:$0xff]
      %v972 = vld [vmem:[%s958 + $0x68] sm:$0xff]
      %v973 = vld [vmem:[%s958 + $0x70] sm:$0xff]
      %v974 = vld [vmem:[%s958 + $0x78] sm:$0xff]
      %s975 = scalar_lea.vmem %s1, %s957
      %v976 = vld [vmem:[%s975] sm:$0xff]
      %v977 = vld [vmem:[%s975 + $0x8] sm:$0xff]
      %v978 = vld [vmem:[%s975 + $0x10] sm:$0xff]
      %v979 = vld [vmem:[%s975 + $0x18] sm:$0xff]
      %v980 = vld [vmem:[%s975 + $0x20] sm:$0xff]
      %v981 = vld [vmem:[%s975 + $0x28] sm:$0xff]
      %v982 = vld [vmem:[%s975 + $0x30] sm:$0xff]
      %v983 = vld [vmem:[%s975 + $0x38] sm:$0xff]
      %v984 = vld [vmem:[%s975 + $0x40] sm:$0xff]
      %v985 = vld [vmem:[%s975 + $0x48] sm:$0xff]
      %v986 = vld [vmem:[%s975 + $0x50] sm:$0xff]
      %v987 = vld [vmem:[%s975 + $0x58] sm:$0xff]
      %v988 = vld [vmem:[%s975 + $0x60] sm:$0xff]
      %v989 = vld [vmem:[%s975 + $0x68] sm:$0xff]
      %v990 = vld [vmem:[%s975 + $0x70] sm:$0xff]
      %v991 = vld [vmem:[%s975 + $0x78] sm:$0xff]
      %v992 = vadd.f32 %v959, %v976
      %v993 = vadd.f32 %v960, %v977
      %v994 = vadd.f32 %v961, %v978
      %v995 = vadd.f32 %v962, %v979
      %v996 = vadd.f32 %v963, %v980
      %v997 = vadd.f32 %v964, %v981
      %v998 = vadd.f32 %v965, %v982
      %v999 = vadd.f32 %v966, %v983
      %v1000 = vadd.f32 %v967, %v984
      %v1001 = vadd.f32 %v968, %v985
      %v1002 = vadd.f32 %v969, %v986
      %v1003 = vadd.f32 %v970, %v987
      %v1004 = vadd.f32 %v971, %v988
      %v1005 = vadd.f32 %v972, %v989
      %v1006 = vadd.f32 %v973, %v990
      %v1007 = vadd.f32 %v974, %v991
      %v1008 = vpack.c.bf16 %v993, %v992
      %v1009 = vpack.c.bf16 %v995, %v994
      %v1010 = vpack.c.bf16 %v997, %v996
      %v1011 = vpack.c.bf16 %v999, %v998
      %v1012 = vpack.c.bf16 %v1001, %v1000
      %v1013 = vpack.c.bf16 %v1003, %v1002
      %v1014 = vpack.c.bf16 %v1005, %v1004
      %v1015 = vpack.c.bf16 %v1007, %v1006
      %v1016 = vld [vmem:[%s2] sm:$0xf]
      %v1017 = vld [vmem:[%s2 + $0x4] sm:$0xf]
      %v1018 = vld [vmem:[%s2 + $0x8] sm:$0xf]
      %v1019 = vld [vmem:[%s2 + $0xc] sm:$0xf]
      %v1020 = vld [vmem:[%s5] sm:$0x1]
      %v1022 = vlaneseq
      %v1023 = vshrl.u32 %v1022, 7
      %v1024 = vsub.s32 0, %v1023
      %v1025 = vrot.slane %v1020, %v1024
      %v1031 = vunpack.c.l.b16 %v1016
      %v1032 = vunpack.c.l.b16 %v1017
      %v1033 = vunpack.c.l.b16 %v1018
      %v1034 = vunpack.c.l.b16 %v1019
      %v1035 = vpack.c.b16 %v1032, %v1031
      %v1036 = vpack.c.b16 %v1034, %v1033
      %vm1039 = vcmask 261120
      %v1041 = vsel %vm1039, %v1008, 0
      %v1044 = vsel %vm1039, %v1009, 0
      %v1047 = vsel %vm1039, %v1010, 0
      %v1050 = vsel %vm1039, %v1011, 0
      %v1053 = vsel %vm1039, %v1012, 0
      %v1056 = vsel %vm1039, %v1013, 0
      %v1059 = vsel %vm1039, %v1014, 0
      %v1062 = vsel %vm1039, %v1015, 0
      %1064 = vmatprep.subr.bf16.mxu0 0
      %1065 = vmatpush1.bf16.msra.mxu0 %v1035
      %1066 = vmatprep.subr.bf16.mxu0 0
      %1067 = vmatpush1.bf16.msra.mxu0 %v1036
      %1068 = vmatprep.subr.bf16.mxu0 0
      %1069 = vmatpush1.bf16.msra.mxu0 0
      %1070 = vmatprep.subr.bf16.mxu0 0
      %1071 = vmatpush1.bf16.msra.mxu0 0
      %1072 = vmatprep.subr.bf16.mxu0 0
      %1073 = vmatpush1.bf16.msra.mxu0 0
      %1074 = vmatprep.subr.bf16.mxu0 0
      %1075 = vmatpush1.bf16.msra.mxu0 0
      %1076 = vmatprep.subr.bf16.mxu0 0
      %1077 = vmatpush1.bf16.msra.mxu0 0
      %1078 = vmatprep.subr.bf16.mxu0 0
      %1079 = vmatpush1.bf16.msra.mxu0 0
      %1080 = vmatprep.subr.bf16.mxu0 0
      %1081 = vmatpush1.bf16.msra.mxu0 0
      %1082 = vmatprep.subr.bf16.mxu0 0
      %1083 = vmatpush1.bf16.msra.mxu0 0
      %1084 = vmatprep.subr.bf16.mxu0 0
      %1085 = vmatpush1.bf16.msra.mxu0 0
      %1086 = vmatprep.subr.bf16.mxu0 0
      %1087 = vmatpush1.bf16.msra.mxu0 0
      %1088 = vmatprep.subr.bf16.mxu0 0
      %1089 = vmatpush1.bf16.msra.mxu0 0
      %1090 = vmatprep.subr.bf16.mxu0 0
      %1091 = vmatpush1.bf16.msra.mxu0 0
      %1092 = vmatprep.subr.bf16.mxu0 0
      %1093 = vmatpush1.bf16.msra.mxu0 0
      %1094 = vmatprep.subr.bf16.mxu0 0
      %1095 = vmatpush1.bf16.msra.mxu0 0
      %1096 = vmatprep.mubr.bf16.mxu0 0
      %1097 = vmatmul.mubr.bf16.gmra.mrb[0].mxu0 %v1041
      %v1098 = vpop.f32.mrb[0].mxu0
      %v1099 = vadd.f32 %v1025, %v1098
      %v1100 = vpop.f32.mrb[0].mxu0
      %v1101 = vpop.f32.mrb[0].mxu0
      %v1102 = vadd.f32 %v1025, %v1101
      %v1103 = vpop.f32.mrb[0].mxu0
      %1104 = vmatprep.mubr.bf16.mxu0 0
      %1105 = vmatmul.mubr.bf16.gmra.mrb[0].mxu0 %v1044
      %v1106 = vpop.f32.mrb[0].mxu0
      %v1107 = vadd.f32 %v1025, %v1106
      %v1108 = vpop.f32.mrb[0].mxu0
      %v1109 = vpop.f32.mrb[0].mxu0
      %v1110 = vadd.f32 %v1025, %v1109
      %v1111 = vpop.f32.mrb[0].mxu0
      %1112 = vmatprep.mubr.bf16.mxu0 0
      %1113 = vmatmul.mubr.bf16.gmra.mrb[0].mxu0 %v1047
      %v1114 = vpop.f32.mrb[0].mxu0
      %v1115 = vadd.f32 %v1025, %v1114
      %v1116 = vpop.f32.mrb[0].mxu0
      %v1117 = vpop.f32.mrb[0].mxu0
      %v1118 = vadd.f32 %v1025, %v1117
      %v1119 = vpop.f32.mrb[0].mxu0
      %1120 = vmatprep.mubr.bf16.mxu0 0
      %1121 = vmatmul.mubr.bf16.gmra.mrb[0].mxu0 %v1050
      %v1122 = vpop.f32.mrb[0].mxu0
      %v1123 = vadd.f32 %v1025, %v1122
      %v1124 = vpop.f32.mrb[0].mxu0
      %v1125 = vpop.f32.mrb[0].mxu0
      %v1126 = vadd.f32 %v1025, %v1125
      %v1127 = vpop.f32.mrb[0].mxu0
      %1128 = vmatprep.mubr.bf16.mxu0 0
      %1129 = vmatmul.mubr.bf16.gmra.mrb[0].mxu0 %v1053
      %v1130 = vpop.f32.mrb[0].mxu0
      %v1131 = vadd.f32 %v1025, %v1130
      %v1132 = vpop.f32.mrb[0].mxu0
      %v1133 = vpop.f32.mrb[0].mxu0
      %v1134 = vadd.f32 %v1025, %v1133
      %v1135 = vpop.f32.mrb[0].mxu0
      %1136 = vmatprep.mubr.bf16.mxu0 0
      %1137 = vmatmul.mubr.bf16.gmra.mrb[0].mxu0 %v1056
      %v1138 = vpop.f32.mrb[0].mxu0
      %v1139 = vadd.f32 %v1025, %v1138
      %v1140 = vpop.f32.mrb[0].mxu0
      %v1141 = vpop.f32.mrb[0].mxu0
      %v1142 = vadd.f32 %v1025, %v1141
      %v1143 = vpop.f32.mrb[0].mxu0
      %1144 = vmatprep.mubr.bf16.mxu0 0
      %1145 = vmatmul.mubr.bf16.gmra.mrb[0].mxu0 %v1059
      %v1146 = vpop.f32.mrb[0].mxu0
      %v1147 = vadd.f32 %v1025, %v1146
      %v1148 = vpop.f32.mrb[0].mxu0
      %v1149 = vpop.f32.mrb[0].mxu0
      %v1150 = vadd.f32 %v1025, %v1149
      %v1151 = vpop.f32.mrb[0].mxu0
      %1152 = vmatprep.mubr.bf16.mxu0 0
      %1153 = vmatmul.mubr.bf16.gmra.mrb[0].mxu0 %v1062
      %v1154 = vpop.f32.mrb[0].mxu0
      %v1155 = vadd.f32 %v1025, %v1154
      %v1156 = vpop.f32.mrb[0].mxu0
      %v1157 = vpop.f32.mrb[0].mxu0
      %v1158 = vadd.f32 %v1025, %v1157
      %v1159 = vpop.f32.mrb[0].mxu0
      %1160 = vdwg.mxu0
      %v1161 = vpack.c.bf16 %v1102, %v1099
      %v1162 = vpack.c.bf16 %v1110, %v1107
      %v1163 = vpack.c.bf16 %v1118, %v1115
      %v1164 = vpack.c.bf16 %v1126, %v1123
      %v1165 = vpack.c.bf16 %v1134, %v1131
      %v1166 = vpack.c.bf16 %v1142, %v1139
      %v1167 = vpack.c.bf16 %v1150, %v1147
      %v1168 = vpack.c.bf16 %v1158, %v1155
      %v1169 = vld [vmem:[#allocation2] sm:$0xff]
      %v1170 = vld [vmem:[#allocation2 + $0x8] sm:$0xff]
      %v1171 = vld [vmem:[#allocation2 + $0x10] sm:$0xff]
      %v1172 = vld [vmem:[#allocation2 + $0x18] sm:$0xff]
      %v1173 = vld [vmem:[#allocation2 + $0x20] sm:$0xff]
      %v1174 = vld [vmem:[#allocation2 + $0x28] sm:$0xff]
      %v1175 = vld [vmem:[#allocation2 + $0x30] sm:$0xff]
      %v1176 = vld [vmem:[#allocation2 + $0x38] sm:$0xff]
      %v1177 = vld [vmem:[#allocation3] sm:$0xff]
      %v1178 = vld [vmem:[#allocation3 + $0x8] sm:$0xff]
      %v1179 = vld [vmem:[#allocation3 + $0x10] sm:$0xff]
      %v1180 = vld [vmem:[#allocation3 + $0x18] sm:$0xff]
      %v1181 = vld [vmem:[#allocation3 + $0x20] sm:$0xff]
      %v1182 = vld [vmem:[#allocation3 + $0x28] sm:$0xff]
      %v1183 = vld [vmem:[#allocation3 + $0x30] sm:$0xff]
      %v1184 = vld [vmem:[#allocation3 + $0x38] sm:$0xff]
      %v1185 = vld [vmem:[%s8] sm:$0xf]
      %v1186 = vld [vmem:[%s8 + $0x4] sm:$0xf]
      %v1187 = vld [vmem:[%s8 + $0x8] sm:$0xf]
      %v1188 = vld [vmem:[%s8 + $0xc] sm:$0xf]
      %v1189 = vlaneseq
      %v1190 = vand.u32 %v1189, 127
      %vm1191 = vcmp.lt.s32.totalorder %v1190, 64
      %v1192 = vsel %vm1191, 0.0, -1e+30
      %vm1193 = vcmask 64512
      %v1195 = vsel %vm1193, %v1161, 0
      %v1198 = vsel %vm1193, %v1162, 0
      %v1201 = vsel %vm1193, %v1163, 0
      %v1204 = vsel %vm1193, %v1164, 0
      %v1207 = vsel %vm1193, %v1165, 0
      %v1210 = vsel %vm1193, %v1166, 0
      %v1213 = vsel %vm1193, %v1167, 0
      %v1216 = vsel %vm1193, %v1168, 0
      %v1219 = vsel %vm1193, %v1169, 0
      %v1222 = vsel %vm1193, %v1170, 0
      %v1225 = vsel %vm1193, %v1171, 0
      %v1228 = vsel %vm1193, %v1172, 0
      %v1231 = vsel %vm1193, %v1173, 0
      %v1234 = vsel %vm1193, %v1174, 0
      %v1237 = vsel %vm1193, %v1175, 0
      %v1240 = vsel %vm1193, %v1176, 0
      %1242 = vmatprep.subr.bf16.mxu0 0
      %1243 = vmatpush1.bf16.xpose.msra.mxu0 %v1219
      %1244 = vmatprep.subr.bf16.mxu0 0
      %1245 = vmatpush1.bf16.xpose.msra.mxu0 %v1222
      %1246 = vmatprep.subr.bf16.mxu0 0
      %1247 = vmatpush1.bf16.xpose.msra.mxu0 %v1225
      %1248 = vmatprep.subr.bf16.mxu0 0
      %1249 = vmatpush1.bf16.xpose.msra.mxu0 %v1228
      %1250 = vmatprep.subr.bf16.mxu0 0
      %1251 = vmatpush1.bf16.xpose.msra.mxu0 %v1231
      %1252 = vmatprep.subr.bf16.mxu0 0
      %1253 = vmatpush1.bf16.xpose.msra.mxu0 %v1234
      %1254 = vmatprep.subr.bf16.mxu0 0
      %1255 = vmatpush1.bf16.xpose.msra.mxu0 %v1237
      %1256 = vmatprep.subr.bf16.mxu0 0
      %1257 = vmatpush1.bf16.xpose.msra.mxu0 %v1240
      %1258 = vmatprep.subr.bf16.mxu0 0
      %1259 = vmatpush1.bf16.xpose.msra.mxu0 0
      %1260 = vmatprep.subr.bf16.mxu0 0
      %1261 = vmatpush1.bf16.xpose.msra.mxu0 0
      %1262 = vmatprep.subr.bf16.mxu0 0
      %1263 = vmatpush1.bf16.xpose.msra.mxu0 0
      %1264 = vmatprep.subr.bf16.mxu0 0
      %1265 = vmatpush1.bf16.xpose.msra.mxu0 0
      %1266 = vmatprep.subr.bf16.mxu0 0
      %1267 = vmatpush1.bf16.xpose.msra.mxu0 0
      %1268 = vmatprep.subr.bf16.mxu0 0
      %1269 = vmatpush1.bf16.xpose.msra.mxu0 0
      %1270 = vmatprep.subr.bf16.mxu0 0
      %1271 = vmatpush1.bf16.xpose.msra.mxu0 0
      %1272 = vmatprep.subr.bf16.mxu0 0
      %1273 = vmatpush1.bf16.xpose.msra.mxu0 0
      %1274 = vmatprep.mubr.bf16.mxu0 0
      %1275 = vmatmul.mubr.bf16.gmra.mrb[0].mxu0 %v1195
      %v1276 = vpop.f32.mrb[0].mxu0
      %v1277 = vadd.f32 %v1192, %v1276
      %v1278 = vpop.f32.mrb[0].mxu0
      %v1279 = vpop.f32.mrb[0].mxu0
      %v1280 = vadd.f32 %v1192, %v1279
      %v1281 = vpop.f32.mrb[0].mxu0
      %1282 = vmatprep.mubr.bf16.mxu0 0
      %1283 = vmatmul.mubr.bf16.gmra.mrb[0].mxu0 %v1198
      %v1284 = vpop.f32.mrb[0].mxu0
      %v1285 = vadd.f32 %v1192, %v1284
      %v1286 = vpop.f32.mrb[0].mxu0
      %v1287 = vpop.f32.mrb[0].mxu0
      %v1288 = vadd.f32 %v1192, %v1287
      %v1289 = vpop.f32.mrb[0].mxu0
      %1290 = vmatprep.mubr.bf16.mxu0 0
      %1291 = vmatmul.mubr.bf16.gmra.mrb[0].mxu0 %v1201
      %v1292 = vpop.f32.mrb[0].mxu0
      %v1293 = vadd.f32 %v1192, %v1292
      %v1294 = vpop.f32.mrb[0].mxu0
      %v1295 = vpop.f32.mrb[0].mxu0
      %v1296 = vadd.f32 %v1192, %v1295
      %v1297 = vpop.f32.mrb[0].mxu0
      %1298 = vmatprep.mubr.bf16.mxu0 0
      %1299 = vmatmul.mubr.bf16.gmra.mrb[0].mxu0 %v1204
      %v1300 = vpop.f32.mrb[0].mxu0
      %v1301 = vadd.f32 %v1192, %v1300
      %v1302 = vpop.f32.mrb[0].mxu0
      %v1303 = vpop.f32.mrb[0].mxu0
      %v1304 = vadd.f32 %v1192, %v1303
      %v1305 = vpop.f32.mrb[0].mxu0
      %1306 = vmatprep.mubr.bf16.mxu0 0
      %1307 = vmatmul.mubr.bf16.gmra.mrb[0].mxu0 %v1207
      %v1308 = vpop.f32.mrb[0].mxu0
      %v1309 = vadd.f32 %v1192, %v1308
      %v1310 = vpop.f32.mrb[0].mxu0
      %v1311 = vpop.f32.mrb[0].mxu0
      %v1312 = vadd.f32 %v1192, %v1311
      %v1313 = vpop.f32.mrb[0].mxu0
      %1314 = vmatprep.mubr.bf16.mxu0 0
      %1315 = vmatmul.mubr.bf16.gmra.mrb[0].mxu0 %v1210
      %v1316 = vpop.f32.mrb[0].mxu0
      %v1317 = vadd.f32 %v1192, %v1316
      %v1318 = vpop.f32.mrb[0].mxu0
      %v1319 = vpop.f32.mrb[0].mxu0
      %v1320 = vadd.f32 %v1192, %v1319
      %v1321 = vpop.f32.mrb[0].mxu0
      %1322 = vmatprep.mubr.bf16.mxu0 0
      %1323 = vmatmul.mubr.bf16.gmra.mrb[0].mxu0 %v1213
      %v1324 = vpop.f32.mrb[0].mxu0
      %v1325 = vadd.f32 %v1192, %v1324
      %v1326 = vpop.f32.mrb[0].mxu0
      %v1327 = vpop.f32.mrb[0].mxu0
      %v1328 = vadd.f32 %v1192, %v1327
      %v1329 = vpop.f32.mrb[0].mxu0
      %1330 = vmatprep.mubr.bf16.mxu0 0
      %1331 = vmatmul.mubr.bf16.gmra.mrb[0].mxu0 %v1216
      %v1332 = vpop.f32.mrb[0].mxu0
      %v1333 = vadd.f32 %v1192, %v1332
      %v1334 = vpop.f32.mrb[0].mxu0
      %v1335 = vpop.f32.mrb[0].mxu0
      %v1336 = vadd.f32 %v1192, %v1335
      %v1337 = vpop.f32.mrb[0].mxu0
      %1338 = vdwg.mxu0
      %1339 = vmax.xlane.f32.xlu0 %v1277
      %v1340 = vpop.xlane.xlu0 %1339
      %1341 = vmax.xlane.f32.xlu0 %v1280
      %v1342 = vpop.xlane.xlu0 %1341
      %1343 = vmax.xlane.f32.xlu0 %v1285
      %v1344 = vpop.xlane.xlu0 %1343
      %1345 = vmax.xlane.f32.xlu0 %v1288
      %v1346 = vpop.xlane.xlu0 %1345
      %1347 = vmax.xlane.f32.xlu0 %v1293
      %v1348 = vpop.xlane.xlu0 %1347
      %1349 = vmax.xlane.f32.xlu0 %v1296
      %v1350 = vpop.xlane.xlu0 %1349
      %1351 = vmax.xlane.f32.xlu0 %v1301
      %v1352 = vpop.xlane.xlu0 %1351
      %1353 = vmax.xlane.f32.xlu0 %v1304
      %v1354 = vpop.xlane.xlu0 %1353
      %1355 = vmax.xlane.f32.xlu0 %v1309
      %v1356 = vpop.xlane.xlu0 %1355
      %1357 = vmax.xlane.f32.xlu0 %v1312
      %v1358 = vpop.xlane.xlu0 %1357
      %1359 = vmax.xlane.f32.xlu0 %v1317
      %v1360 = vpop.xlane.xlu0 %1359
      %1361 = vmax.xlane.f32.xlu0 %v1320
      %v1362 = vpop.xlane.xlu0 %1361
      %1363 = vmax.xlane.f32.xlu0 %v1325
      %v1364 = vpop.xlane.xlu0 %1363
      %1365 = vmax.xlane.f32.xlu0 %v1328
      %v1366 = vpop.xlane.xlu0 %1365
      %1367 = vmax.xlane.f32.xlu0 %v1333
      %v1368 = vpop.xlane.xlu0 %1367
      %1369 = vmax.xlane.f32.xlu0 %v1336
      %v1370 = vpop.xlane.xlu0 %1369
      %v1371 = vsub.f32 %v1277, %v1340
      %v1372 = vsub.f32 %v1280, %v1342
      %v1373 = vsub.f32 %v1285, %v1344
      %v1374 = vsub.f32 %v1288, %v1346
      %v1375 = vsub.f32 %v1293, %v1348
      %v1376 = vsub.f32 %v1296, %v1350
      %v1377 = vsub.f32 %v1301, %v1352
      %v1378 = vsub.f32 %v1304, %v1354
      %v1379 = vsub.f32 %v1309, %v1356
      %v1380 = vsub.f32 %v1312, %v1358
      %v1381 = vsub.f32 %v1317, %v1360
      %v1382 = vsub.f32 %v1320, %v1362
      %v1383 = vsub.f32 %v1325, %v1364
      %v1384 = vsub.f32 %v1328, %v1366
      %v1385 = vsub.f32 %v1333, %v1368
      %v1386 = vsub.f32 %v1336, %v1370
      %v1387 = vmul.f32 %v1371, 1.442695
      %v1388 = vpow.pop %v1387
      %v1389 = vmul.f32 %v1372, 1.442695
      %v1390 = vpow.pop %v1389
      %v1391 = vmul.f32 %v1373, 1.442695
      %v1392 = vpow.pop %v1391
      %v1393 = vmul.f32 %v1374, 1.442695
      %v1394 = vpow.pop %v1393
      %v1395 = vmul.f32 %v1375, 1.442695
      %v1396 = vpow.pop %v1395
      %v1397 = vmul.f32 %v1376, 1.442695
      %v1398 = vpow.pop %v1397
      %v1399 = vmul.f32 %v1377, 1.442695
      %v1400 = vpow.pop %v1399
      %v1401 = vmul.f32 %v1378, 1.442695
      %v1402 = vpow.pop %v1401
      %v1403 = vmul.f32 %v1379, 1.442695
      %v1404 = vpow.pop %v1403
      %v1405 = vmul.f32 %v1380, 1.442695
      %v1406 = vpow.pop %v1405
      %v1407 = vmul.f32 %v1381, 1.442695
      %v1408 = vpow.pop %v1407
      %v1409 = vmul.f32 %v1382, 1.442695
      %v1410 = vpow.pop %v1409
      %v1411 = vmul.f32 %v1383, 1.442695
      %v1412 = vpow.pop %v1411
      %v1413 = vmul.f32 %v1384, 1.442695
      %v1414 = vpow.pop %v1413
      %v1415 = vmul.f32 %v1385, 1.442695
      %v1416 = vpow.pop %v1415
      %v1417 = vmul.f32 %v1386, 1.442695
      %v1418 = vpow.pop %v1417
      %1419 = vadd.xlane.f32.xlu0 %v1388
      %v1420 = vpop.xlane.xlu0 %1419
      %1421 = vadd.xlane.f32.xlu0 %v1390
      %v1422 = vpop.xlane.xlu0 %1421
      %1423 = vadd.xlane.f32.xlu0 %v1392
      %v1424 = vpop.xlane.xlu0 %1423
      %1425 = vadd.xlane.f32.xlu0 %v1394
      %v1426 = vpop.xlane.xlu0 %1425
      %1427 = vadd.xlane.f32.xlu0 %v1396
      %v1428 = vpop.xlane.xlu0 %1427
      %1429 = vadd.xlane.f32.xlu0 %v1398
      %v1430 = vpop.xlane.xlu0 %1429
      %1431 = vadd.xlane.f32.xlu0 %v1400
      %v1432 = vpop.xlane.xlu0 %1431
      %1433 = vadd.xlane.f32.xlu0 %v1402
      %v1434 = vpop.xlane.xlu0 %1433
      %1435 = vadd.xlane.f32.xlu0 %v1404
      %v1436 = vpop.xlane.xlu0 %1435
      %1437 = vadd.xlane.f32.xlu0 %v1406
      %v1438 = vpop.xlane.xlu0 %1437
      %1439 = vadd.xlane.f32.xlu0 %v1408
      %v1440 = vpop.xlane.xlu0 %1439
      %1441 = vadd.xlane.f32.xlu0 %v1410
      %v1442 = vpop.xlane.xlu0 %1441
      %1443 = vadd.xlane.f32.xlu0 %v1412
      %v1444 = vpop.xlane.xlu0 %1443
      %1445 = vadd.xlane.f32.xlu0 %v1414
      %v1446 = vpop.xlane.xlu0 %1445
      %1447 = vadd.xlane.f32.xlu0 %v1416
      %v1448 = vpop.xlane.xlu0 %1447
      %1449 = vadd.xlane.f32.xlu0 %v1418
      %v1450 = vpop.xlane.xlu0 %1449
      %v1451 = vrcp.pop %v1420
      %v1452 = vrcp.pop %v1422
      %v1453 = vrcp.pop %v1424
      %v1454 = vrcp.pop %v1426
      %v1455 = vrcp.pop %v1428
      %v1456 = vrcp.pop %v1430
      %v1457 = vrcp.pop %v1432
      %v1458 = vrcp.pop %v1434
      %v1459 = vrcp.pop %v1436
      %v1460 = vrcp.pop %v1438
      %v1461 = vrcp.pop %v1440
      %v1462 = vrcp.pop %v1442
      %v1463 = vrcp.pop %v1444
      %v1464 = vrcp.pop %v1446
      %v1465 = vrcp.pop %v1448
      %v1466 = vrcp.pop %v1450
      %v1467 = vmul.f32 %v1388, %v1451
      %v1468 = vmul.f32 %v1390, %v1452
      %v1469 = vmul.f32 %v1392, %v1453
      %v1470 = vmul.f32 %v1394, %v1454
      %v1471 = vmul.f32 %v1396, %v1455
      %v1472 = vmul.f32 %v1398, %v1456
      %v1473 = vmul.f32 %v1400, %v1457
      %v1474 = vmul.f32 %v1402, %v1458
      %v1475 = vmul.f32 %v1404, %v1459
      %v1476 = vmul.f32 %v1406, %v1460
      %v1477 = vmul.f32 %v1408, %v1461
      %v1478 = vmul.f32 %v1410, %v1462
      %v1479 = vmul.f32 %v1412, %v1463
      %v1480 = vmul.f32 %v1414, %v1464
      %v1481 = vmul.f32 %v1416, %v1465
      %v1482 = vmul.f32 %v1418, %v1466
      %v1483 = vpack.c.bf16 %v1468, %v1467
      %v1484 = vpack.c.bf16 %v1470, %v1469
      %v1485 = vpack.c.bf16 %v1472, %v1471
      %v1486 = vpack.c.bf16 %v1474, %v1473
      %v1487 = vpack.c.bf16 %v1476, %v1475
      %v1488 = vpack.c.bf16 %v1478, %v1477
      %v1489 = vpack.c.bf16 %v1480, %v1479
      %v1490 = vpack.c.bf16 %v1482, %v1481
      %1491 = vmatprep.subr.bf16.mxu0 0
      %1492 = vmatpush1.bf16.msra.mxu0 %v1177
      %1493 = vmatprep.subr.bf16.mxu0 0
      %1494 = vmatpush1.bf16.msra.mxu0 %v1178
      %1495 = vmatprep.subr.bf16.mxu0 0
      %1496 = vmatpush1.bf16.msra.mxu0 %v1179
      %1497 = vmatprep.subr.bf16.mxu0 0
      %1498 = vmatpush1.bf16.msra.mxu0 %v1180
      %1499 = vmatprep.subr.bf16.mxu0 0
      %1500 = vmatpush1.bf16.msra.mxu0 %v1181
      %1501 = vmatprep.subr.bf16.mxu0 0
      %1502 = vmatpush1.bf16.msra.mxu0 %v1182
      %1503 = vmatprep.subr.bf16.mxu0 0
      %1504 = vmatpush1.bf16.msra.mxu0 %v1183
      %1505 = vmatprep.subr.bf16.mxu0 0
      %1506 = vmatpush1.bf16.msra.mxu0 %v1184
      %1507 = vmatprep.subr.bf16.mxu0 0
      %1508 = vmatpush1.bf16.msra.mxu0 0
      %1509 = vmatprep.subr.bf16.mxu0 0
      %1510 = vmatpush1.bf16.msra.mxu0 0
      %1511 = vmatprep.subr.bf16.mxu0 0
      %1512 = vmatpush1.bf16.msra.mxu0 0
      %1513 = vmatprep.subr.bf16.mxu0 0
      %1514 = vmatpush1.bf16.msra.mxu0 0
      %1515 = vmatprep.subr.bf16.mxu0 0
      %1516 = vmatpush1.bf16.msra.mxu0 0
      %1517 = vmatprep.subr.bf16.mxu0 0
      %1518 = vmatpush1.bf16.msra.mxu0 0
      %1519 = vmatprep.subr.bf16.mxu0 0
      %1520 = vmatpush1.bf16.msra.mxu0 0
      %1521 = vmatprep.subr.bf16.mxu0 0
      %1522 = vmatpush1.bf16.msra.mxu0 0
      %1523 = vmatprep.mubr.bf16.mxu0 0
      %1524 = vmatmul.mubr.bf16.gmra.mrb[0].mxu0 %v1483
      %v1525 = vpop.f32.mrb[0].mxu0
      %v1526 = vadd.f32 0.0, %v1525
      %v1527 = vpop.f32.mrb[0].mxu0
      %v1528 = vpop.f32.mrb[0].mxu0
      %v1529 = vadd.f32 0.0, %v1528
      %v1530 = vpop.f32.mrb[0].mxu0
      %1531 = vmatprep.mubr.bf16.mxu0 0
      %1532 = vmatmul.mubr.bf16.gmra.mrb[0].mxu0 %v1484
      %v1533 = vpop.f32.mrb[0].mxu0
      %v1534 = vadd.f32 0.0, %v1533
      %v1535 = vpop.f32.mrb[0].mxu0
      %v1536 = vpop.f32.mrb[0].mxu0
      %v1537 = vadd.f32 0.0, %v1536
      %v1538 = vpop.f32.mrb[0].mxu0
      %1539 = vmatprep.mubr.bf16.mxu0 0
      %1540 = vmatmul.mubr.bf16.gmra.mrb[0].mxu0 %v1485
      %v1541 = vpop.f32.mrb[0].mxu0
      %v1542 = vadd.f32 0.0, %v1541
      %v1543 = vpop.f32.mrb[0].mxu0
      %v1544 = vpop.f32.mrb[0].mxu0
      %v1545 = vadd.f32 0.0, %v1544
      %v1546 = vpop.f32.mrb[0].mxu0
      %1547 = vmatprep.mubr.bf16.mxu0 0
      %1548 = vmatmul.mubr.bf16.gmra.mrb[0].mxu0 %v1486
      %v1549 = vpop.f32.mrb[0].mxu0
      %v1550 = vadd.f32 0.0, %v1549
      %v1551 = vpop.f32.mrb[0].mxu0
      %v1552 = vpop.f32.mrb[0].mxu0
      %v1553 = vadd.f32 0.0, %v1552
      %v1554 = vpop.f32.mrb[0].mxu0
      %1555 = vmatprep.mubr.bf16.mxu0 0
      %1556 = vmatmul.mubr.bf16.gmra.mrb[0].mxu0 %v1487
      %v1557 = vpop.f32.mrb[0].mxu0
      %v1558 = vadd.f32 0.0, %v1557
      %v1559 = vpop.f32.mrb[0].mxu0
      %v1560 = vpop.f32.mrb[0].mxu0
      %v1561 = vadd.f32 0.0, %v1560
      %v1562 = vpop.f32.mrb[0].mxu0
      %1563 = vmatprep.mubr.bf16.mxu0 0
      %1564 = vmatmul.mubr.bf16.gmra.mrb[0].mxu0 %v1488
      %v1565 = vpop.f32.mrb[0].mxu0
      %v1566 = vadd.f32 0.0, %v1565
      %v1567 = vpop.f32.mrb[0].mxu0
      %v1568 = vpop.f32.mrb[0].mxu0
      %v1569 = vadd.f32 0.0, %v1568
      %v1570 = vpop.f32.mrb[0].mxu0
      %1571 = vmatprep.mubr.bf16.mxu0 0
      %1572 = vmatmul.mubr.bf16.gmra.mrb[0].mxu0 %v1489
      %v1573 = vpop.f32.mrb[0].mxu0
      %v1574 = vadd.f32 0.0, %v1573
      %v1575 = vpop.f32.mrb[0].mxu0
      %v1576 = vpop.f32.mrb[0].mxu0
      %v1577 = vadd.f32 0.0, %v1576
      %v1578 = vpop.f32.mrb[0].mxu0
      %1579 = vmatprep.mubr.bf16.mxu0 0
      %1580 = vmatmul.mubr.bf16.gmra.mrb[0].mxu0 %v1490
      %v1581 = vpop.f32.mrb[0].mxu0
      %v1582 = vadd.f32 0.0, %v1581
      %v1583 = vpop.f32.mrb[0].mxu0
      %v1584 = vpop.f32.mrb[0].mxu0
      %v1585 = vadd.f32 0.0, %v1584
      %v1586 = vpop.f32.mrb[0].mxu0
      %1587 = vdwg.mxu0
      %v1588 = vpack.c.bf16 %v1529, %v1526
      %v1589 = vpack.c.bf16 %v1537, %v1534
      %v1590 = vpack.c.bf16 %v1545, %v1542
      %v1591 = vpack.c.bf16 %v1553, %v1550
      %v1592 = vpack.c.bf16 %v1561, %v1558
      %v1593 = vpack.c.bf16 %v1569, %v1566
      %v1594 = vpack.c.bf16 %v1577, %v1574
      %v1595 = vpack.c.bf16 %v1585, %v1582
      %1604 = vrot.lane.b32.xlu0 %v1161, 120
      %v1605 = vpop.permute.xlu0 %1604
      %1606 = vrot.lane.b32.xlu0 %v1162, 120
      %v1607 = vpop.permute.xlu0 %1606
      %1608 = vrot.lane.b32.xlu0 %v1163, 120
      %v1609 = vpop.permute.xlu0 %1608
      %1610 = vrot.lane.b32.xlu0 %v1164, 120
      %v1611 = vpop.permute.xlu0 %1610
      %1612 = vrot.lane.b32.xlu0 %v1165, 120
      %v1613 = vpop.permute.xlu0 %1612
      %1614 = vrot.lane.b32.xlu0 %v1166, 120
      %v1615 = vpop.permute.xlu0 %1614
      %1616 = vrot.lane.b32.xlu0 %v1167, 120
      %v1617 = vpop.permute.xlu0 %1616
      %1618 = vrot.lane.b32.xlu0 %v1168, 120
      %v1619 = vpop.permute.xlu0 %1618
      %1628 = vrot.lane.b32.xlu0 %v1169, 120
      %v1629 = vpop.permute.xlu0 %1628
      %1630 = vrot.lane.b32.xlu0 %v1170, 120
      %v1631 = vpop.permute.xlu0 %1630
      %1632 = vrot.lane.b32.xlu0 %v1171, 120
      %v1633 = vpop.permute.xlu0 %1632
      %1634 = vrot.lane.b32.xlu0 %v1172, 120
      %v1635 = vpop.permute.xlu0 %1634
      %1636 = vrot.lane.b32.xlu0 %v1173, 120
      %v1637 = vpop.permute.xlu0 %1636
      %1638 = vrot.lane.b32.xlu0 %v1174, 120
      %v1639 = vpop.permute.xlu0 %1638
      %1640 = vrot.lane.b32.xlu0 %v1175, 120
      %v1641 = vpop.permute.xlu0 %1640
      %1642 = vrot.lane.b32.xlu0 %v1176, 120
      %v1643 = vpop.permute.xlu0 %1642
      %v1645 = vsel %vm1193, %v1605, 0
      %v1648 = vsel %vm1193, %v1607, 0
      %v1651 = vsel %vm1193, %v1609, 0
      %v1654 = vsel %vm1193, %v1611, 0
      %v1657 = vsel %vm1193, %v1613, 0
      %v1660 = vsel %vm1193, %v1615, 0
      %v1663 = vsel %vm1193, %v1617, 0
      %v1666 = vsel %vm1193, %v1619, 0
      %v1669 = vsel %vm1193, %v1629, 0
      %v1672 = vsel %vm1193, %v1631, 0
      %v1675 = vsel %vm1193, %v1633, 0
      %v1678 = vsel %vm1193, %v1635, 0
      %v1681 = vsel %vm1193, %v1637, 0
      %v1684 = vsel %vm1193, %v1639, 0
      %v1687 = vsel %vm1193, %v1641, 0
      %v1690 = vsel %vm1193, %v1643, 0
      %1692 = vmatprep.subr.bf16.mxu0 0
      %1693 = vmatpush1.bf16.xpose.msra.mxu0 %v1669
      %1694 = vmatprep.subr.bf16.mxu0 0
      %1695 = vmatpush1.bf16.xpose.msra.mxu0 %v1672
      %1696 = vmatprep.subr.bf16.mxu0 0
      %1697 = vmatpush1.bf16.xpose.msra.mxu0 %v1675
      %1698 = vmatprep.subr.bf16.mxu0 0
      %1699 = vmatpush1.bf16.xpose.msra.mxu0 %v1678
      %1700 = vmatprep.subr.bf16.mxu0 0
      %1701 = vmatpush1.bf16.xpose.msra.mxu0 %v1681
      %1702 = vmatprep.subr.bf16.mxu0 0
      %1703 = vmatpush1.bf16.xpose.msra.mxu0 %v1684
      %1704 = vmatprep.subr.bf16.mxu0 0
      %1705 = vmatpush1.bf16.xpose.msra.mxu0 %v1687
      %1706 = vmatprep.subr.bf16.mxu0 0
      %1707 = vmatpush1.bf16.xpose.msra.mxu0 %v1690
      %1708 = vmatprep.subr.bf16.mxu0 0
      %1709 = vmatpush1.bf16.xpose.msra.mxu0 0
      %1710 = vmatprep.subr.bf16.mxu0 0
      %1711 = vmatpush1.bf16.xpose.msra.mxu0 0
      %1712 = vmatprep.subr.bf16.mxu0 0
      %1713 = vmatpush1.bf16.xpose.msra.mxu0 0
      %1714 = vmatprep.subr.bf16.mxu0 0
      %1715 = vmatpush1.bf16.xpose.msra.mxu0 0
      %1716 = vmatprep.subr.bf16.mxu0 0
      %1717 = vmatpush1.bf16.xpose.msra.mxu0 0
      %1718 = vmatprep.subr.bf16.mxu0 0
      %1719 = vmatpush1.bf16.xpose.msra.mxu0 0
      %1720 = vmatprep.subr.bf16.mxu0 0
      %1721 = vmatpush1.bf16.xpose.msra.mxu0 0
      %1722 = vmatprep.subr.bf16.mxu0 0
      %1723 = vmatpush1.bf16.xpose.msra.mxu0 0
      %1724 = vmatprep.mubr.bf16.mxu0 0
      %1725 = vmatmul.mubr.bf16.gmra.mrb[0].mxu0 %v1645
      %v1726 = vpop.f32.mrb[0].mxu0
      %v1727 = vadd.f32 %v1192, %v1726
      %v1728 = vpop.f32.mrb[0].mxu0
      %v1729 = vpop.f32.mrb[0].mxu0
      %v1730 = vadd.f32 %v1192, %v1729
      %v1731 = vpop.f32.mrb[0].mxu0
      %1732 = vmatprep.mubr.bf16.mxu0 0
      %1733 = vmatmul.mubr.bf16.gmra.mrb[0].mxu0 %v1648
      %v1734 = vpop.f32.mrb[0].mxu0
      %v1735 = vadd.f32 %v1192, %v1734
      %v1736 = vpop.f32.mrb[0].mxu0
      %v1737 = vpop.f32.mrb[0].mxu0
      %v1738 = vadd.f32 %v1192, %v1737
      %v1739 = vpop.f32.mrb[0].mxu0
      %1740 = vmatprep.mubr.bf16.mxu0 0
      %1741 = vmatmul.mubr.bf16.gmra.mrb[0].mxu0 %v1651
      %v1742 = vpop.f32.mrb[0].mxu0
      %v1743 = vadd.f32 %v1192, %v1742
      %v1744 = vpop.f32.mrb[0].mxu0
      %v1745 = vpop.f32.mrb[0].mxu0
      %v1746 = vadd.f32 %v1192, %v1745
      %v1747 = vpop.f32.mrb[0].mxu0
      %1748 = vmatprep.mubr.bf16.mxu0 0
      %1749 = vmatmul.mubr.bf16.gmra.mrb[0].mxu0 %v1654
      %v1750 = vpop.f32.mrb[0].mxu0
      %v1751 = vadd.f32 %v1192, %v1750
      %v1752 = vpop.f32.mrb[0].mxu0
      %v1753 = vpop.f32.mrb[0].mxu0
      %v1754 = vadd.f32 %v1192, %v1753
      %v1755 = vpop.f32.mrb[0].mxu0
      %1756 = vmatprep.mubr.bf16.mxu0 0
      %1757 = vmatmul.mubr.bf16.gmra.mrb[0].mxu0 %v1657
      %v1758 = vpop.f32.mrb[0].mxu0
      %v1759 = vadd.f32 %v1192, %v1758
      %v1760 = vpop.f32.mrb[0].mxu0
      %v1761 = vpop.f32.mrb[0].mxu0
      %v1762 = vadd.f32 %v1192, %v1761
      %v1763 = vpop.f32.mrb[0].mxu0
      %1764 = vmatprep.mubr.bf16.mxu0 0
      %1765 = vmatmul.mubr.bf16.gmra.mrb[0].mxu0 %v1660
      %v1766 = vpop.f32.mrb[0].mxu0
      %v1767 = vadd.f32 %v1192, %v1766
      %v1768 = vpop.f32.mrb[0].mxu0
      %v1769 = vpop.f32.mrb[0].mxu0
      %v1770 = vadd.f32 %v1192, %v1769
      %v1771 = vpop.f32.mrb[0].mxu0
      %1772 = vmatprep.mubr.bf16.mxu0 0
      %1773 = vmatmul.mubr.bf16.gmra.mrb[0].mxu0 %v1663
      %v1774 = vpop.f32.mrb[0].mxu0
      %v1775 = vadd.f32 %v1192, %v1774
      %v1776 = vpop.f32.mrb[0].mxu0
      %v1777 = vpop.f32.mrb[0].mxu0
      %v1778 = vadd.f32 %v1192, %v1777
      %v1779 = vpop.f32.mrb[0].mxu0
      %1780 = vmatprep.mubr.bf16.mxu0 0
      %1781 = vmatmul.mubr.bf16.gmra.mrb[0].mxu0 %v1666
      %v1782 = vpop.f32.mrb[0].mxu0
      %v1783 = vadd.f32 %v1192, %v1782
      %v1784 = vpop.f32.mrb[0].mxu0
      %v1785 = vpop.f32.mrb[0].mxu0
      %v1786 = vadd.f32 %v1192, %v1785
      %v1787 = vpop.f32.mrb[0].mxu0
      %1788 = vdwg.mxu0
      %1789 = vmax.xlane.f32.xlu0 %v1727
      %v1790 = vpop.xlane.xlu0 %1789
      %1791 = vmax.xlane.f32.xlu0 %v1730
      %v1792 = vpop.xlane.xlu0 %1791
      %1793 = vmax.xlane.f32.xlu0 %v1735
      %v1794 = vpop.xlane.xlu0 %1793
      %1795 = vmax.xlane.f32.xlu0 %v1738
      %v1796 = vpop.xlane.xlu0 %1795
      %1797 = vmax.xlane.f32.xlu0 %v1743
      %v1798 = vpop.xlane.xlu0 %1797
      %1799 = vmax.xlane.f32.xlu0 %v1746
      %v1800 = vpop.xlane.xlu0 %1799
      %1801 = vmax.xlane.f32.xlu0 %v1751
      %v1802 = vpop.xlane.xlu0 %1801
      %1803 = vmax.xlane.f32.xlu0 %v1754
      %v1804 = vpop.xlane.xlu0 %1803
      %1805 = vmax.xlane.f32.xlu0 %v1759
      %v1806 = vpop.xlane.xlu0 %1805
      %1807 = vmax.xlane.f32.xlu0 %v1762
      %v1808 = vpop.xlane.xlu0 %1807
      %1809 = vmax.xlane.f32.xlu0 %v1767
      %v1810 = vpop.xlane.xlu0 %1809
      %1811 = vmax.xlane.f32.xlu0 %v1770
      %v1812 = vpop.xlane.xlu0 %1811
      %1813 = vmax.xlane.f32.xlu0 %v1775
      %v1814 = vpop.xlane.xlu0 %1813
      %1815 = vmax.xlane.f32.xlu0 %v1778
      %v1816 = vpop.xlane.xlu0 %1815
      %1817 = vmax.xlane.f32.xlu0 %v1783
      %v1818 = vpop.xlane.xlu0 %1817
      %1819 = vmax.xlane.f32.xlu0 %v1786
      %v1820 = vpop.xlane.xlu0 %1819
      %v1821 = vsub.f32 %v1727, %v1790
      %v1822 = vsub.f32 %v1730, %v1792
      %v1823 = vsub.f32 %v1735, %v1794
      %v1824 = vsub.f32 %v1738, %v1796
      %v1825 = vsub.f32 %v1743, %v1798
      %v1826 = vsub.f32 %v1746, %v1800
      %v1827 = vsub.f32 %v1751, %v1802
      %v1828 = vsub.f32 %v1754, %v1804
      %v1829 = vsub.f32 %v1759, %v1806
      %v1830 = vsub.f32 %v1762, %v1808
      %v1831 = vsub.f32 %v1767, %v1810
      %v1832 = vsub.f32 %v1770, %v1812
      %v1833 = vsub.f32 %v1775, %v1814
      %v1834 = vsub.f32 %v1778, %v1816
      %v1835 = vsub.f32 %v1783, %v1818
      %v1836 = vsub.f32 %v1786, %v1820
      %v1837 = vmul.f32 %v1821, 1.442695
      %v1838 = vpow.pop %v1837
      %v1839 = vmul.f32 %v1822, 1.442695
      %v1840 = vpow.pop %v1839
      %v1841 = vmul.f32 %v1823, 1.442695
      %v1842 = vpow.pop %v1841
      %v1843 = vmul.f32 %v1824, 1.442695
      %v1844 = vpow.pop %v1843
      %v1845 = vmul.f32 %v1825, 1.442695
      %v1846 = vpow.pop %v1845
      %v1847 = vmul.f32 %v1826, 1.442695
      %v1848 = vpow.pop %v1847
      %v1849 = vmul.f32 %v1827, 1.442695
      %v1850 = vpow.pop %v1849
      %v1851 = vmul.f32 %v1828, 1.442695
      %v1852 = vpow.pop %v1851
      %v1853 = vmul.f32 %v1829, 1.442695
      %v1854 = vpow.pop %v1853
      %v1855 = vmul.f32 %v1830, 1.442695
      %v1856 = vpow.pop %v1855
      %v1857 = vmul.f32 %v1831, 1.442695
      %v1858 = vpow.pop %v1857
      %v1859 = vmul.f32 %v1832, 1.442695
      %v1860 = vpow.pop %v1859
      %v1861 = vmul.f32 %v1833, 1.442695
      %v1862 = vpow.pop %v1861
      %v1863 = vmul.f32 %v1834, 1.442695
      %v1864 = vpow.pop %v1863
      %v1865 = vmul.f32 %v1835, 1.442695
      %v1866 = vpow.pop %v1865
      %v1867 = vmul.f32 %v1836, 1.442695
      %v1868 = vpow.pop %v1867
      %1869 = vadd.xlane.f32.xlu0 %v1838
      %v1870 = vpop.xlane.xlu0 %1869
      %1871 = vadd.xlane.f32.xlu0 %v1840
      %v1872 = vpop.xlane.xlu0 %1871
      %1873 = vadd.xlane.f32.xlu0 %v1842
      %v1874 = vpop.xlane.xlu0 %1873
      %1875 = vadd.xlane.f32.xlu0 %v1844
      %v1876 = vpop.xlane.xlu0 %1875
      %1877 = vadd.xlane.f32.xlu0 %v1846
      %v1878 = vpop.xlane.xlu0 %1877
      %1879 = vadd.xlane.f32.xlu0 %v1848
      %v1880 = vpop.xlane.xlu0 %1879
      %1881 = vadd.xlane.f32.xlu0 %v1850
      %v1882 = vpop.xlane.xlu0 %1881
      %1883 = vadd.xlane.f32.xlu0 %v1852
      %v1884 = vpop.xlane.xlu0 %1883
      %1885 = vadd.xlane.f32.xlu0 %v1854
      %v1886 = vpop.xlane.xlu0 %1885
      %1887 = vadd.xlane.f32.xlu0 %v1856
      %v1888 = vpop.xlane.xlu0 %1887
      %1889 = vadd.xlane.f32.xlu0 %v1858
      %v1890 = vpop.xlane.xlu0 %1889
      %1891 = vadd.xlane.f32.xlu0 %v1860
      %v1892 = vpop.xlane.xlu0 %1891
      %1893 = vadd.xlane.f32.xlu0 %v1862
      %v1894 = vpop.xlane.xlu0 %1893
      %1895 = vadd.xlane.f32.xlu0 %v1864
      %v1896 = vpop.xlane.xlu0 %1895
      %1897 = vadd.xlane.f32.xlu0 %v1866
      %v1898 = vpop.xlane.xlu0 %1897
      %1899 = vadd.xlane.f32.xlu0 %v1868
      %v1900 = vpop.xlane.xlu0 %1899
      %v1901 = vrcp.pop %v1870
      %v1902 = vrcp.pop %v1872
      %v1903 = vrcp.pop %v1874
      %v1904 = vrcp.pop %v1876
      %v1905 = vrcp.pop %v1878
      %v1906 = vrcp.pop %v1880
      %v1907 = vrcp.pop %v1882
      %v1908 = vrcp.pop %v1884
      %v1909 = vrcp.pop %v1886
      %v1910 = vrcp.pop %v1888
      %v1911 = vrcp.pop %v1890
      %v1912 = vrcp.pop %v1892
      %v1913 = vrcp.pop %v1894
      %v1914 = vrcp.pop %v1896
      %v1915 = vrcp.pop %v1898
      %v1916 = vrcp.pop %v1900
      %v1917 = vmul.f32 %v1838, %v1901
      %v1918 = vmul.f32 %v1840, %v1902
      %v1919 = vmul.f32 %v1842, %v1903
      %v1920 = vmul.f32 %v1844, %v1904
      %v1921 = vmul.f32 %v1846, %v1905
      %v1922 = vmul.f32 %v1848, %v1906
      %v1923 = vmul.f32 %v1850, %v1907
      %v1924 = vmul.f32 %v1852, %v1908
      %v1925 = vmul.f32 %v1854, %v1909
      %v1926 = vmul.f32 %v1856, %v1910
      %v1927 = vmul.f32 %v1858, %v1911
      %v1928 = vmul.f32 %v1860, %v1912
      %v1929 = vmul.f32 %v1862, %v1913
      %v1930 = vmul.f32 %v1864, %v1914
      %v1931 = vmul.f32 %v1866, %v1915
      %v1932 = vmul.f32 %v1868, %v1916
      %v1933 = vpack.c.bf16 %v1918, %v1917
      %v1934 = vpack.c.bf16 %v1920, %v1919
      %v1935 = vpack.c.bf16 %v1922, %v1921
      %v1936 = vpack.c.bf16 %v1924, %v1923
      %v1937 = vpack.c.bf16 %v1926, %v1925
      %v1938 = vpack.c.bf16 %v1928, %v1927
      %v1939 = vpack.c.bf16 %v1930, %v1929
      %v1940 = vpack.c.bf16 %v1932, %v1931
      %1949 = vrot.lane.b32.xlu0 %v1177, 120
      %v1950 = vpop.permute.xlu0 %1949
      %1951 = vrot.lane.b32.xlu0 %v1178, 120
      %v1952 = vpop.permute.xlu0 %1951
      %1953 = vrot.lane.b32.xlu0 %v1179, 120
      %v1954 = vpop.permute.xlu0 %1953
      %1955 = vrot.lane.b32.xlu0 %v1180, 120
      %v1956 = vpop.permute.xlu0 %1955
      %1957 = vrot.lane.b32.xlu0 %v1181, 120
      %v1958 = vpop.permute.xlu0 %1957
      %1959 = vrot.lane.b32.xlu0 %v1182, 120
      %v1960 = vpop.permute.xlu0 %1959
      %1961 = vrot.lane.b32.xlu0 %v1183, 120
      %v1962 = vpop.permute.xlu0 %1961
      %1963 = vrot.lane.b32.xlu0 %v1184, 120
      %v1964 = vpop.permute.xlu0 %1963
      %1973 = vmatprep.subr.bf16.mxu0 0
      %1974 = vmatpush1.bf16.msra.mxu0 %v1950
      %1975 = vmatprep.subr.bf16.mxu0 0
      %1976 = vmatpush1.bf16.msra.mxu0 %v1952
      %1977 = vmatprep.subr.bf16.mxu0 0
      %1978 = vmatpush1.bf16.msra.mxu0 %v1954
      %1979 = vmatprep.subr.bf16.mxu0 0
      %1980 = vmatpush1.bf16.msra.mxu0 %v1956
      %1981 = vmatprep.subr.bf16.mxu0 0
      %1982 = vmatpush1.bf16.msra.mxu0 %v1958
      %1983 = vmatprep.subr.bf16.mxu0 0
      %1984 = vmatpush1.bf16.msra.mxu0 %v1960
      %1985 = vmatprep.subr.bf16.mxu0 0
      %1986 = vmatpush1.bf16.msra.mxu0 %v1962
      %1987 = vmatprep.subr.bf16.mxu0 0
      %1988 = vmatpush1.bf16.msra.mxu0 %v1964
      %1989 = vmatprep.subr.bf16.mxu0 0
      %1990 = vmatpush1.bf16.msra.mxu0 0
      %1991 = vmatprep.subr.bf16.mxu0 0
      %1992 = vmatpush1.bf16.msra.mxu0 0
      %1993 = vmatprep.subr.bf16.mxu0 0
      %1994 = vmatpush1.bf16.msra.mxu0 0
      %1995 = vmatprep.subr.bf16.mxu0 0
      %1996 = vmatpush1.bf16.msra.mxu0 0
      %1997 = vmatprep.subr.bf16.mxu0 0
      %1998 = vmatpush1.bf16.msra.mxu0 0
      %1999 = vmatprep.subr.bf16.mxu0 0
      %2000 = vmatpush1.bf16.msra.mxu0 0
      %2001 = vmatprep.subr.bf16.mxu0 0
      %2002 = vmatpush1.bf16.msra.mxu0 0
      %2003 = vmatprep.subr.bf16.mxu0 0
      %2004 = vmatpush1.bf16.msra.mxu0 0
      %2005 = vmatprep.mubr.bf16.mxu0 0
      %2006 = vmatmul.mubr.bf16.gmra.mrb[0].mxu0 %v1933
      %v2007 = vpop.f32.mrb[0].mxu0
      %v2008 = vadd.f32 0.0, %v2007
      %v2009 = vpop.f32.mrb[0].mxu0
      %v2010 = vpop.f32.mrb[0].mxu0
      %v2011 = vadd.f32 0.0, %v2010
      %v2012 = vpop.f32.mrb[0].mxu0
      %2013 = vmatprep.mubr.bf16.mxu0 0
      %2014 = vmatmul.mubr.bf16.gmra.mrb[0].mxu0 %v1934
      %v2015 = vpop.f32.mrb[0].mxu0
      %v2016 = vadd.f32 0.0, %v2015
      %v2017 = vpop.f32.mrb[0].mxu0
      %v2018 = vpop.f32.mrb[0].mxu0
      %v2019 = vadd.f32 0.0, %v2018
      %v2020 = vpop.f32.mrb[0].mxu0
      %2021 = vmatprep.mubr.bf16.mxu0 0
      %2022 = vmatmul.mubr.bf16.gmra.mrb[0].mxu0 %v1935
      %v2023 = vpop.f32.mrb[0].mxu0
      %v2024 = vadd.f32 0.0, %v2023
      %v2025 = vpop.f32.mrb[0].mxu0
      %v2026 = vpop.f32.mrb[0].mxu0
      %v2027 = vadd.f32 0.0, %v2026
      %v2028 = vpop.f32.mrb[0].mxu0
      %2029 = vmatprep.mubr.bf16.mxu0 0
      %2030 = vmatmul.mubr.bf16.gmra.mrb[0].mxu0 %v1936
      %v2031 = vpop.f32.mrb[0].mxu0
      %v2032 = vadd.f32 0.0, %v2031
      %v2033 = vpop.f32.mrb[0].mxu0
      %v2034 = vpop.f32.mrb[0].mxu0
      %v2035 = vadd.f32 0.0, %v2034
      %v2036 = vpop.f32.mrb[0].mxu0
      %2037 = vmatprep.mubr.bf16.mxu0 0
      %2038 = vmatmul.mubr.bf16.gmra.mrb[0].mxu0 %v1937
      %v2039 = vpop.f32.mrb[0].mxu0
      %v2040 = vadd.f32 0.0, %v2039
      %v2041 = vpop.f32.mrb[0].mxu0
      %v2042 = vpop.f32.mrb[0].mxu0
      %v2043 = vadd.f32 0.0, %v2042
      %v2044 = vpop.f32.mrb[0].mxu0
      %2045 = vmatprep.mubr.bf16.mxu0 0
      %2046 = vmatmul.mubr.bf16.gmra.mrb[0].mxu0 %v1938
      %v2047 = vpop.f32.mrb[0].mxu0
      %v2048 = vadd.f32 0.0, %v2047
      %v2049 = vpop.f32.mrb[0].mxu0
      %v2050 = vpop.f32.mrb[0].mxu0
      %v2051 = vadd.f32 0.0, %v2050
      %v2052 = vpop.f32.mrb[0].mxu0
      %2053 = vmatprep.mubr.bf16.mxu0 0
      %2054 = vmatmul.mubr.bf16.gmra.mrb[0].mxu0 %v1939
      %v2055 = vpop.f32.mrb[0].mxu0
      %v2056 = vadd.f32 0.0, %v2055
      %v2057 = vpop.f32.mrb[0].mxu0
      %v2058 = vpop.f32.mrb[0].mxu0
      %v2059 = vadd.f32 0.0, %v2058
      %v2060 = vpop.f32.mrb[0].mxu0
      %2061 = vmatprep.mubr.bf16.mxu0 0
      %2062 = vmatmul.mubr.bf16.gmra.mrb[0].mxu0 %v1940
      %v2063 = vpop.f32.mrb[0].mxu0
      %v2064 = vadd.f32 0.0, %v2063
      %v2065 = vpop.f32.mrb[0].mxu0
      %v2066 = vpop.f32.mrb[0].mxu0
      %v2067 = vadd.f32 0.0, %v2066
      %v2068 = vpop.f32.mrb[0].mxu0
      %2069 = vdwg.mxu0
      %v2070 = vpack.c.bf16 %v2011, %v2008
      %v2071 = vpack.c.bf16 %v2019, %v2016
      %v2072 = vpack.c.bf16 %v2027, %v2024
      %v2073 = vpack.c.bf16 %v2035, %v2032
      %v2074 = vpack.c.bf16 %v2043, %v2040
      %v2075 = vpack.c.bf16 %v2051, %v2048
      %v2076 = vpack.c.bf16 %v2059, %v2056
      %v2077 = vpack.c.bf16 %v2067, %v2064
      %v2079 = vsel %vm1193, %v2070, 0
      %v2082 = vsel %vm1193, %v2071, 0
      %v2085 = vsel %vm1193, %v2072, 0
      %v2088 = vsel %vm1193, %v2073, 0
      %v2091 = vsel %vm1193, %v2074, 0
      %v2094 = vsel %vm1193, %v2075, 0
      %v2097 = vsel %vm1193, %v2076, 0
      %v2100 = vsel %vm1193, %v2077, 0
      %vm2102 = vcmask 1043456
      %v2104 = vsel %vm2102, %v1186, 0
      %2106 = vmatprep.subr.bf16.mxu0 0
      %2107 = vmatpush1.bf16.msra.mxu0 %v2104
      %2108 = vmatprep.subr.bf16.mxu0 0
      %2109 = vmatpush1.bf16.msra.mxu0 0
      %2110 = vmatprep.subr.bf16.mxu0 0
      %2111 = vmatpush1.bf16.msra.mxu0 0
      %2112 = vmatprep.subr.bf16.mxu0 0
      %2113 = vmatpush1.bf16.msra.mxu0 0
      %2114 = vmatprep.subr.bf16.mxu0 0
      %2115 = vmatpush1.bf16.msra.mxu0 0
      %2116 = vmatprep.subr.bf16.mxu0 0
      %2117 = vmatpush1.bf16.msra.mxu0 0
      %2118 = vmatprep.subr.bf16.mxu0 0
      %2119 = vmatpush1.bf16.msra.mxu0 0
      %2120 = vmatprep.subr.bf16.mxu0 0
      %2121 = vmatpush1.bf16.msra.mxu0 0
      %2122 = vmatprep.subr.bf16.mxu0 0
      %2123 = vmatpush1.bf16.msra.mxu0 0
      %2124 = vmatprep.subr.bf16.mxu0 0
      %2125 = vmatpush1.bf16.msra.mxu0 0
      %2126 = vmatprep.subr.bf16.mxu0 0
      %2127 = vmatpush1.bf16.msra.mxu0 0
      %2128 = vmatprep.subr.bf16.mxu0 0
      %2129 = vmatpush1.bf16.msra.mxu0 0
      %2130 = vmatprep.subr.bf16.mxu0 0
      %2131 = vmatpush1.bf16.msra.mxu0 0
      %2132 = vmatprep.subr.bf16.mxu0 0
      %2133 = vmatpush1.bf16.msra.mxu0 0
      %2134 = vmatprep.subr.bf16.mxu0 0
      %2135 = vmatpush1.bf16.msra.mxu0 0
      %2136 = vmatprep.subr.bf16.mxu0 0
      %2137 = vmatpush1.bf16.msra.mxu0 0
      %2138 = vmatprep.mubr.bf16.mxu0 0
      %2139 = vmatmul.mubr.bf16.gmra.mrb[0].mxu0 %v2079
      %v2140 = vpop.f32.mrb[0].mxu0
      %v2141 = vadd.f32 0.0, %v2140
      %v2142 = vpop.f32.mrb[0].mxu0
      %v2143 = vpop.f32.mrb[0].mxu0
      %v2144 = vadd.f32 0.0, %v2143
      %v2145 = vpop.f32.mrb[0].mxu0
      %2146 = vmatprep.mubr.bf16.mxu0 0
      %2147 = vmatmul.mubr.bf16.gmra.mrb[0].mxu0 %v2082
      %v2148 = vpop.f32.mrb[0].mxu0
      %v2149 = vadd.f32 0.0, %v2148
      %v2150 = vpop.f32.mrb[0].mxu0
      %v2151 = vpop.f32.mrb[0].mxu0
      %v2152 = vadd.f32 0.0, %v2151
      %v2153 = vpop.f32.mrb[0].mxu0
      %2154 = vmatprep.mubr.bf16.mxu0 0
      %2155 = vmatmul.mubr.bf16.gmra.mrb[0].mxu0 %v2085
      %v2156 = vpop.f32.mrb[0].mxu0
      %v2157 = vadd.f32 0.0, %v2156
      %v2158 = vpop.f32.mrb[0].mxu0
      %v2159 = vpop.f32.mrb[0].mxu0
      %v2160 = vadd.f32 0.0, %v2159
      %v2161 = vpop.f32.mrb[0].mxu0
      %2162 = vmatprep.mubr.bf16.mxu0 0
      %2163 = vmatmul.mubr.bf16.gmra.mrb[0].mxu0 %v2088
      %v2164 = vpop.f32.mrb[0].mxu0
      %v2165 = vadd.f32 0.0, %v2164
      %v2166 = vpop.f32.mrb[0].mxu0
      %v2167 = vpop.f32.mrb[0].mxu0
      %v2168 = vadd.f32 0.0, %v2167
      %v2169 = vpop.f32.mrb[0].mxu0
      %2170 = vmatprep.mubr.bf16.mxu0 0
      %2171 = vmatmul.mubr.bf16.gmra.mrb[0].mxu0 %v2091
      %v2172 = vpop.f32.mrb[0].mxu0
      %v2173 = vadd.f32 0.0, %v2172
      %v2174 = vpop.f32.mrb[0].mxu0
      %v2175 = vpop.f32.mrb[0].mxu0
      %v2176 = vadd.f32 0.0, %v2175
      %v2177 = vpop.f32.mrb[0].mxu0
      %2178 = vmatprep.mubr.bf16.mxu0 0
      %2179 = vmatmul.mubr.bf16.gmra.mrb[0].mxu0 %v2094
      %v2180 = vpop.f32.mrb[0].mxu0
      %v2181 = vadd.f32 0.0, %v2180
      %v2182 = vpop.f32.mrb[0].mxu0
      %v2183 = vpop.f32.mrb[0].mxu0
      %v2184 = vadd.f32 0.0, %v2183
      %v2185 = vpop.f32.mrb[0].mxu0
      %2186 = vmatprep.mubr.bf16.mxu0 0
      %2187 = vmatmul.mubr.bf16.gmra.mrb[0].mxu0 %v2097
      %v2188 = vpop.f32.mrb[0].mxu0
      %v2189 = vadd.f32 0.0, %v2188
      %v2190 = vpop.f32.mrb[0].mxu0
      %v2191 = vpop.f32.mrb[0].mxu0
      %v2192 = vadd.f32 0.0, %v2191
      %v2193 = vpop.f32.mrb[0].mxu0
      %2194 = vmatprep.mubr.bf16.mxu0 0
      %2195 = vmatmul.mubr.bf16.gmra.mrb[0].mxu0 %v2100
      %v2196 = vpop.f32.mrb[0].mxu0
      %v2197 = vadd.f32 0.0, %v2196
      %v2198 = vpop.f32.mrb[0].mxu0
      %v2199 = vpop.f32.mrb[0].mxu0
      %v2200 = vadd.f32 0.0, %v2199
      %v2201 = vpop.f32.mrb[0].mxu0
      %2202 = vdwg.mxu0
      %v2204 = vsel %vm1193, %v1588, 0
      %v2207 = vsel %vm1193, %v1589, 0
      %v2210 = vsel %vm1193, %v1590, 0
      %v2213 = vsel %vm1193, %v1591, 0
      %v2216 = vsel %vm1193, %v1592, 0
      %v2219 = vsel %vm1193, %v1593, 0
      %v2222 = vsel %vm1193, %v1594, 0
      %v2225 = vsel %vm1193, %v1595, 0
      %v2228 = vsel %vm2102, %v1185, 0
      %2230 = vmatprep.subr.bf16.mxu0 0
      %2231 = vmatpush1.bf16.msra.mxu0 %v2228
      %2232 = vmatprep.subr.bf16.mxu0 0
      %2233 = vmatpush1.bf16.msra.mxu0 0
      %2234 = vmatprep.subr.bf16.mxu0 0
      %2235 = vmatpush1.bf16.msra.mxu0 0
      %2236 = vmatprep.subr.bf16.mxu0 0
      %2237 = vmatpush1.bf16.msra.mxu0 0
      %2238 = vmatprep.subr.bf16.mxu0 0
      %2239 = vmatpush1.bf16.msra.mxu0 0
      %2240 = vmatprep.subr.bf16.mxu0 0
      %2241 = vmatpush1.bf16.msra.mxu0 0
      %2242 = vmatprep.subr.bf16.mxu0 0
      %2243 = vmatpush1.bf16.msra.mxu0 0
      %2244 = vmatprep.subr.bf16.mxu0 0
      %2245 = vmatpush1.bf16.msra.mxu0 0
      %2246 = vmatprep.subr.bf16.mxu0 0
      %2247 = vmatpush1.bf16.msra.mxu0 0
      %2248 = vmatprep.subr.bf16.mxu0 0
      %2249 = vmatpush1.bf16.msra.mxu0 0
      %2250 = vmatprep.subr.bf16.mxu0 0
      %2251 = vmatpush1.bf16.msra.mxu0 0
      %2252 = vmatprep.subr.bf16.mxu0 0
      %2253 = vmatpush1.bf16.msra.mxu0 0
      %2254 = vmatprep.subr.bf16.mxu0 0
      %2255 = vmatpush1.bf16.msra.mxu0 0
      %2256 = vmatprep.subr.bf16.mxu0 0
      %2257 = vmatpush1.bf16.msra.mxu0 0
      %2258 = vmatprep.subr.bf16.mxu0 0
      %2259 = vmatpush1.bf16.msra.mxu0 0
      %2260 = vmatprep.subr.bf16.mxu0 0
      %2261 = vmatpush1.bf16.msra.mxu0 0
      %2262 = vmatprep.mubr.bf16.mxu0 0
      %2263 = vmatmul.mubr.bf16.gmra.mrb[0].mxu0 %v2204
      %v2264 = vpop.f32.mrb[0].mxu0
      %v2265 = vadd.f32 %v2141, %v2264
      %v2266 = vpop.f32.mrb[0].mxu0
      %v2267 = vpop.f32.mrb[0].mxu0
      %v2268 = vadd.f32 %v2144, %v2267
      %v2269 = vpop.f32.mrb[0].mxu0
      %2270 = vmatprep.mubr.bf16.mxu0 0
      %2271 = vmatmul.mubr.bf16.gmra.mrb[0].mxu0 %v2207
      %v2272 = vpop.f32.mrb[0].mxu0
      %v2273 = vadd.f32 %v2149, %v2272
      %v2274 = vpop.f32.mrb[0].mxu0
      %v2275 = vpop.f32.mrb[0].mxu0
      %v2276 = vadd.f32 %v2152, %v2275
      %v2277 = vpop.f32.mrb[0].mxu0
      %2278 = vmatprep.mubr.bf16.mxu0 0
      %2279 = vmatmul.mubr.bf16.gmra.mrb[0].mxu0 %v2210
      %v2280 = vpop.f32.mrb[0].mxu0
      %v2281 = vadd.f32 %v2157, %v2280
      %v2282 = vpop.f32.mrb[0].mxu0
      %v2283 = vpop.f32.mrb[0].mxu0
      %v2284 = vadd.f32 %v2160, %v2283
      %v2285 = vpop.f32.mrb[0].mxu0
      %2286 = vmatprep.mubr.bf16.mxu0 0
      %2287 = vmatmul.mubr.bf16.gmra.mrb[0].mxu0 %v2213
      %v2288 = vpop.f32.mrb[0].mxu0
      %v2289 = vadd.f32 %v2165, %v2288
      %v2290 = vpop.f32.mrb[0].mxu0
      %v2291 = vpop.f32.mrb[0].mxu0
      %v2292 = vadd.f32 %v2168, %v2291
      %v2293 = vpop.f32.mrb[0].mxu0
      %2294 = vmatprep.mubr.bf16.mxu0 0
      %2295 = vmatmul.mubr.bf16.gmra.mrb[0].mxu0 %v2216
      %v2296 = vpop.f32.mrb[0].mxu0
      %v2297 = vadd.f32 %v2173, %v2296
      %v2298 = vpop.f32.mrb[0].mxu0
      %v2299 = vpop.f32.mrb[0].mxu0
      %v2300 = vadd.f32 %v2176, %v2299
      %v2301 = vpop.f32.mrb[0].mxu0
      %2302 = vmatprep.mubr.bf16.mxu0 0
      %2303 = vmatmul.mubr.bf16.gmra.mrb[0].mxu0 %v2219
      %v2304 = vpop.f32.mrb[0].mxu0
      %v2305 = vadd.f32 %v2181, %v2304
      %v2306 = vpop.f32.mrb[0].mxu0
      %v2307 = vpop.f32.mrb[0].mxu0
      %v2308 = vadd.f32 %v2184, %v2307
      %v2309 = vpop.f32.mrb[0].mxu0
      %2310 = vmatprep.mubr.bf16.mxu0 0
      %2311 = vmatmul.mubr.bf16.gmra.mrb[0].mxu0 %v2222
      %v2312 = vpop.f32.mrb[0].mxu0
      %v2313 = vadd.f32 %v2189, %v2312
      %v2314 = vpop.f32.mrb[0].mxu0
      %v2315 = vpop.f32.mrb[0].mxu0
      %v2316 = vadd.f32 %v2192, %v2315
      %v2317 = vpop.f32.mrb[0].mxu0
      %2318 = vmatprep.mubr.bf16.mxu0 0
      %2319 = vmatmul.mubr.bf16.gmra.mrb[0].mxu0 %v2225
      %v2320 = vpop.f32.mrb[0].mxu0
      %v2321 = vadd.f32 %v2197, %v2320
      %v2322 = vpop.f32.mrb[0].mxu0
      %v2323 = vpop.f32.mrb[0].mxu0
      %v2324 = vadd.f32 %v2200, %v2323
      %v2325 = vpop.f32.mrb[0].mxu0
      %2326 = vdwg.mxu0
      %2327 = vrot.lane.b32.xlu0 %v1161, 112
      %v2328 = vpop.permute.xlu0 %2327
      %2329 = vrot.lane.b32.xlu0 %v1162, 112
      %v2330 = vpop.permute.xlu0 %2329
      %2331 = vrot.lane.b32.xlu0 %v1163, 112
      %v2332 = vpop.permute.xlu0 %2331
      %2333 = vrot.lane.b32.xlu0 %v1164, 112
      %v2334 = vpop.permute.xlu0 %2333
      %2335 = vrot.lane.b32.xlu0 %v1165, 112
      %v2336 = vpop.permute.xlu0 %2335
      %2337 = vrot.lane.b32.xlu0 %v1166, 112
      %v2338 = vpop.permute.xlu0 %2337
      %2339 = vrot.lane.b32.xlu0 %v1167, 112
      %v2340 = vpop.permute.xlu0 %2339
      %2341 = vrot.lane.b32.xlu0 %v1168, 112
      %v2342 = vpop.permute.xlu0 %2341
      %2343 = vrot.lane.b32.xlu0 %v1169, 112
      %v2344 = vpop.permute.xlu0 %2343
      %2345 = vrot.lane.b32.xlu0 %v1170, 112
      %v2346 = vpop.permute.xlu0 %2345
      %2347 = vrot.lane.b32.xlu0 %v1171, 112
      %v2348 = vpop.permute.xlu0 %2347
      %2349 = vrot.lane.b32.xlu0 %v1172, 112
      %v2350 = vpop.permute.xlu0 %2349
      %2351 = vrot.lane.b32.xlu0 %v1173, 112
      %v2352 = vpop.permute.xlu0 %2351
      %2353 = vrot.lane.b32.xlu0 %v1174, 112
      %v2354 = vpop.permute.xlu0 %2353
      %2355 = vrot.lane.b32.xlu0 %v1175, 112
      %v2356 = vpop.permute.xlu0 %2355
      %2357 = vrot.lane.b32.xlu0 %v1176, 112
      %v2358 = vpop.permute.xlu0 %2357
      %v2360 = vsel %vm1193, %v2328, 0
      %v2363 = vsel %vm1193, %v2330, 0
      %v2366 = vsel %vm1193, %v2332, 0
      %v2369 = vsel %vm1193, %v2334, 0
      %v2372 = vsel %vm1193, %v2336, 0
      %v2375 = vsel %vm1193, %v2338, 0
      %v2378 = vsel %vm1193, %v2340, 0
      %v2381 = vsel %vm1193, %v2342, 0
      %v2384 = vsel %vm1193, %v2344, 0
      %v2387 = vsel %vm1193, %v2346, 0
      %v2390 = vsel %vm1193, %v2348, 0
      %v2393 = vsel %vm1193, %v2350, 0
      %v2396 = vsel %vm1193, %v2352, 0
      %v2399 = vsel %vm1193, %v2354, 0
      %v2402 = vsel %vm1193, %v2356, 0
      %v2405 = vsel %vm1193, %v2358, 0
      %2407 = vmatprep.subr.bf16.mxu0 0
      %2408 = vmatpush1.bf16.xpose.msra.mxu0 %v2384
      %2409 = vmatprep.subr.bf16.mxu0 0
      %2410 = vmatpush1.bf16.xpose.msra.mxu0 %v2387
      %2411 = vmatprep.subr.bf16.mxu0 0
      %2412 = vmatpush1.bf16.xpose.msra.mxu0 %v2390
      %2413 = vmatprep.subr.bf16.mxu0 0
      %2414 = vmatpush1.bf16.xpose.msra.mxu0 %v2393
      %2415 = vmatprep.subr.bf16.mxu0 0
      %2416 = vmatpush1.bf16.xpose.msra.mxu0 %v2396
      %2417 = vmatprep.subr.bf16.mxu0 0
      %2418 = vmatpush1.bf16.xpose.msra.mxu0 %v2399
      %2419 = vmatprep.subr.bf16.mxu0 0
      %2420 = vmatpush1.bf16.xpose.msra.mxu0 %v2402
      %2421 = vmatprep.subr.bf16.mxu0 0
      %2422 = vmatpush1.bf16.xpose.msra.mxu0 %v2405
      %2423 = vmatprep.subr.bf16.mxu0 0
      %2424 = vmatpush1.bf16.xpose.msra.mxu0 0
      %2425 = vmatprep.subr.bf16.mxu0 0
      %2426 = vmatpush1.bf16.xpose.msra.mxu0 0
      %2427 = vmatprep.subr.bf16.mxu0 0
      %2428 = vmatpush1.bf16.xpose.msra.mxu0 0
      %2429 = vmatprep.subr.bf16.mxu0 0
      %2430 = vmatpush1.bf16.xpose.msra.mxu0 0
      %2431 = vmatprep.subr.bf16.mxu0 0
      %2432 = vmatpush1.bf16.xpose.msra.mxu0 0
      %2433 = vmatprep.subr.bf16.mxu0 0
      %2434 = vmatpush1.bf16.xpose.msra.mxu0 0
      %2435 = vmatprep.subr.bf16.mxu0 0
      %2436 = vmatpush1.bf16.xpose.msra.mxu0 0
      %2437 = vmatprep.subr.bf16.mxu0 0
      %2438 = vmatpush1.bf16.xpose.msra.mxu0 0
      %2439 = vmatprep.mubr.bf16.mxu0 0
      %2440 = vmatmul.mubr.bf16.gmra.mrb[0].mxu0 %v2360
      %v2441 = vpop.f32.mrb[0].mxu0
      %v2442 = vadd.f32 %v1192, %v2441
      %v2443 = vpop.f32.mrb[0].mxu0
      %v2444 = vpop.f32.mrb[0].mxu0
      %v2445 = vadd.f32 %v1192, %v2444
      %v2446 = vpop.f32.mrb[0].mxu0
      %2447 = vmatprep.mubr.bf16.mxu0 0
      %2448 = vmatmul.mubr.bf16.gmra.mrb[0].mxu0 %v2363
      %v2449 = vpop.f32.mrb[0].mxu0
      %v2450 = vadd.f32 %v1192, %v2449
      %v2451 = vpop.f32.mrb[0].mxu0
      %v2452 = vpop.f32.mrb[0].mxu0
      %v2453 = vadd.f32 %v1192, %v2452
      %v2454 = vpop.f32.mrb[0].mxu0
      %2455 = vmatprep.mubr.bf16.mxu0 0
      %2456 = vmatmul.mubr.bf16.gmra.mrb[0].mxu0 %v2366
      %v2457 = vpop.f32.mrb[0].mxu0
      %v2458 = vadd.f32 %v1192, %v2457
      %v2459 = vpop.f32.mrb[0].mxu0
      %v2460 = vpop.f32.mrb[0].mxu0
      %v2461 = vadd.f32 %v1192, %v2460
      %v2462 = vpop.f32.mrb[0].mxu0
      %2463 = vmatprep.mubr.bf16.mxu0 0
      %2464 = vmatmul.mubr.bf16.gmra.mrb[0].mxu0 %v2369
      %v2465 = vpop.f32.mrb[0].mxu0
      %v2466 = vadd.f32 %v1192, %v2465
      %v2467 = vpop.f32.mrb[0].mxu0
      %v2468 = vpop.f32.mrb[0].mxu0
      %v2469 = vadd.f32 %v1192, %v2468
      %v2470 = vpop.f32.mrb[0].mxu0
      %2471 = vmatprep.mubr.bf16.mxu0 0
      %2472 = vmatmul.mubr.bf16.gmra.mrb[0].mxu0 %v2372
      %v2473 = vpop.f32.mrb[0].mxu0
      %v2474 = vadd.f32 %v1192, %v2473
      %v2475 = vpop.f32.mrb[0].mxu0
      %v2476 = vpop.f32.mrb[0].mxu0
      %v2477 = vadd.f32 %v1192, %v2476
      %v2478 = vpop.f32.mrb[0].mxu0
      %2479 = vmatprep.mubr.bf16.mxu0 0
      %2480 = vmatmul.mubr.bf16.gmra.mrb[0].mxu0 %v2375
      %v2481 = vpop.f32.mrb[0].mxu0
      %v2482 = vadd.f32 %v1192, %v2481
      %v2483 = vpop.f32.mrb[0].mxu0
      %v2484 = vpop.f32.mrb[0].mxu0
      %v2485 = vadd.f32 %v1192, %v2484
      %v2486 = vpop.f32.mrb[0].mxu0
      %2487 = vmatprep.mubr.bf16.mxu0 0
      %2488 = vmatmul.mubr.bf16.gmra.mrb[0].mxu0 %v2378
      %v2489 = vpop.f32.mrb[0].mxu0
      %v2490 = vadd.f32 %v1192, %v2489
      %v2491 = vpop.f32.mrb[0].mxu0
      %v2492 = vpop.f32.mrb[0].mxu0
      %v2493 = vadd.f32 %v1192, %v2492
      %v2494 = vpop.f32.mrb[0].mxu0
      %2495 = vmatprep.mubr.bf16.mxu0 0
      %2496 = vmatmul.mubr.bf16.gmra.mrb[0].mxu0 %v2381
      %v2497 = vpop.f32.mrb[0].mxu0
      %v2498 = vadd.f32 %v1192, %v2497
      %v2499 = vpop.f32.mrb[0].mxu0
      %v2500 = vpop.f32.mrb[0].mxu0
      %v2501 = vadd.f32 %v1192, %v2500
      %v2502 = vpop.f32.mrb[0].mxu0
      %2503 = vdwg.mxu0
      %2504 = vmax.xlane.f32.xlu0 %v2442
      %v2505 = vpop.xlane.xlu0 %2504
      %2506 = vmax.xlane.f32.xlu0 %v2445
      %v2507 = vpop.xlane.xlu0 %2506
      %2508 = vmax.xlane.f32.xlu0 %v2450
      %v2509 = vpop.xlane.xlu0 %2508
      %2510 = vmax.xlane.f32.xlu0 %v2453
      %v2511 = vpop.xlane.xlu0 %2510
      %2512 = vmax.xlane.f32.xlu0 %v2458
      %v2513 = vpop.xlane.xlu0 %2512
      %2514 = vmax.xlane.f32.xlu0 %v2461
      %v2515 = vpop.xlane.xlu0 %2514
      %2516 = vmax.xlane.f32.xlu0 %v2466
      %v2517 = vpop.xlane.xlu0 %2516
      %2518 = vmax.xlane.f32.xlu0 %v2469
      %v2519 = vpop.xlane.xlu0 %2518
      %2520 = vmax.xlane.f32.xlu0 %v2474
      %v2521 = vpop.xlane.xlu0 %2520
      %2522 = vmax.xlane.f32.xlu0 %v2477
      %v2523 = vpop.xlane.xlu0 %2522
      %2524 = vmax.xlane.f32.xlu0 %v2482
      %v2525 = vpop.xlane.xlu0 %2524
      %2526 = vmax.xlane.f32.xlu0 %v2485
      %v2527 = vpop.xlane.xlu0 %2526
      %2528 = vmax.xlane.f32.xlu0 %v2490
      %v2529 = vpop.xlane.xlu0 %2528
      %2530 = vmax.xlane.f32.xlu0 %v2493
      %v2531 = vpop.xlane.xlu0 %2530
      %2532 = vmax.xlane.f32.xlu0 %v2498
      %v2533 = vpop.xlane.xlu0 %2532
      %2534 = vmax.xlane.f32.xlu0 %v2501
      %v2535 = vpop.xlane.xlu0 %2534
      %v2536 = vsub.f32 %v2442, %v2505
      %v2537 = vsub.f32 %v2445, %v2507
      %v2538 = vsub.f32 %v2450, %v2509
      %v2539 = vsub.f32 %v2453, %v2511
      %v2540 = vsub.f32 %v2458, %v2513
      %v2541 = vsub.f32 %v2461, %v2515
      %v2542 = vsub.f32 %v2466, %v2517
      %v2543 = vsub.f32 %v2469, %v2519
      %v2544 = vsub.f32 %v2474, %v2521
      %v2545 = vsub.f32 %v2477, %v2523
      %v2546 = vsub.f32 %v2482, %v2525
      %v2547 = vsub.f32 %v2485, %v2527
      %v2548 = vsub.f32 %v2490, %v2529
      %v2549 = vsub.f32 %v2493, %v2531
      %v2550 = vsub.f32 %v2498, %v2533
      %v2551 = vsub.f32 %v2501, %v2535
      %v2552 = vmul.f32 %v2536, 1.442695
      %v2553 = vpow.pop %v2552
      %v2554 = vmul.f32 %v2537, 1.442695
      %v2555 = vpow.pop %v2554
      %v2556 = vmul.f32 %v2538, 1.442695
      %v2557 = vpow.pop %v2556
      %v2558 = vmul.f32 %v2539, 1.442695
      %v2559 = vpow.pop %v2558
      %v2560 = vmul.f32 %v2540, 1.442695
      %v2561 = vpow.pop %v2560
      %v2562 = vmul.f32 %v2541, 1.442695
      %v2563 = vpow.pop %v2562
      %v2564 = vmul.f32 %v2542, 1.442695
      %v2565 = vpow.pop %v2564
      %v2566 = vmul.f32 %v2543, 1.442695
      %v2567 = vpow.pop %v2566
      %v2568 = vmul.f32 %v2544, 1.442695
      %v2569 = vpow.pop %v2568
      %v2570 = vmul.f32 %v2545, 1.442695
      %v2571 = vpow.pop %v2570
      %v2572 = vmul.f32 %v2546, 1.442695
      %v2573 = vpow.pop %v2572
      %v2574 = vmul.f32 %v2547, 1.442695
      %v2575 = vpow.pop %v2574
      %v2576 = vmul.f32 %v2548, 1.442695
      %v2577 = vpow.pop %v2576
      %v2578 = vmul.f32 %v2549, 1.442695
      %v2579 = vpow.pop %v2578
      %v2580 = vmul.f32 %v2550, 1.442695
      %v2581 = vpow.pop %v2580
      %v2582 = vmul.f32 %v2551, 1.442695
      %v2583 = vpow.pop %v2582
      %2584 = vadd.xlane.f32.xlu0 %v2553
      %v2585 = vpop.xlane.xlu0 %2584
      %2586 = vadd.xlane.f32.xlu0 %v2555
      %v2587 = vpop.xlane.xlu0 %2586
      %2588 = vadd.xlane.f32.xlu0 %v2557
      %v2589 = vpop.xlane.xlu0 %2588
      %2590 = vadd.xlane.f32.xlu0 %v2559
      %v2591 = vpop.xlane.xlu0 %2590
      %2592 = vadd.xlane.f32.xlu0 %v2561
      %v2593 = vpop.xlane.xlu0 %2592
      %2594 = vadd.xlane.f32.xlu0 %v2563
      %v2595 = vpop.xlane.xlu0 %2594
      %2596 = vadd.xlane.f32.xlu0 %v2565
      %v2597 = vpop.xlane.xlu0 %2596
      %2598 = vadd.xlane.f32.xlu0 %v2567
      %v2599 = vpop.xlane.xlu0 %2598
      %2600 = vadd.xlane.f32.xlu0 %v2569
      %v2601 = vpop.xlane.xlu0 %2600
      %2602 = vadd.xlane.f32.xlu0 %v2571
      %v2603 = vpop.xlane.xlu0 %2602
      %2604 = vadd.xlane.f32.xlu0 %v2573
      %v2605 = vpop.xlane.xlu0 %2604
      %2606 = vadd.xlane.f32.xlu0 %v2575
      %v2607 = vpop.xlane.xlu0 %2606
      %2608 = vadd.xlane.f32.xlu0 %v2577
      %v2609 = vpop.xlane.xlu0 %2608
      %2610 = vadd.xlane.f32.xlu0 %v2579
      %v2611 = vpop.xlane.xlu0 %2610
      %2612 = vadd.xlane.f32.xlu0 %v2581
      %v2613 = vpop.xlane.xlu0 %2612
      %2614 = vadd.xlane.f32.xlu0 %v2583
      %v2615 = vpop.xlane.xlu0 %2614
      %v2616 = vrcp.pop %v2585
      %v2617 = vrcp.pop %v2587
      %v2618 = vrcp.pop %v2589
      %v2619 = vrcp.pop %v2591
      %v2620 = vrcp.pop %v2593
      %v2621 = vrcp.pop %v2595
      %v2622 = vrcp.pop %v2597
      %v2623 = vrcp.pop %v2599
      %v2624 = vrcp.pop %v2601
      %v2625 = vrcp.pop %v2603
      %v2626 = vrcp.pop %v2605
      %v2627 = vrcp.pop %v2607
      %v2628 = vrcp.pop %v2609
      %v2629 = vrcp.pop %v2611
      %v2630 = vrcp.pop %v2613
      %v2631 = vrcp.pop %v2615
      %v2632 = vmul.f32 %v2553, %v2616
      %v2633 = vmul.f32 %v2555, %v2617
      %v2634 = vmul.f32 %v2557, %v2618
      %v2635 = vmul.f32 %v2559, %v2619
      %v2636 = vmul.f32 %v2561, %v2620
      %v2637 = vmul.f32 %v2563, %v2621
      %v2638 = vmul.f32 %v2565, %v2622
      %v2639 = vmul.f32 %v2567, %v2623
      %v2640 = vmul.f32 %v2569, %v2624
      %v2641 = vmul.f32 %v2571, %v2625
      %v2642 = vmul.f32 %v2573, %v2626
      %v2643 = vmul.f32 %v2575, %v2627
      %v2644 = vmul.f32 %v2577, %v2628
      %v2645 = vmul.f32 %v2579, %v2629
      %v2646 = vmul.f32 %v2581, %v2630
      %v2647 = vmul.f32 %v2583, %v2631
      %v2648 = vpack.c.bf16 %v2633, %v2632
      %v2649 = vpack.c.bf16 %v2635, %v2634
      %v2650 = vpack.c.bf16 %v2637, %v2636
      %v2651 = vpack.c.bf16 %v2639, %v2638
      %v2652 = vpack.c.bf16 %v2641, %v2640
      %v2653 = vpack.c.bf16 %v2643, %v2642
      %v2654 = vpack.c.bf16 %v2645, %v2644
      %v2655 = vpack.c.bf16 %v2647, %v2646
      %2656 = vrot.lane.b32.xlu0 %v1177, 112
      %v2657 = vpop.permute.xlu0 %2656
      %2658 = vrot.lane.b32.xlu0 %v1178, 112
      %v2659 = vpop.permute.xlu0 %2658
      %2660 = vrot.lane.b32.xlu0 %v1179, 112
      %v2661 = vpop.permute.xlu0 %2660
      %2662 = vrot.lane.b32.xlu0 %v1180, 112
      %v2663 = vpop.permute.xlu0 %2662
      %2664 = vrot.lane.b32.xlu0 %v1181, 112
      %v2665 = vpop.permute.xlu0 %2664
      %2666 = vrot.lane.b32.xlu0 %v1182, 112
      %v2667 = vpop.permute.xlu0 %2666
      %2668 = vrot.lane.b32.xlu0 %v1183, 112
      %v2669 = vpop.permute.xlu0 %2668
      %2670 = vrot.lane.b32.xlu0 %v1184, 112
      %v2671 = vpop.permute.xlu0 %2670
      %2680 = vmatprep.subr.bf16.mxu0 0
      %2681 = vmatpush1.bf16.msra.mxu0 %v2657
      %2682 = vmatprep.subr.bf16.mxu0 0
      %2683 = vmatpush1.bf16.msra.mxu0 %v2659
      %2684 = vmatprep.subr.bf16.mxu0 0
      %2685 = vmatpush1.bf16.msra.mxu0 %v2661
      %2686 = vmatprep.subr.bf16.mxu0 0
      %2687 = vmatpush1.bf16.msra.mxu0 %v2663
      %2688 = vmatprep.subr.bf16.mxu0 0
      %2689 = vmatpush1.bf16.msra.mxu0 %v2665
      %2690 = vmatprep.subr.bf16.mxu0 0
      %2691 = vmatpush1.bf16.msra.mxu0 %v2667
      %2692 = vmatprep.subr.bf16.mxu0 0
      %2693 = vmatpush1.bf16.msra.mxu0 %v2669
      %2694 = vmatprep.subr.bf16.mxu0 0
      %2695 = vmatpush1.bf16.msra.mxu0 %v2671
      %2696 = vmatprep.subr.bf16.mxu0 0
      %2697 = vmatpush1.bf16.msra.mxu0 0
      %2698 = vmatprep.subr.bf16.mxu0 0
      %2699 = vmatpush1.bf16.msra.mxu0 0
      %2700 = vmatprep.subr.bf16.mxu0 0
      %2701 = vmatpush1.bf16.msra.mxu0 0
      %2702 = vmatprep.subr.bf16.mxu0 0
      %2703 = vmatpush1.bf16.msra.mxu0 0
      %2704 = vmatprep.subr.bf16.mxu0 0
      %2705 = vmatpush1.bf16.msra.mxu0 0
      %2706 = vmatprep.subr.bf16.mxu0 0
      %2707 = vmatpush1.bf16.msra.mxu0 0
      %2708 = vmatprep.subr.bf16.mxu0 0
      %2709 = vmatpush1.bf16.msra.mxu0 0
      %2710 = vmatprep.subr.bf16.mxu0 0
      %2711 = vmatpush1.bf16.msra.mxu0 0
      %2712 = vmatprep.mubr.bf16.mxu0 0
      %2713 = vmatmul.mubr.bf16.gmra.mrb[0].mxu0 %v2648
      %v2714 = vpop.f32.mrb[0].mxu0
      %v2715 = vadd.f32 0.0, %v2714
      %v2716 = vpop.f32.mrb[0].mxu0
      %v2717 = vpop.f32.mrb[0].mxu0
      %v2718 = vadd.f32 0.0, %v2717
      %v2719 = vpop.f32.mrb[0].mxu0
      %2720 = vmatprep.mubr.bf16.mxu0 0
      %2721 = vmatmul.mubr.bf16.gmra.mrb[0].mxu0 %v2649
      %v2722 = vpop.f32.mrb[0].mxu0
      %v2723 = vadd.f32 0.0, %v2722
      %v2724 = vpop.f32.mrb[0].mxu0
      %v2725 = vpop.f32.mrb[0].mxu0
      %v2726 = vadd.f32 0.0, %v2725
      %v2727 = vpop.f32.mrb[0].mxu0
      %2728 = vmatprep.mubr.bf16.mxu0 0
      %2729 = vmatmul.mubr.bf16.gmra.mrb[0].mxu0 %v2650
      %v2730 = vpop.f32.mrb[0].mxu0
      %v2731 = vadd.f32 0.0, %v2730
      %v2732 = vpop.f32.mrb[0].mxu0
      %v2733 = vpop.f32.mrb[0].mxu0
      %v2734 = vadd.f32 0.0, %v2733
      %v2735 = vpop.f32.mrb[0].mxu0
      %2736 = vmatprep.mubr.bf16.mxu0 0
      %2737 = vmatmul.mubr.bf16.gmra.mrb[0].mxu0 %v2651
      %v2738 = vpop.f32.mrb[0].mxu0
      %v2739 = vadd.f32 0.0, %v2738
      %v2740 = vpop.f32.mrb[0].mxu0
      %v2741 = vpop.f32.mrb[0].mxu0
      %v2742 = vadd.f32 0.0, %v2741
      %v2743 = vpop.f32.mrb[0].mxu0
      %2744 = vmatprep.mubr.bf16.mxu0 0
      %2745 = vmatmul.mubr.bf16.gmra.mrb[0].mxu0 %v2652
      %v2746 = vpop.f32.mrb[0].mxu0
      %v2747 = vadd.f32 0.0, %v2746
      %v2748 = vpop.f32.mrb[0].mxu0
      %v2749 = vpop.f32.mrb[0].mxu0
      %v2750 = vadd.f32 0.0, %v2749
      %v2751 = vpop.f32.mrb[0].mxu0
      %2752 = vmatprep.mubr.bf16.mxu0 0
      %2753 = vmatmul.mubr.bf16.gmra.mrb[0].mxu0 %v2653
      %v2754 = vpop.f32.mrb[0].mxu0
      %v2755 = vadd.f32 0.0, %v2754
      %v2756 = vpop.f32.mrb[0].mxu0
      %v2757 = vpop.f32.mrb[0].mxu0
      %v2758 = vadd.f32 0.0, %v2757
      %v2759 = vpop.f32.mrb[0].mxu0
      %2760 = vmatprep.mubr.bf16.mxu0 0
      %2761 = vmatmul.mubr.bf16.gmra.mrb[0].mxu0 %v2654
      %v2762 = vpop.f32.mrb[0].mxu0
      %v2763 = vadd.f32 0.0, %v2762
      %v2764 = vpop.f32.mrb[0].mxu0
      %v2765 = vpop.f32.mrb[0].mxu0
      %v2766 = vadd.f32 0.0, %v2765
      %v2767 = vpop.f32.mrb[0].mxu0
      %2768 = vmatprep.mubr.bf16.mxu0 0
      %2769 = vmatmul.mubr.bf16.gmra.mrb[0].mxu0 %v2655
      %v2770 = vpop.f32.mrb[0].mxu0
      %v2771 = vadd.f32 0.0, %v2770
      %v2772 = vpop.f32.mrb[0].mxu0
      %v2773 = vpop.f32.mrb[0].mxu0
      %v2774 = vadd.f32 0.0, %v2773
      %v2775 = vpop.f32.mrb[0].mxu0
      %2776 = vdwg.mxu0
      %v2777 = vpack.c.bf16 %v2718, %v2715
      %v2778 = vpack.c.bf16 %v2726, %v2723
      %v2779 = vpack.c.bf16 %v2734, %v2731
      %v2780 = vpack.c.bf16 %v2742, %v2739
      %v2781 = vpack.c.bf16 %v2750, %v2747
      %v2782 = vpack.c.bf16 %v2758, %v2755
      %v2783 = vpack.c.bf16 %v2766, %v2763
      %v2784 = vpack.c.bf16 %v2774, %v2771
      %v2786 = vsel %vm1193, %v2777, 0
      %v2789 = vsel %vm1193, %v2778, 0
      %v2792 = vsel %vm1193, %v2779, 0
      %v2795 = vsel %vm1193, %v2780, 0
      %v2798 = vsel %vm1193, %v2781, 0
      %v2801 = vsel %vm1193, %v2782, 0
      %v2804 = vsel %vm1193, %v2783, 0
      %v2807 = vsel %vm1193, %v2784, 0
      %v2810 = vsel %vm2102, %v1187, 0
      %2812 = vmatprep.subr.bf16.mxu0 0
      %2813 = vmatpush1.bf16.msra.mxu0 %v2810
      %2814 = vmatprep.subr.bf16.mxu0 0
      %2815 = vmatpush1.bf16.msra.mxu0 0
      %2816 = vmatprep.subr.bf16.mxu0 0
      %2817 = vmatpush1.bf16.msra.mxu0 0
      %2818 = vmatprep.subr.bf16.mxu0 0
      %2819 = vmatpush1.bf16.msra.mxu0 0
      %2820 = vmatprep.subr.bf16.mxu0 0
      %2821 = vmatpush1.bf16.msra.mxu0 0
      %2822 = vmatprep.subr.bf16.mxu0 0
      %2823 = vmatpush1.bf16.msra.mxu0 0
      %2824 = vmatprep.subr.bf16.mxu0 0
      %2825 = vmatpush1.bf16.msra.mxu0 0
      %2826 = vmatprep.subr.bf16.mxu0 0
      %2827 = vmatpush1.bf16.msra.mxu0 0
      %2828 = vmatprep.subr.bf16.mxu0 0
      %2829 = vmatpush1.bf16.msra.mxu0 0
      %2830 = vmatprep.subr.bf16.mxu0 0
      %2831 = vmatpush1.bf16.msra.mxu0 0
      %2832 = vmatprep.subr.bf16.mxu0 0
      %2833 = vmatpush1.bf16.msra.mxu0 0
      %2834 = vmatprep.subr.bf16.mxu0 0
      %2835 = vmatpush1.bf16.msra.mxu0 0
      %2836 = vmatprep.subr.bf16.mxu0 0
      %2837 = vmatpush1.bf16.msra.mxu0 0
      %2838 = vmatprep.subr.bf16.mxu0 0
      %2839 = vmatpush1.bf16.msra.mxu0 0
      %2840 = vmatprep.subr.bf16.mxu0 0
      %2841 = vmatpush1.bf16.msra.mxu0 0
      %2842 = vmatprep.subr.bf16.mxu0 0
      %2843 = vmatpush1.bf16.msra.mxu0 0
      %2844 = vmatprep.mubr.bf16.mxu0 0
      %2845 = vmatmul.mubr.bf16.gmra.mrb[0].mxu0 %v2786
      %v2846 = vpop.f32.mrb[0].mxu0
      %v2847 = vadd.f32 0.0, %v2846
      %v2848 = vpop.f32.mrb[0].mxu0
      %v2849 = vpop.f32.mrb[0].mxu0
      %v2850 = vadd.f32 0.0, %v2849
      %v2851 = vpop.f32.mrb[0].mxu0
      %2852 = vmatprep.mubr.bf16.mxu0 0
      %2853 = vmatmul.mubr.bf16.gmra.mrb[0].mxu0 %v2789
      %v2854 = vpop.f32.mrb[0].mxu0
      %v2855 = vadd.f32 0.0, %v2854
      %v2856 = vpop.f32.mrb[0].mxu0
      %v2857 = vpop.f32.mrb[0].mxu0
      %v2858 = vadd.f32 0.0, %v2857
      %v2859 = vpop.f32.mrb[0].mxu0
      %2860 = vmatprep.mubr.bf16.mxu0 0
      %2861 = vmatmul.mubr.bf16.gmra.mrb[0].mxu0 %v2792
      %v2862 = vpop.f32.mrb[0].mxu0
      %v2863 = vadd.f32 0.0, %v2862
      %v2864 = vpop.f32.mrb[0].mxu0
      %v2865 = vpop.f32.mrb[0].mxu0
      %v2866 = vadd.f32 0.0, %v2865
      %v2867 = vpop.f32.mrb[0].mxu0
      %2868 = vmatprep.mubr.bf16.mxu0 0
      %2869 = vmatmul.mubr.bf16.gmra.mrb[0].mxu0 %v2795
      %v2870 = vpop.f32.mrb[0].mxu0
      %v2871 = vadd.f32 0.0, %v2870
      %v2872 = vpop.f32.mrb[0].mxu0
      %v2873 = vpop.f32.mrb[0].mxu0
      %v2874 = vadd.f32 0.0, %v2873
      %v2875 = vpop.f32.mrb[0].mxu0
      %2876 = vmatprep.mubr.bf16.mxu0 0
      %2877 = vmatmul.mubr.bf16.gmra.mrb[0].mxu0 %v2798
      %v2878 = vpop.f32.mrb[0].mxu0
      %v2879 = vadd.f32 0.0, %v2878
      %v2880 = vpop.f32.mrb[0].mxu0
      %v2881 = vpop.f32.mrb[0].mxu0
      %v2882 = vadd.f32 0.0, %v2881
      %v2883 = vpop.f32.mrb[0].mxu0
      %2884 = vmatprep.mubr.bf16.mxu0 0
      %2885 = vmatmul.mubr.bf16.gmra.mrb[0].mxu0 %v2801
      %v2886 = vpop.f32.mrb[0].mxu0
      %v2887 = vadd.f32 0.0, %v2886
      %v2888 = vpop.f32.mrb[0].mxu0
      %v2889 = vpop.f32.mrb[0].mxu0
      %v2890 = vadd.f32 0.0, %v2889
      %v2891 = vpop.f32.mrb[0].mxu0
      %2892 = vmatprep.mubr.bf16.mxu0 0
      %2893 = vmatmul.mubr.bf16.gmra.mrb[0].mxu0 %v2804
      %v2894 = vpop.f32.mrb[0].mxu0
      %v2895 = vadd.f32 0.0, %v2894
      %v2896 = vpop.f32.mrb[0].mxu0
      %v2897 = vpop.f32.mrb[0].mxu0
      %v2898 = vadd.f32 0.0, %v2897
      %v2899 = vpop.f32.mrb[0].mxu0
      %2900 = vmatprep.mubr.bf16.mxu0 0
      %2901 = vmatmul.mubr.bf16.gmra.mrb[0].mxu0 %v2807
      %v2902 = vpop.f32.mrb[0].mxu0
      %v2903 = vadd.f32 0.0, %v2902
      %v2904 = vpop.f32.mrb[0].mxu0
      %v2905 = vpop.f32.mrb[0].mxu0
      %v2906 = vadd.f32 0.0, %v2905
      %v2907 = vpop.f32.mrb[0].mxu0
      %2908 = vdwg.mxu0
      %v2909 = vadd.f32 %v2265, %v2847
      %v2910 = vadd.f32 %v2268, %v2850
      %v2911 = vadd.f32 %v2273, %v2855
      %v2912 = vadd.f32 %v2276, %v2858
      %v2913 = vadd.f32 %v2281, %v2863
      %v2914 = vadd.f32 %v2284, %v2866
      %v2915 = vadd.f32 %v2289, %v2871
      %v2916 = vadd.f32 %v2292, %v2874
      %v2917 = vadd.f32 %v2297, %v2879
      %v2918 = vadd.f32 %v2300, %v2882
      %v2919 = vadd.f32 %v2305, %v2887
      %v2920 = vadd.f32 %v2308, %v2890
      %v2921 = vadd.f32 %v2313, %v2895
      %v2922 = vadd.f32 %v2316, %v2898
      %v2923 = vadd.f32 %v2321, %v2903
      %v2924 = vadd.f32 %v2324, %v2906
      %2925 = vrot.lane.b32.xlu0 %v1161, 104
      %v2926 = vpop.permute.xlu0 %2925
      %2927 = vrot.lane.b32.xlu0 %v1162, 104
      %v2928 = vpop.permute.xlu0 %2927
      %2929 = vrot.lane.b32.xlu0 %v1163, 104
      %v2930 = vpop.permute.xlu0 %2929
      %2931 = vrot.lane.b32.xlu0 %v1164, 104
      %v2932 = vpop.permute.xlu0 %2931
      %2933 = vrot.lane.b32.xlu0 %v1165, 104
      %v2934 = vpop.permute.xlu0 %2933
      %2935 = vrot.lane.b32.xlu0 %v1166, 104
      %v2936 = vpop.permute.xlu0 %2935
      %2937 = vrot.lane.b32.xlu0 %v1167, 104
      %v2938 = vpop.permute.xlu0 %2937
      %2939 = vrot.lane.b32.xlu0 %v1168, 104
      %v2940 = vpop.permute.xlu0 %2939
      %2941 = vrot.lane.b32.xlu0 %v1169, 104
      %v2942 = vpop.permute.xlu0 %2941
      %2943 = vrot.lane.b32.xlu0 %v1170, 104
      %v2944 = vpop.permute.xlu0 %2943
      %2945 = vrot.lane.b32.xlu0 %v1171, 104
      %v2946 = vpop.permute.xlu0 %2945
      %2947 = vrot.lane.b32.xlu0 %v1172, 104
      %v2948 = vpop.permute.xlu0 %2947
      %2949 = vrot.lane.b32.xlu0 %v1173, 104
      %v2950 = vpop.permute.xlu0 %2949
      %2951 = vrot.lane.b32.xlu0 %v1174, 104
      %v2952 = vpop.permute.xlu0 %2951
      %2953 = vrot.lane.b32.xlu0 %v1175, 104
      %v2954 = vpop.permute.xlu0 %2953
      %2955 = vrot.lane.b32.xlu0 %v1176, 104
      %v2956 = vpop.permute.xlu0 %2955
      %v2958 = vsel %vm1193, %v2926, 0
      %v2961 = vsel %vm1193, %v2928, 0
      %v2964 = vsel %vm1193, %v2930, 0
      %v2967 = vsel %vm1193, %v2932, 0
      %v2970 = vsel %vm1193, %v2934, 0
      %v2973 = vsel %vm1193, %v2936, 0
      %v2976 = vsel %vm1193, %v2938, 0
      %v2979 = vsel %vm1193, %v2940, 0
      %v2982 = vsel %vm1193, %v2942, 0
      %v2985 = vsel %vm1193, %v2944, 0
      %v2988 = vsel %vm1193, %v2946, 0
      %v2991 = vsel %vm1193, %v2948, 0
      %v2994 = vsel %vm1193, %v2950, 0
      %v2997 = vsel %vm1193, %v2952, 0
      %v3000 = vsel %vm1193, %v2954, 0
      %v3003 = vsel %vm1193, %v2956, 0
      %3005 = vmatprep.subr.bf16.mxu0 0
      %3006 = vmatpush1.bf16.xpose.msra.mxu0 %v2982
      %3007 = vmatprep.subr.bf16.mxu0 0
      %3008 = vmatpush1.bf16.xpose.msra.mxu0 %v2985
      %3009 = vmatprep.subr.bf16.mxu0 0
      %3010 = vmatpush1.bf16.xpose.msra.mxu0 %v2988
      %3011 = vmatprep.subr.bf16.mxu0 0
      %3012 = vmatpush1.bf16.xpose.msra.mxu0 %v2991
      %3013 = vmatprep.subr.bf16.mxu0 0
      %3014 = vmatpush1.bf16.xpose.msra.mxu0 %v2994
      %3015 = vmatprep.subr.bf16.mxu0 0
      %3016 = vmatpush1.bf16.xpose.msra.mxu0 %v2997
      %3017 = vmatprep.subr.bf16.mxu0 0
      %3018 = vmatpush1.bf16.xpose.msra.mxu0 %v3000
      %3019 = vmatprep.subr.bf16.mxu0 0
      %3020 = vmatpush1.bf16.xpose.msra.mxu0 %v3003
      %3021 = vmatprep.subr.bf16.mxu0 0
      %3022 = vmatpush1.bf16.xpose.msra.mxu0 0
      %3023 = vmatprep.subr.bf16.mxu0 0
      %3024 = vmatpush1.bf16.xpose.msra.mxu0 0
      %3025 = vmatprep.subr.bf16.mxu0 0
      %3026 = vmatpush1.bf16.xpose.msra.mxu0 0
      %3027 = vmatprep.subr.bf16.mxu0 0
      %3028 = vmatpush1.bf16.xpose.msra.mxu0 0
      %3029 = vmatprep.subr.bf16.mxu0 0
      %3030 = vmatpush1.bf16.xpose.msra.mxu0 0
      %3031 = vmatprep.subr.bf16.mxu0 0
      %3032 = vmatpush1.bf16.xpose.msra.mxu0 0
      %3033 = vmatprep.subr.bf16.mxu0 0
      %3034 = vmatpush1.bf16.xpose.msra.mxu0 0
      %3035 = vmatprep.subr.bf16.mxu0 0
      %3036 = vmatpush1.bf16.xpose.msra.mxu0 0
      %3037 = vmatprep.mubr.bf16.mxu0 0
      %3038 = vmatmul.mubr.bf16.gmra.mrb[0].mxu0 %v2958
      %v3039 = vpop.f32.mrb[0].mxu0
      %v3040 = vadd.f32 %v1192, %v3039
      %v3041 = vpop.f32.mrb[0].mxu0
      %v3042 = vpop.f32.mrb[0].mxu0
      %v3043 = vadd.f32 %v1192, %v3042
      %v3044 = vpop.f32.mrb[0].mxu0
      %3045 = vmatprep.mubr.bf16.mxu0 0
      %3046 = vmatmul.mubr.bf16.gmra.mrb[0].mxu0 %v2961
      %v3047 = vpop.f32.mrb[0].mxu0
      %v3048 = vadd.f32 %v1192, %v3047
      %v3049 = vpop.f32.mrb[0].mxu0
      %v3050 = vpop.f32.mrb[0].mxu0
      %v3051 = vadd.f32 %v1192, %v3050
      %v3052 = vpop.f32.mrb[0].mxu0
      %3053 = vmatprep.mubr.bf16.mxu0 0
      %3054 = vmatmul.mubr.bf16.gmra.mrb[0].mxu0 %v2964
      %v3055 = vpop.f32.mrb[0].mxu0
      %v3056 = vadd.f32 %v1192, %v3055
      %v3057 = vpop.f32.mrb[0].mxu0
      %v3058 = vpop.f32.mrb[0].mxu0
      %v3059 = vadd.f32 %v1192, %v3058
      %v3060 = vpop.f32.mrb[0].mxu0
      %3061 = vmatprep.mubr.bf16.mxu0 0
      %3062 = vmatmul.mubr.bf16.gmra.mrb[0].mxu0 %v2967
      %v3063 = vpop.f32.mrb[0].mxu0
      %v3064 = vadd.f32 %v1192, %v3063
      %v3065 = vpop.f32.mrb[0].mxu0
      %v3066 = vpop.f32.mrb[0].mxu0
      %v3067 = vadd.f32 %v1192, %v3066
      %v3068 = vpop.f32.mrb[0].mxu0
      %3069 = vmatprep.mubr.bf16.mxu0 0
      %3070 = vmatmul.mubr.bf16.gmra.mrb[0].mxu0 %v2970
      %v3071 = vpop.f32.mrb[0].mxu0
      %v3072 = vadd.f32 %v1192, %v3071
      %v3073 = vpop.f32.mrb[0].mxu0
      %v3074 = vpop.f32.mrb[0].mxu0
      %v3075 = vadd.f32 %v1192, %v3074
      %v3076 = vpop.f32.mrb[0].mxu0
      %3077 = vmatprep.mubr.bf16.mxu0 0
      %3078 = vmatmul.mubr.bf16.gmra.mrb[0].mxu0 %v2973
      %v3079 = vpop.f32.mrb[0].mxu0
      %v3080 = vadd.f32 %v1192, %v3079
      %v3081 = vpop.f32.mrb[0].mxu0
      %v3082 = vpop.f32.mrb[0].mxu0
      %v3083 = vadd.f32 %v1192, %v3082
      %v3084 = vpop.f32.mrb[0].mxu0
      %3085 = vmatprep.mubr.bf16.mxu0 0
      %3086 = vmatmul.mubr.bf16.gmra.mrb[0].mxu0 %v2976
      %v3087 = vpop.f32.mrb[0].mxu0
      %v3088 = vadd.f32 %v1192, %v3087
      %v3089 = vpop.f32.mrb[0].mxu0
      %v3090 = vpop.f32.mrb[0].mxu0
      %v3091 = vadd.f32 %v1192, %v3090
      %v3092 = vpop.f32.mrb[0].mxu0
      %3093 = vmatprep.mubr.bf16.mxu0 0
      %3094 = vmatmul.mubr.bf16.gmra.mrb[0].mxu0 %v2979
      %v3095 = vpop.f32.mrb[0].mxu0
      %v3096 = vadd.f32 %v1192, %v3095
      %v3097 = vpop.f32.mrb[0].mxu0
      %v3098 = vpop.f32.mrb[0].mxu0
      %v3099 = vadd.f32 %v1192, %v3098
      %v3100 = vpop.f32.mrb[0].mxu0
      %3101 = vdwg.mxu0
      %3102 = vmax.xlane.f32.xlu0 %v3040
      %v3103 = vpop.xlane.xlu0 %3102
      %3104 = vmax.xlane.f32.xlu0 %v3043
      %v3105 = vpop.xlane.xlu0 %3104
      %3106 = vmax.xlane.f32.xlu0 %v3048
      %v3107 = vpop.xlane.xlu0 %3106
      %3108 = vmax.xlane.f32.xlu0 %v3051
      %v3109 = vpop.xlane.xlu0 %3108
      %3110 = vmax.xlane.f32.xlu0 %v3056
      %v3111 = vpop.xlane.xlu0 %3110
      %3112 = vmax.xlane.f32.xlu0 %v3059
      %v3113 = vpop.xlane.xlu0 %3112
      %3114 = vmax.xlane.f32.xlu0 %v3064
      %v3115 = vpop.xlane.xlu0 %3114
      %3116 = vmax.xlane.f32.xlu0 %v3067
      %v3117 = vpop.xlane.xlu0 %3116
      %3118 = vmax.xlane.f32.xlu0 %v3072
      %v3119 = vpop.xlane.xlu0 %3118
      %3120 = vmax.xlane.f32.xlu0 %v3075
      %v3121 = vpop.xlane.xlu0 %3120
      %3122 = vmax.xlane.f32.xlu0 %v3080
      %v3123 = vpop.xlane.xlu0 %3122
      %3124 = vmax.xlane.f32.xlu0 %v3083
      %v3125 = vpop.xlane.xlu0 %3124
      %3126 = vmax.xlane.f32.xlu0 %v3088
      %v3127 = vpop.xlane.xlu0 %3126
      %3128 = vmax.xlane.f32.xlu0 %v3091
      %v3129 = vpop.xlane.xlu0 %3128
      %3130 = vmax.xlane.f32.xlu0 %v3096
      %v3131 = vpop.xlane.xlu0 %3130
      %3132 = vmax.xlane.f32.xlu0 %v3099
      %v3133 = vpop.xlane.xlu0 %3132
      %v3134 = vsub.f32 %v3040, %v3103
      %v3135 = vsub.f32 %v3043, %v3105
      %v3136 = vsub.f32 %v3048, %v3107
      %v3137 = vsub.f32 %v3051, %v3109
      %v3138 = vsub.f32 %v3056, %v3111
      %v3139 = vsub.f32 %v3059, %v3113
      %v3140 = vsub.f32 %v3064, %v3115
      %v3141 = vsub.f32 %v3067, %v3117
      %v3142 = vsub.f32 %v3072, %v3119
      %v3143 = vsub.f32 %v3075, %v3121
      %v3144 = vsub.f32 %v3080, %v3123
      %v3145 = vsub.f32 %v3083, %v3125
      %v3146 = vsub.f32 %v3088, %v3127
      %v3147 = vsub.f32 %v3091, %v3129
      %v3148 = vsub.f32 %v3096, %v3131
      %v3149 = vsub.f32 %v3099, %v3133
      %v3150 = vmul.f32 %v3134, 1.442695
      %v3151 = vpow.pop %v3150
      %v3152 = vmul.f32 %v3135, 1.442695
      %v3153 = vpow.pop %v3152
      %v3154 = vmul.f32 %v3136, 1.442695
      %v3155 = vpow.pop %v3154
      %v3156 = vmul.f32 %v3137, 1.442695
      %v3157 = vpow.pop %v3156
      %v3158 = vmul.f32 %v3138, 1.442695
      %v3159 = vpow.pop %v3158
      %v3160 = vmul.f32 %v3139, 1.442695
      %v3161 = vpow.pop %v3160
      %v3162 = vmul.f32 %v3140, 1.442695
      %v3163 = vpow.pop %v3162
      %v3164 = vmul.f32 %v3141, 1.442695
      %v3165 = vpow.pop %v3164
      %v3166 = vmul.f32 %v3142, 1.442695
      %v3167 = vpow.pop %v3166
      %v3168 = vmul.f32 %v3143, 1.442695
      %v3169 = vpow.pop %v3168
      %v3170 = vmul.f32 %v3144, 1.442695
      %v3171 = vpow.pop %v3170
      %v3172 = vmul.f32 %v3145, 1.442695
      %v3173 = vpow.pop %v3172
      %v3174 = vmul.f32 %v3146, 1.442695
      %v3175 = vpow.pop %v3174
      %v3176 = vmul.f32 %v3147, 1.442695
      %v3177 = vpow.pop %v3176
      %v3178 = vmul.f32 %v3148, 1.442695
      %v3179 = vpow.pop %v3178
      %v3180 = vmul.f32 %v3149, 1.442695
      %v3181 = vpow.pop %v3180
      %3182 = vadd.xlane.f32.xlu0 %v3151
      %v3183 = vpop.xlane.xlu0 %3182
      %3184 = vadd.xlane.f32.xlu0 %v3153
      %v3185 = vpop.xlane.xlu0 %3184
      %3186 = vadd.xlane.f32.xlu0 %v3155
      %v3187 = vpop.xlane.xlu0 %3186
      %3188 = vadd.xlane.f32.xlu0 %v3157
      %v3189 = vpop.xlane.xlu0 %3188
      %3190 = vadd.xlane.f32.xlu0 %v3159
      %v3191 = vpop.xlane.xlu0 %3190
      %3192 = vadd.xlane.f32.xlu0 %v3161
      %v3193 = vpop.xlane.xlu0 %3192
      %3194 = vadd.xlane.f32.xlu0 %v3163
      %v3195 = vpop.xlane.xlu0 %3194
      %3196 = vadd.xlane.f32.xlu0 %v3165
      %v3197 = vpop.xlane.xlu0 %3196
      %3198 = vadd.xlane.f32.xlu0 %v3167
      %v3199 = vpop.xlane.xlu0 %3198
      %3200 = vadd.xlane.f32.xlu0 %v3169
      %v3201 = vpop.xlane.xlu0 %3200
      %3202 = vadd.xlane.f32.xlu0 %v3171
      %v3203 = vpop.xlane.xlu0 %3202
      %3204 = vadd.xlane.f32.xlu0 %v3173
      %v3205 = vpop.xlane.xlu0 %3204
      %3206 = vadd.xlane.f32.xlu0 %v3175
      %v3207 = vpop.xlane.xlu0 %3206
      %3208 = vadd.xlane.f32.xlu0 %v3177
      %v3209 = vpop.xlane.xlu0 %3208
      %3210 = vadd.xlane.f32.xlu0 %v3179
      %v3211 = vpop.xlane.xlu0 %3210
      %3212 = vadd.xlane.f32.xlu0 %v3181
      %v3213 = vpop.xlane.xlu0 %3212
      %v3214 = vrcp.pop %v3183
      %v3215 = vrcp.pop %v3185
      %v3216 = vrcp.pop %v3187
      %v3217 = vrcp.pop %v3189
      %v3218 = vrcp.pop %v3191
      %v3219 = vrcp.pop %v3193
      %v3220 = vrcp.pop %v3195
      %v3221 = vrcp.pop %v3197
      %v3222 = vrcp.pop %v3199
      %v3223 = vrcp.pop %v3201
      %v3224 = vrcp.pop %v3203
      %v3225 = vrcp.pop %v3205
      %v3226 = vrcp.pop %v3207
      %v3227 = vrcp.pop %v3209
      %v3228 = vrcp.pop %v3211
      %v3229 = vrcp.pop %v3213
      %v3230 = vmul.f32 %v3151, %v3214
      %v3231 = vmul.f32 %v3153, %v3215
      %v3232 = vmul.f32 %v3155, %v3216
      %v3233 = vmul.f32 %v3157, %v3217
      %v3234 = vmul.f32 %v3159, %v3218
      %v3235 = vmul.f32 %v3161, %v3219
      %v3236 = vmul.f32 %v3163, %v3220
      %v3237 = vmul.f32 %v3165, %v3221
      %v3238 = vmul.f32 %v3167, %v3222
      %v3239 = vmul.f32 %v3169, %v3223
      %v3240 = vmul.f32 %v3171, %v3224
      %v3241 = vmul.f32 %v3173, %v3225
      %v3242 = vmul.f32 %v3175, %v3226
      %v3243 = vmul.f32 %v3177, %v3227
      %v3244 = vmul.f32 %v3179, %v3228
      %v3245 = vmul.f32 %v3181, %v3229
      %v3246 = vpack.c.bf16 %v3231, %v3230
      %v3247 = vpack.c.bf16 %v3233, %v3232
      %v3248 = vpack.c.bf16 %v3235, %v3234
      %v3249 = vpack.c.bf16 %v3237, %v3236
      %v3250 = vpack.c.bf16 %v3239, %v3238
      %v3251 = vpack.c.bf16 %v3241, %v3240
      %v3252 = vpack.c.bf16 %v3243, %v3242
      %v3253 = vpack.c.bf16 %v3245, %v3244
      %3254 = vrot.lane.b32.xlu0 %v1177, 104
      %v3255 = vpop.permute.xlu0 %3254
      %3256 = vrot.lane.b32.xlu0 %v1178, 104
      %v3257 = vpop.permute.xlu0 %3256
      %3258 = vrot.lane.b32.xlu0 %v1179, 104
      %v3259 = vpop.permute.xlu0 %3258
      %3260 = vrot.lane.b32.xlu0 %v1180, 104
      %v3261 = vpop.permute.xlu0 %3260
      %3262 = vrot.lane.b32.xlu0 %v1181, 104
      %v3263 = vpop.permute.xlu0 %3262
      %3264 = vrot.lane.b32.xlu0 %v1182, 104
      %v3265 = vpop.permute.xlu0 %3264
      %3266 = vrot.lane.b32.xlu0 %v1183, 104
      %v3267 = vpop.permute.xlu0 %3266
      %3268 = vrot.lane.b32.xlu0 %v1184, 104
      %v3269 = vpop.permute.xlu0 %3268
      %3278 = vmatprep.subr.bf16.mxu0 0
      %3279 = vmatpush1.bf16.msra.mxu0 %v3255
      %3280 = vmatprep.subr.bf16.mxu0 0
      %3281 = vmatpush1.bf16.msra.mxu0 %v3257
      %3282 = vmatprep.subr.bf16.mxu0 0
      %3283 = vmatpush1.bf16.msra.mxu0 %v3259
      %3284 = vmatprep.subr.bf16.mxu0 0
      %3285 = vmatpush1.bf16.msra.mxu0 %v3261
      %3286 = vmatprep.subr.bf16.mxu0 0
      %3287 = vmatpush1.bf16.msra.mxu0 %v3263
      %3288 = vmatprep.subr.bf16.mxu0 0
      %3289 = vmatpush1.bf16.msra.mxu0 %v3265
      %3290 = vmatprep.subr.bf16.mxu0 0
      %3291 = vmatpush1.bf16.msra.mxu0 %v3267
      %3292 = vmatprep.subr.bf16.mxu0 0
      %3293 = vmatpush1.bf16.msra.mxu0 %v3269
      %3294 = vmatprep.subr.bf16.mxu0 0
      %3295 = vmatpush1.bf16.msra.mxu0 0
      %3296 = vmatprep.subr.bf16.mxu0 0
      %3297 = vmatpush1.bf16.msra.mxu0 0
      %3298 = vmatprep.subr.bf16.mxu0 0
      %3299 = vmatpush1.bf16.msra.mxu0 0
      %3300 = vmatprep.subr.bf16.mxu0 0
      %3301 = vmatpush1.bf16.msra.mxu0 0
      %3302 = vmatprep.subr.bf16.mxu0 0
      %3303 = vmatpush1.bf16.msra.mxu0 0
      %3304 = vmatprep.subr.bf16.mxu0 0
      %3305 = vmatpush1.bf16.msra.mxu0 0
      %3306 = vmatprep.subr.bf16.mxu0 0
      %3307 = vmatpush1.bf16.msra.mxu0 0
      %3308 = vmatprep.subr.bf16.mxu0 0
      %3309 = vmatpush1.bf16.msra.mxu0 0
      %3310 = vmatprep.mubr.bf16.mxu0 0
      %3311 = vmatmul.mubr.bf16.gmra.mrb[0].mxu0 %v3246
      %v3312 = vpop.f32.mrb[0].mxu0
      %v3313 = vadd.f32 0.0, %v3312
      %v3314 = vpop.f32.mrb[0].mxu0
      %v3315 = vpop.f32.mrb[0].mxu0
      %v3316 = vadd.f32 0.0, %v3315
      %v3317 = vpop.f32.mrb[0].mxu0
      %3318 = vmatprep.mubr.bf16.mxu0 0
      %3319 = vmatmul.mubr.bf16.gmra.mrb[0].mxu0 %v3247
      %v3320 = vpop.f32.mrb[0].mxu0
      %v3321 = vadd.f32 0.0, %v3320
      %v3322 = vpop.f32.mrb[0].mxu0
      %v3323 = vpop.f32.mrb[0].mxu0
      %v3324 = vadd.f32 0.0, %v3323
      %v3325 = vpop.f32.mrb[0].mxu0
      %3326 = vmatprep.mubr.bf16.mxu0 0
      %3327 = vmatmul.mubr.bf16.gmra.mrb[0].mxu0 %v3248
      %v3328 = vpop.f32.mrb[0].mxu0
      %v3329 = vadd.f32 0.0, %v3328
      %v3330 = vpop.f32.mrb[0].mxu0
      %v3331 = vpop.f32.mrb[0].mxu0
      %v3332 = vadd.f32 0.0, %v3331
      %v3333 = vpop.f32.mrb[0].mxu0
      %3334 = vmatprep.mubr.bf16.mxu0 0
      %3335 = vmatmul.mubr.bf16.gmra.mrb[0].mxu0 %v3249
      %v3336 = vpop.f32.mrb[0].mxu0
      %v3337 = vadd.f32 0.0, %v3336
      %v3338 = vpop.f32.mrb[0].mxu0
      %v3339 = vpop.f32.mrb[0].mxu0
      %v3340 = vadd.f32 0.0, %v3339
      %v3341 = vpop.f32.mrb[0].mxu0
      %3342 = vmatprep.mubr.bf16.mxu0 0
      %3343 = vmatmul.mubr.bf16.gmra.mrb[0].mxu0 %v3250
      %v3344 = vpop.f32.mrb[0].mxu0
      %v3345 = vadd.f32 0.0, %v3344
      %v3346 = vpop.f32.mrb[0].mxu0
      %v3347 = vpop.f32.mrb[0].mxu0
      %v3348 = vadd.f32 0.0, %v3347
      %v3349 = vpop.f32.mrb[0].mxu0
      %3350 = vmatprep.mubr.bf16.mxu0 0
      %3351 = vmatmul.mubr.bf16.gmra.mrb[0].mxu0 %v3251
      %v3352 = vpop.f32.mrb[0].mxu0
      %v3353 = vadd.f32 0.0, %v3352
      %v3354 = vpop.f32.mrb[0].mxu0
      %v3355 = vpop.f32.mrb[0].mxu0
      %v3356 = vadd.f32 0.0, %v3355
      %v3357 = vpop.f32.mrb[0].mxu0
      %3358 = vmatprep.mubr.bf16.mxu0 0
      %3359 = vmatmul.mubr.bf16.gmra.mrb[0].mxu0 %v3252
      %v3360 = vpop.f32.mrb[0].mxu0
      %v3361 = vadd.f32 0.0, %v3360
      %v3362 = vpop.f32.mrb[0].mxu0
      %v3363 = vpop.f32.mrb[0].mxu0
      %v3364 = vadd.f32 0.0, %v3363
      %v3365 = vpop.f32.mrb[0].mxu0
      %3366 = vmatprep.mubr.bf16.mxu0 0
      %3367 = vmatmul.mubr.bf16.gmra.mrb[0].mxu0 %v3253
      %v3368 = vpop.f32.mrb[0].mxu0
      %v3369 = vadd.f32 0.0, %v3368
      %v3370 = vpop.f32.mrb[0].mxu0
      %v3371 = vpop.f32.mrb[0].mxu0
      %v3372 = vadd.f32 0.0, %v3371
      %v3373 = vpop.f32.mrb[0].mxu0
      %3374 = vdwg.mxu0
      %v3375 = vpack.c.bf16 %v3316, %v3313
      %v3376 = vpack.c.bf16 %v3324, %v3321
      %v3377 = vpack.c.bf16 %v3332, %v3329
      %v3378 = vpack.c.bf16 %v3340, %v3337
      %v3379 = vpack.c.bf16 %v3348, %v3345
      %v3380 = vpack.c.bf16 %v3356, %v3353
      %v3381 = vpack.c.bf16 %v3364, %v3361
      %v3382 = vpack.c.bf16 %v3372, %v3369
      %v3384 = vsel %vm1193, %v3375, 0
      %v3387 = vsel %vm1193, %v3376, 0
      %v3390 = vsel %vm1193, %v3377, 0
      %v3393 = vsel %vm1193, %v3378, 0
      %v3396 = vsel %vm1193, %v3379, 0
      %v3399 = vsel %vm1193, %v3380, 0
      %v3402 = vsel %vm1193, %v3381, 0
      %v3405 = vsel %vm1193, %v3382, 0
      %v3408 = vsel %vm2102, %v1188, 0
      %3410 = vmatprep.subr.bf16.mxu0 0
      %3411 = vmatpush1.bf16.msra.mxu0 %v3408
      %3412 = vmatprep.subr.bf16.mxu0 0
      %3413 = vmatpush1.bf16.msra.mxu0 0
      %3414 = vmatprep.subr.bf16.mxu0 0
      %3415 = vmatpush1.bf16.msra.mxu0 0
      %3416 = vmatprep.subr.bf16.mxu0 0
      %3417 = vmatpush1.bf16.msra.mxu0 0
      %3418 = vmatprep.subr.bf16.mxu0 0
      %3419 = vmatpush1.bf16.msra.mxu0 0
      %3420 = vmatprep.subr.bf16.mxu0 0
      %3421 = vmatpush1.bf16.msra.mxu0 0
      %3422 = vmatprep.subr.bf16.mxu0 0
      %3423 = vmatpush1.bf16.msra.mxu0 0
      %3424 = vmatprep.subr.bf16.mxu0 0
      %3425 = vmatpush1.bf16.msra.mxu0 0
      %3426 = vmatprep.subr.bf16.mxu0 0
      %3427 = vmatpush1.bf16.msra.mxu0 0
      %3428 = vmatprep.subr.bf16.mxu0 0
      %3429 = vmatpush1.bf16.msra.mxu0 0
      %3430 = vmatprep.subr.bf16.mxu0 0
      %3431 = vmatpush1.bf16.msra.mxu0 0
      %3432 = vmatprep.subr.bf16.mxu0 0
      %3433 = vmatpush1.bf16.msra.mxu0 0
      %3434 = vmatprep.subr.bf16.mxu0 0
      %3435 = vmatpush1.bf16.msra.mxu0 0
      %3436 = vmatprep.subr.bf16.mxu0 0
      %3437 = vmatpush1.bf16.msra.mxu0 0
      %3438 = vmatprep.subr.bf16.mxu0 0
      %3439 = vmatpush1.bf16.msra.mxu0 0
      %3440 = vmatprep.subr.bf16.mxu0 0
      %3441 = vmatpush1.bf16.msra.mxu0 0
      %3442 = vmatprep.mubr.bf16.mxu0 0
      %3443 = vmatmul.mubr.bf16.gmra.mrb[0].mxu0 %v3384
      %v3444 = vpop.f32.mrb[0].mxu0
      %v3445 = vadd.f32 0.0, %v3444
      %v3446 = vpop.f32.mrb[0].mxu0
      %v3447 = vpop.f32.mrb[0].mxu0
      %v3448 = vadd.f32 0.0, %v3447
      %v3449 = vpop.f32.mrb[0].mxu0
      %3450 = vmatprep.mubr.bf16.mxu0 0
      %3451 = vmatmul.mubr.bf16.gmra.mrb[0].mxu0 %v3387
      %v3452 = vpop.f32.mrb[0].mxu0
      %v3453 = vadd.f32 0.0, %v3452
      %v3454 = vpop.f32.mrb[0].mxu0
      %v3455 = vpop.f32.mrb[0].mxu0
      %v3456 = vadd.f32 0.0, %v3455
      %v3457 = vpop.f32.mrb[0].mxu0
      %3458 = vmatprep.mubr.bf16.mxu0 0
      %3459 = vmatmul.mubr.bf16.gmra.mrb[0].mxu0 %v3390
      %v3460 = vpop.f32.mrb[0].mxu0
      %v3461 = vadd.f32 0.0, %v3460
      %v3462 = vpop.f32.mrb[0].mxu0
      %v3463 = vpop.f32.mrb[0].mxu0
      %v3464 = vadd.f32 0.0, %v3463
      %v3465 = vpop.f32.mrb[0].mxu0
      %3466 = vmatprep.mubr.bf16.mxu0 0
      %3467 = vmatmul.mubr.bf16.gmra.mrb[0].mxu0 %v3393
      %v3468 = vpop.f32.mrb[0].mxu0
      %v3469 = vadd.f32 0.0, %v3468
      %v3470 = vpop.f32.mrb[0].mxu0
      %v3471 = vpop.f32.mrb[0].mxu0
      %v3472 = vadd.f32 0.0, %v3471
      %v3473 = vpop.f32.mrb[0].mxu0
      %3474 = vmatprep.mubr.bf16.mxu0 0
      %3475 = vmatmul.mubr.bf16.gmra.mrb[0].mxu0 %v3396
      %v3476 = vpop.f32.mrb[0].mxu0
      %v3477 = vadd.f32 0.0, %v3476
      %v3478 = vpop.f32.mrb[0].mxu0
      %v3479 = vpop.f32.mrb[0].mxu0
      %v3480 = vadd.f32 0.0, %v3479
      %v3481 = vpop.f32.mrb[0].mxu0
      %3482 = vmatprep.mubr.bf16.mxu0 0
      %3483 = vmatmul.mubr.bf16.gmra.mrb[0].mxu0 %v3399
      %v3484 = vpop.f32.mrb[0].mxu0
      %v3485 = vadd.f32 0.0, %v3484
      %v3486 = vpop.f32.mrb[0].mxu0
      %v3487 = vpop.f32.mrb[0].mxu0
      %v3488 = vadd.f32 0.0, %v3487
      %v3489 = vpop.f32.mrb[0].mxu0
      %3490 = vmatprep.mubr.bf16.mxu0 0
      %3491 = vmatmul.mubr.bf16.gmra.mrb[0].mxu0 %v3402
      %v3492 = vpop.f32.mrb[0].mxu0
      %v3493 = vadd.f32 0.0, %v3492
      %v3494 = vpop.f32.mrb[0].mxu0
      %v3495 = vpop.f32.mrb[0].mxu0
      %v3496 = vadd.f32 0.0, %v3495
      %v3497 = vpop.f32.mrb[0].mxu0
      %3498 = vmatprep.mubr.bf16.mxu0 0
      %3499 = vmatmul.mubr.bf16.gmra.mrb[0].mxu0 %v3405
      %v3500 = vpop.f32.mrb[0].mxu0
      %v3501 = vadd.f32 0.0, %v3500
      %v3502 = vpop.f32.mrb[0].mxu0
      %v3503 = vpop.f32.mrb[0].mxu0
      %v3504 = vadd.f32 0.0, %v3503
      %v3505 = vpop.f32.mrb[0].mxu0
      %3506 = vdwg.mxu0
      %v3507 = vadd.f32 %v2909, %v3445
      %v3508 = vadd.f32 %v2910, %v3448
      %v3509 = vadd.f32 %v2911, %v3453
      %v3510 = vadd.f32 %v2912, %v3456
      %v3511 = vadd.f32 %v2913, %v3461
      %v3512 = vadd.f32 %v2914, %v3464
      %v3513 = vadd.f32 %v2915, %v3469
      %v3514 = vadd.f32 %v2916, %v3472
      %v3515 = vadd.f32 %v2917, %v3477
      %v3516 = vadd.f32 %v2918, %v3480
      %v3517 = vadd.f32 %v2919, %v3485
      %v3518 = vadd.f32 %v2920, %v3488
      %v3519 = vadd.f32 %v2921, %v3493
      %v3520 = vadd.f32 %v2922, %v3496
      %v3521 = vadd.f32 %v2923, %v3501
      %v3522 = vadd.f32 %v2924, %v3504
      %v3523 = vld [vmem:[%s9] sm:$0x1]
      %v3525 = vlaneseq
      %v3526 = vshrl.u32 %v3525, 7
      %v3527 = vsub.s32 0, %v3526
      %v3528 = vrot.slane %v3523, %v3527
      %v3530 = vadd.f32 %v3507, %v3528
      %v3531 = vadd.f32 %v3508, %v3528
      %v3532 = vadd.f32 %v3509, %v3528
      %v3533 = vadd.f32 %v3510, %v3528
      %v3534 = vadd.f32 %v3511, %v3528
      %v3535 = vadd.f32 %v3512, %v3528
      %v3536 = vadd.f32 %v3513, %v3528
      %v3537 = vadd.f32 %v3514, %v3528
      %v3538 = vadd.f32 %v3515, %v3528
      %v3539 = vadd.f32 %v3516, %v3528
      %v3540 = vadd.f32 %v3517, %v3528
      %v3541 = vadd.f32 %v3518, %v3528
      %v3542 = vadd.f32 %v3519, %v3528
      %v3543 = vadd.f32 %v3520, %v3528
      %v3544 = vadd.f32 %v3521, %v3528
      %v3545 = vadd.f32 %v3522, %v3528
      %v3546 = vadd.f32 %v992, %v3530
      %v3547 = vadd.f32 %v993, %v3531
      %v3548 = vadd.f32 %v994, %v3532
      %v3549 = vadd.f32 %v995, %v3533
      %v3550 = vadd.f32 %v996, %v3534
      %v3551 = vadd.f32 %v997, %v3535
      %v3552 = vadd.f32 %v998, %v3536
      %v3553 = vadd.f32 %v999, %v3537
      %v3554 = vadd.f32 %v1000, %v3538
      %v3555 = vadd.f32 %v1001, %v3539
      %v3556 = vadd.f32 %v1002, %v3540
      %v3557 = vadd.f32 %v1003, %v3541
      %v3558 = vadd.f32 %v1004, %v3542
      %v3559 = vadd.f32 %v1005, %v3543
      %v3560 = vadd.f32 %v1006, %v3544
      %v3561 = vadd.f32 %v1007, %v3545
      %v3562 = vsel %vm1039, %v3546, 0.0
      %3563 = vadd.xlane.f32.xlu0 %v3562
      %v3564 = vpop.xlane.xlu0 %3563
      %v3565 = vsel %vm1039, %v3547, 0.0
      %3566 = vadd.xlane.f32.xlu0 %v3565
      %v3567 = vpop.xlane.xlu0 %3566
      %v3568 = vsel %vm1039, %v3548, 0.0
      %3569 = vadd.xlane.f32.xlu0 %v3568
      %v3570 = vpop.xlane.xlu0 %3569
      %v3571 = vsel %vm1039, %v3549, 0.0
      %3572 = vadd.xlane.f32.xlu0 %v3571
      %v3573 = vpop.xlane.xlu0 %3572
      %v3574 = vsel %vm1039, %v3550, 0.0
      %3575 = vadd.xlane.f32.xlu0 %v3574
      %v3576 = vpop.xlane.xlu0 %3575
      %v3577 = vsel %vm1039, %v3551, 0.0
      %3578 = vadd.xlane.f32.xlu0 %v3577
      %v3579 = vpop.xlane.xlu0 %3578
      %v3580 = vsel %vm1039, %v3552, 0.0
      %3581 = vadd.xlane.f32.xlu0 %v3580
      %v3582 = vpop.xlane.xlu0 %3581
      %v3583 = vsel %vm1039, %v3553, 0.0
      %3584 = vadd.xlane.f32.xlu0 %v3583
      %v3585 = vpop.xlane.xlu0 %3584
      %v3586 = vsel %vm1039, %v3554, 0.0
      %3587 = vadd.xlane.f32.xlu0 %v3586
      %v3588 = vpop.xlane.xlu0 %3587
      %v3589 = vsel %vm1039, %v3555, 0.0
      %3590 = vadd.xlane.f32.xlu0 %v3589
      %v3591 = vpop.xlane.xlu0 %3590
      %v3592 = vsel %vm1039, %v3556, 0.0
      %3593 = vadd.xlane.f32.xlu0 %v3592
      %v3594 = vpop.xlane.xlu0 %3593
      %v3595 = vsel %vm1039, %v3557, 0.0
      %3596 = vadd.xlane.f32.xlu0 %v3595
      %v3597 = vpop.xlane.xlu0 %3596
      %v3598 = vsel %vm1039, %v3558, 0.0
      %3599 = vadd.xlane.f32.xlu0 %v3598
      %v3600 = vpop.xlane.xlu0 %3599
      %v3601 = vsel %vm1039, %v3559, 0.0
      %3602 = vadd.xlane.f32.xlu0 %v3601
      %v3603 = vpop.xlane.xlu0 %3602
      %v3604 = vsel %vm1039, %v3560, 0.0
      %3605 = vadd.xlane.f32.xlu0 %v3604
      %v3606 = vpop.xlane.xlu0 %3605
      %v3607 = vsel %vm1039, %v3561, 0.0
      %3608 = vadd.xlane.f32.xlu0 %v3607
      %v3609 = vpop.xlane.xlu0 %3608
      %v3610 = vrcp.pop 32.0
      %v3611 = vmul.f32 %v3564, %v3610
      %v3612 = vmul.f32 %v3567, %v3610
      %v3613 = vmul.f32 %v3570, %v3610
      %v3614 = vmul.f32 %v3573, %v3610
      %v3615 = vmul.f32 %v3576, %v3610
      %v3616 = vmul.f32 %v3579, %v3610
      %v3617 = vmul.f32 %v3582, %v3610
      %v3618 = vmul.f32 %v3585, %v3610
      %v3619 = vmul.f32 %v3588, %v3610
      %v3620 = vmul.f32 %v3591, %v3610
      %v3621 = vmul.f32 %v3594, %v3610
      %v3622 = vmul.f32 %v3597, %v3610
      %v3623 = vmul.f32 %v3600, %v3610
      %v3624 = vmul.f32 %v3603, %v3610
      %v3625 = vmul.f32 %v3606, %v3610
      %v3626 = vmul.f32 %v3609, %v3610
      %v3627 = vsub.f32 %v3546, %v3611
      %v3628 = vsub.f32 %v3547, %v3612
      %v3629 = vsub.f32 %v3548, %v3613
      %v3630 = vsub.f32 %v3549, %v3614
      %v3631 = vsub.f32 %v3550, %v3615
      %v3632 = vsub.f32 %v3551, %v3616
      %v3633 = vsub.f32 %v3552, %v3617
      %v3634 = vsub.f32 %v3553, %v3618
      %v3635 = vsub.f32 %v3554, %v3619
      %v3636 = vsub.f32 %v3555, %v3620
      %v3637 = vsub.f32 %v3556, %v3621
      %v3638 = vsub.f32 %v3557, %v3622
      %v3639 = vsub.f32 %v3558, %v3623
      %v3640 = vsub.f32 %v3559, %v3624
      %v3641 = vsub.f32 %v3560, %v3625
      %v3642 = vsub.f32 %v3561, %v3626
      %v3643 = vmul.f32 %v3627, %v3627
      %v3644 = vmul.f32 %v3628, %v3628
      %v3645 = vmul.f32 %v3629, %v3629
      %v3646 = vmul.f32 %v3630, %v3630
      %v3647 = vmul.f32 %v3631, %v3631
      %v3648 = vmul.f32 %v3632, %v3632
      %v3649 = vmul.f32 %v3633, %v3633
      %v3650 = vmul.f32 %v3634, %v3634
      %v3651 = vmul.f32 %v3635, %v3635
      %v3652 = vmul.f32 %v3636, %v3636
      %v3653 = vmul.f32 %v3637, %v3637
      %v3654 = vmul.f32 %v3638, %v3638
      %v3655 = vmul.f32 %v3639, %v3639
      %v3656 = vmul.f32 %v3640, %v3640
      %v3657 = vmul.f32 %v3641, %v3641
      %v3658 = vmul.f32 %v3642, %v3642
      %v3659 = vsel %vm1039, %v3643, 0.0
      %3660 = vadd.xlane.f32.xlu0 %v3659
      %v3661 = vpop.xlane.xlu0 %3660
      %v3662 = vsel %vm1039, %v3644, 0.0
      %3663 = vadd.xlane.f32.xlu0 %v3662
      %v3664 = vpop.xlane.xlu0 %3663
      %v3665 = vsel %vm1039, %v3645, 0.0
      %3666 = vadd.xlane.f32.xlu0 %v3665
      %v3667 = vpop.xlane.xlu0 %3666
      %v3668 = vsel %vm1039, %v3646, 0.0
      %3669 = vadd.xlane.f32.xlu0 %v3668
      %v3670 = vpop.xlane.xlu0 %3669
      %v3671 = vsel %vm1039, %v3647, 0.0
      %3672 = vadd.xlane.f32.xlu0 %v3671
      %v3673 = vpop.xlane.xlu0 %3672
      %v3674 = vsel %vm1039, %v3648, 0.0
      %3675 = vadd.xlane.f32.xlu0 %v3674
      %v3676 = vpop.xlane.xlu0 %3675
      %v3677 = vsel %vm1039, %v3649, 0.0
      %3678 = vadd.xlane.f32.xlu0 %v3677
      %v3679 = vpop.xlane.xlu0 %3678
      %v3680 = vsel %vm1039, %v3650, 0.0
      %3681 = vadd.xlane.f32.xlu0 %v3680
      %v3682 = vpop.xlane.xlu0 %3681
      %v3683 = vsel %vm1039, %v3651, 0.0
      %3684 = vadd.xlane.f32.xlu0 %v3683
      %v3685 = vpop.xlane.xlu0 %3684
      %v3686 = vsel %vm1039, %v3652, 0.0
      %3687 = vadd.xlane.f32.xlu0 %v3686
      %v3688 = vpop.xlane.xlu0 %3687
      %v3689 = vsel %vm1039, %v3653, 0.0
      %3690 = vadd.xlane.f32.xlu0 %v3689
      %v3691 = vpop.xlane.xlu0 %3690
      %v3692 = vsel %vm1039, %v3654, 0.0
      %3693 = vadd.xlane.f32.xlu0 %v3692
      %v3694 = vpop.xlane.xlu0 %3693
      %v3695 = vsel %vm1039, %v3655, 0.0
      %3696 = vadd.xlane.f32.xlu0 %v3695
      %v3697 = vpop.xlane.xlu0 %3696
      %v3698 = vsel %vm1039, %v3656, 0.0
      %3699 = vadd.xlane.f32.xlu0 %v3698
      %v3700 = vpop.xlane.xlu0 %3699
      %v3701 = vsel %vm1039, %v3657, 0.0
      %3702 = vadd.xlane.f32.xlu0 %v3701
      %v3703 = vpop.xlane.xlu0 %3702
      %v3704 = vsel %vm1039, %v3658, 0.0
      %3705 = vadd.xlane.f32.xlu0 %v3704
      %v3706 = vpop.xlane.xlu0 %3705
      %v3707 = vmul.f32 %v3661, %v3610
      %v3708 = vmul.f32 %v3664, %v3610
      %v3709 = vmul.f32 %v3667, %v3610
      %v3710 = vmul.f32 %v3670, %v3610
      %v3711 = vmul.f32 %v3673, %v3610
      %v3712 = vmul.f32 %v3676, %v3610
      %v3713 = vmul.f32 %v3679, %v3610
      %v3714 = vmul.f32 %v3682, %v3610
      %v3715 = vmul.f32 %v3685, %v3610
      %v3716 = vmul.f32 %v3688, %v3610
      %v3717 = vmul.f32 %v3691, %v3610
      %v3718 = vmul.f32 %v3694, %v3610
      %v3719 = vmul.f32 %v3697, %v3610
      %v3720 = vmul.f32 %v3700, %v3610
      %v3721 = vmul.f32 %v3703, %v3610
      %v3722 = vmul.f32 %v3706, %v3610
      %v3723 = vadd.f32 %v3707, 1e-06
      %v3724 = vadd.f32 %v3708, 1e-06
      %v3725 = vadd.f32 %v3709, 1e-06
      %v3726 = vadd.f32 %v3710, 1e-06
      %v3727 = vadd.f32 %v3711, 1e-06
      %v3728 = vadd.f32 %v3712, 1e-06
      %v3729 = vadd.f32 %v3713, 1e-06
      %v3730 = vadd.f32 %v3714, 1e-06
      %v3731 = vadd.f32 %v3715, 1e-06
      %v3732 = vadd.f32 %v3716, 1e-06
      %v3733 = vadd.f32 %v3717, 1e-06
      %v3734 = vadd.f32 %v3718, 1e-06
      %v3735 = vadd.f32 %v3719, 1e-06
      %v3736 = vadd.f32 %v3720, 1e-06
      %v3737 = vadd.f32 %v3721, 1e-06
      %v3738 = vadd.f32 %v3722, 1e-06
      %v3739 = vrsqrt.pop %v3723
      %v3740 = vrsqrt.pop %v3724
      %v3741 = vrsqrt.pop %v3725
      %v3742 = vrsqrt.pop %v3726
      %v3743 = vrsqrt.pop %v3727
      %v3744 = vrsqrt.pop %v3728
      %v3745 = vrsqrt.pop %v3729
      %v3746 = vrsqrt.pop %v3730
      %v3747 = vrsqrt.pop %v3731
      %v3748 = vrsqrt.pop %v3732
      %v3749 = vrsqrt.pop %v3733
      %v3750 = vrsqrt.pop %v3734
      %v3751 = vrsqrt.pop %v3735
      %v3752 = vrsqrt.pop %v3736
      %v3753 = vrsqrt.pop %v3737
      %v3754 = vrsqrt.pop %v3738
      %v3755 = vmul.f32 %v3627, %v3739
      %v3756 = vmul.f32 %v3628, %v3740
      %v3757 = vmul.f32 %v3629, %v3741
      %v3758 = vmul.f32 %v3630, %v3742
      %v3759 = vmul.f32 %v3631, %v3743
      %v3760 = vmul.f32 %v3632, %v3744
      %v3761 = vmul.f32 %v3633, %v3745
      %v3762 = vmul.f32 %v3634, %v3746
      %v3763 = vmul.f32 %v3635, %v3747
      %v3764 = vmul.f32 %v3636, %v3748
      %v3765 = vmul.f32 %v3637, %v3749
      %v3766 = vmul.f32 %v3638, %v3750
      %v3767 = vmul.f32 %v3639, %v3751
      %v3768 = vmul.f32 %v3640, %v3752
      %v3769 = vmul.f32 %v3641, %v3753
      %v3770 = vmul.f32 %v3642, %v3754
      %v3771 = vld [vmem:[%s10] sm:$0x1]
      %v3773 = vlaneseq
      %v3774 = vshrl.u32 %v3773, 7
      %v3775 = vsub.s32 0, %v3774
      %v3776 = vrot.slane %v3771, %v3775
      %v3778 = vmul.f32 %v3755, %v3776
      %v3779 = vmul.f32 %v3756, %v3776
      %v3780 = vmul.f32 %v3757, %v3776
      %v3781 = vmul.f32 %v3758, %v3776
      %v3782 = vmul.f32 %v3759, %v3776
      %v3783 = vmul.f32 %v3760, %v3776
      %v3784 = vmul.f32 %v3761, %v3776
      %v3785 = vmul.f32 %v3762, %v3776
      %v3786 = vmul.f32 %v3763, %v3776
      %v3787 = vmul.f32 %v3764, %v3776
      %v3788 = vmul.f32 %v3765, %v3776
      %v3789 = vmul.f32 %v3766, %v3776
      %v3790 = vmul.f32 %v3767, %v3776
      %v3791 = vmul.f32 %v3768, %v3776
      %v3792 = vmul.f32 %v3769, %v3776
      %v3793 = vmul.f32 %v3770, %v3776
      %v3794 = vld [vmem:[%s11] sm:$0x1]
      %v3796 = vlaneseq
      %v3797 = vshrl.u32 %v3796, 7
      %v3798 = vsub.s32 0, %v3797
      %v3799 = vrot.slane %v3794, %v3798
      %v3801 = vadd.f32 %v3778, %v3799
      %v3802 = vadd.f32 %v3779, %v3799
      %v3803 = vadd.f32 %v3780, %v3799
      %v3804 = vadd.f32 %v3781, %v3799
      %v3805 = vadd.f32 %v3782, %v3799
      %v3806 = vadd.f32 %v3783, %v3799
      %v3807 = vadd.f32 %v3784, %v3799
      %v3808 = vadd.f32 %v3785, %v3799
      %v3809 = vadd.f32 %v3786, %v3799
      %v3810 = vadd.f32 %v3787, %v3799
      %v3811 = vadd.f32 %v3788, %v3799
      %v3812 = vadd.f32 %v3789, %v3799
      %v3813 = vadd.f32 %v3790, %v3799
      %v3814 = vadd.f32 %v3791, %v3799
      %v3815 = vadd.f32 %v3792, %v3799
      %v3816 = vadd.f32 %v3793, %v3799
      %v3817 = vpack.c.bf16 %v3802, %v3801
      %v3818 = vpack.c.bf16 %v3804, %v3803
      %v3819 = vpack.c.bf16 %v3806, %v3805
      %v3820 = vpack.c.bf16 %v3808, %v3807
      %v3821 = vpack.c.bf16 %v3810, %v3809
      %v3822 = vpack.c.bf16 %v3812, %v3811
      %v3823 = vpack.c.bf16 %v3814, %v3813
      %v3824 = vpack.c.bf16 %v3816, %v3815
      %v3825 = vld [vmem:[%s12] sm:$0xf]
      %v3826 = vld [vmem:[%s12 + $0x4] sm:$0xf]
      %v3827 = vld [vmem:[%s12 + $0x8] sm:$0xf]
      %v3828 = vld [vmem:[%s12 + $0xc] sm:$0xf]
      %v3829 = vld [vmem:[%s13] sm:$0x1]
      %v3831 = vlaneseq
      %v3832 = vshrl.u32 %v3831, 7
      %v3833 = vsub.s32 0, %v3832
      %v3834 = vrot.slane %v3829, %v3833
      %v3840 = vunpack.c.l.b16 %v3825
      %v3841 = vunpack.c.l.b16 %v3826
      %v3842 = vunpack.c.l.b16 %v3827
      %v3843 = vunpack.c.l.b16 %v3828
      %v3844 = vpack.c.b16 %v3841, %v3840
      %v3845 = vpack.c.b16 %v3843, %v3842
      %v3849 = vsel %vm1039, %v3817, 0
      %v3852 = vsel %vm1039, %v3818, 0
      %v3855 = vsel %vm1039, %v3819, 0
      %v3858 = vsel %vm1039, %v3820, 0
      %v3861 = vsel %vm1039, %v3821, 0
      %v3864 = vsel %vm1039, %v3822, 0
      %v3867 = vsel %vm1039, %v3823, 0
      %v3870 = vsel %vm1039, %v3824, 0
      %3872 = vmatprep.subr.bf16.mxu0 0
      %3873 = vmatpush1.bf16.msra.mxu0 %v3844
      %3874 = vmatprep.subr.bf16.mxu0 0
      %3875 = vmatpush1.bf16.msra.mxu0 %v3845
      %3876 = vmatprep.subr.bf16.mxu0 0
      %3877 = vmatpush1.bf16.msra.mxu0 0
      %3878 = vmatprep.subr.bf16.mxu0 0
      %3879 = vmatpush1.bf16.msra.mxu0 0
      %3880 = vmatprep.subr.bf16.mxu0 0
      %3881 = vmatpush1.bf16.msra.mxu0 0
      %3882 = vmatprep.subr.bf16.mxu0 0
      %3883 = vmatpush1.bf16.msra.mxu0 0
      %3884 = vmatprep.subr.bf16.mxu0 0
      %3885 = vmatpush1.bf16.msra.mxu0 0
      %3886 = vmatprep.subr.bf16.mxu0 0
      %3887 = vmatpush1.bf16.msra.mxu0 0
      %3888 = vmatprep.subr.bf16.mxu0 0
      %3889 = vmatpush1.bf16.msra.mxu0 0
      %3890 = vmatprep.subr.bf16.mxu0 0
      %3891 = vmatpush1.bf16.msra.mxu0 0
      %3892 = vmatprep.subr.bf16.mxu0 0
      %3893 = vmatpush1.bf16.msra.mxu0 0
      %3894 = vmatprep.subr.bf16.mxu0 0
      %3895 = vmatpush1.bf16.msra.mxu0 0
      %3896 = vmatprep.subr.bf16.mxu0 0
      %3897 = vmatpush1.bf16.msra.mxu0 0
      %3898 = vmatprep.subr.bf16.mxu0 0
      %3899 = vmatpush1.bf16.msra.mxu0 0
      %3900 = vmatprep.subr.bf16.mxu0 0
      %3901 = vmatpush1.bf16.msra.mxu0 0
      %3902 = vmatprep.subr.bf16.mxu0 0
      %3903 = vmatpush1.bf16.msra.mxu0 0
      %3904 = vmatprep.mubr.bf16.mxu0 0
      %3905 = vmatmul.mubr.bf16.gmra.mrb[0].mxu0 %v3849
      %v3906 = vpop.f32.mrb[0].mxu0
      %v3907 = vadd.f32 %v3834, %v3906
      %v3908 = vpop.f32.mrb[0].mxu0
      %v3909 = vpop.f32.mrb[0].mxu0
      %v3910 = vadd.f32 %v3834, %v3909
      %v3911 = vpop.f32.mrb[0].mxu0
      %3912 = vmatprep.mubr.bf16.mxu0 0
      %3913 = vmatmul.mubr.bf16.gmra.mrb[0].mxu0 %v3852
      %v3914 = vpop.f32.mrb[0].mxu0
      %v3915 = vadd.f32 %v3834, %v3914
      %v3916 = vpop.f32.mrb[0].mxu0
      %v3917 = vpop.f32.mrb[0].mxu0
      %v3918 = vadd.f32 %v3834, %v3917
      %v3919 = vpop.f32.mrb[0].mxu0
      %3920 = vmatprep.mubr.bf16.mxu0 0
      %3921 = vmatmul.mubr.bf16.gmra.mrb[0].mxu0 %v3855
      %v3922 = vpop.f32.mrb[0].mxu0
      %v3923 = vadd.f32 %v3834, %v3922
      %v3924 = vpop.f32.mrb[0].mxu0
      %v3925 = vpop.f32.mrb[0].mxu0
      %v3926 = vadd.f32 %v3834, %v3925
      %v3927 = vpop.f32.mrb[0].mxu0
      %3928 = vmatprep.mubr.bf16.mxu0 0
      %3929 = vmatmul.mubr.bf16.gmra.mrb[0].mxu0 %v3858
      %v3930 = vpop.f32.mrb[0].mxu0
      %v3931 = vadd.f32 %v3834, %v3930
      %v3932 = vpop.f32.mrb[0].mxu0
      %v3933 = vpop.f32.mrb[0].mxu0
      %v3934 = vadd.f32 %v3834, %v3933
      %v3935 = vpop.f32.mrb[0].mxu0
      %3936 = vmatprep.mubr.bf16.mxu0 0
      %3937 = vmatmul.mubr.bf16.gmra.mrb[0].mxu0 %v3861
      %v3938 = vpop.f32.mrb[0].mxu0
      %v3939 = vadd.f32 %v3834, %v3938
      %v3940 = vpop.f32.mrb[0].mxu0
      %v3941 = vpop.f32.mrb[0].mxu0
      %v3942 = vadd.f32 %v3834, %v3941
      %v3943 = vpop.f32.mrb[0].mxu0
      %3944 = vmatprep.mubr.bf16.mxu0 0
      %3945 = vmatmul.mubr.bf16.gmra.mrb[0].mxu0 %v3864
      %v3946 = vpop.f32.mrb[0].mxu0
      %v3947 = vadd.f32 %v3834, %v3946
      %v3948 = vpop.f32.mrb[0].mxu0
      %v3949 = vpop.f32.mrb[0].mxu0
      %v3950 = vadd.f32 %v3834, %v3949
      %v3951 = vpop.f32.mrb[0].mxu0
      %3952 = vmatprep.mubr.bf16.mxu0 0
      %3953 = vmatmul.mubr.bf16.gmra.mrb[0].mxu0 %v3867
      %v3954 = vpop.f32.mrb[0].mxu0
      %v3955 = vadd.f32 %v3834, %v3954
      %v3956 = vpop.f32.mrb[0].mxu0
      %v3957 = vpop.f32.mrb[0].mxu0
      %v3958 = vadd.f32 %v3834, %v3957
      %v3959 = vpop.f32.mrb[0].mxu0
      %3960 = vmatprep.mubr.bf16.mxu0 0
      %3961 = vmatmul.mubr.bf16.gmra.mrb[0].mxu0 %v3870
      %v3962 = vpop.f32.mrb[0].mxu0
      %v3963 = vadd.f32 %v3834, %v3962
      %v3964 = vpop.f32.mrb[0].mxu0
      %v3965 = vpop.f32.mrb[0].mxu0
      %v3966 = vadd.f32 %v3834, %v3965
      %v3967 = vpop.f32.mrb[0].mxu0
      %3968 = vdwg.mxu0
      %v3969 = vmax.f32 %v3907, 0.0
      %v3970 = vmax.f32 %v3910, 0.0
      %v3971 = vmax.f32 %v3915, 0.0
      %v3972 = vmax.f32 %v3918, 0.0
      %v3973 = vmax.f32 %v3923, 0.0
      %v3974 = vmax.f32 %v3926, 0.0
      %v3975 = vmax.f32 %v3931, 0.0
      %v3976 = vmax.f32 %v3934, 0.0
      %v3977 = vmax.f32 %v3939, 0.0
      %v3978 = vmax.f32 %v3942, 0.0
      %v3979 = vmax.f32 %v3947, 0.0
      %v3980 = vmax.f32 %v3950, 0.0
      %v3981 = vmax.f32 %v3955, 0.0
      %v3982 = vmax.f32 %v3958, 0.0
      %v3983 = vmax.f32 %v3963, 0.0
      %v3984 = vmax.f32 %v3966, 0.0
      %v3985 = vpack.c.bf16 %v3970, %v3969
      %v3986 = vpack.c.bf16 %v3972, %v3971
      %v3987 = vpack.c.bf16 %v3974, %v3973
      %v3988 = vpack.c.bf16 %v3976, %v3975
      %v3989 = vpack.c.bf16 %v3978, %v3977
      %v3990 = vpack.c.bf16 %v3980, %v3979
      %v3991 = vpack.c.bf16 %v3982, %v3981
      %v3992 = vpack.c.bf16 %v3984, %v3983
      %v3993 = vld [vmem:[%s14] sm:$0xf]
      %v3994 = vld [vmem:[%s14 + $0x4] sm:$0xf]
      %v3995 = vld [vmem:[%s14 + $0x8] sm:$0xf]
      %v3996 = vld [vmem:[%s14 + $0xc] sm:$0xf]
      %v3997 = vld [vmem:[%s14 + $0x10] sm:$0xf]
      %v3998 = vld [vmem:[%s14 + $0x14] sm:$0xf]
      %v3999 = vld [vmem:[%s14 + $0x18] sm:$0xf]
      %v4000 = vld [vmem:[%s14 + $0x1c] sm:$0xf]
      %v4001 = vld [vmem:[%s15] sm:$0x1]
      %v4003 = vlaneseq
      %v4004 = vshrl.u32 %v4003, 7
      %v4005 = vsub.s32 0, %v4004
      %v4006 = vrot.slane %v4001, %v4005
      %v4016 = vunpack.c.l.b16 %v3993
      %v4017 = vunpack.c.l.b16 %v3994
      %v4018 = vunpack.c.l.b16 %v3995
      %v4019 = vunpack.c.l.b16 %v3996
      %v4020 = vunpack.c.l.b16 %v3997
      %v4021 = vunpack.c.l.b16 %v3998
      %v4022 = vunpack.c.l.b16 %v3999
      %v4023 = vunpack.c.l.b16 %v4000
      %v4024 = vpack.c.b16 %v4017, %v4016
      %v4025 = vpack.c.b16 %v4019, %v4018
      %v4026 = vpack.c.b16 %v4021, %v4020
      %v4027 = vpack.c.b16 %v4023, %v4022
      %vm4032 = vcmask 523264
      %v4034 = vsel %vm4032, %v3985, 0
      %v4037 = vsel %vm4032, %v3986, 0
      %v4040 = vsel %vm4032, %v3987, 0
      %v4043 = vsel %vm4032, %v3988, 0
      %v4046 = vsel %vm4032, %v3989, 0
      %v4049 = vsel %vm4032, %v3990, 0
      %v4052 = vsel %vm4032, %v3991, 0
      %v4055 = vsel %vm4032, %v3992, 0
      %4057 = vmatprep.subr.bf16.mxu0 0
      %4058 = vmatpush1.bf16.msra.mxu0 %v4024
      %4059 = vmatprep.subr.bf16.mxu0 0
      %4060 = vmatpush1.bf16.msra.mxu0 %v4025
      %4061 = vmatprep.subr.bf16.mxu0 0
      %4062 = vmatpush1.bf16.msra.mxu0 %v4026
      %4063 = vmatprep.subr.bf16.mxu0 0
      %4064 = vmatpush1.bf16.msra.mxu0 %v4027
      %4065 = vmatprep.subr.bf16.mxu0 0
      %4066 = vmatpush1.bf16.msra.mxu0 0
      %4067 = vmatprep.subr.bf16.mxu0 0
      %4068 = vmatpush1.bf16.msra.mxu0 0
      %4069 = vmatprep.subr.bf16.mxu0 0
      %4070 = vmatpush1.bf16.msra.mxu0 0
      %4071 = vmatprep.subr.bf16.mxu0 0
      %4072 = vmatpush1.bf16.msra.mxu0 0
      %4073 = vmatprep.subr.bf16.mxu0 0
      %4074 = vmatpush1.bf16.msra.mxu0 0
      %4075 = vmatprep.subr.bf16.mxu0 0
      %4076 = vmatpush1.bf16.msra.mxu0 0
      %4077 = vmatprep.subr.bf16.mxu0 0
      %4078 = vmatpush1.bf16.msra.mxu0 0
      %4079 = vmatprep.subr.bf16.mxu0 0
      %4080 = vmatpush1.bf16.msra.mxu0 0
      %4081 = vmatprep.subr.bf16.mxu0 0
      %4082 = vmatpush1.bf16.msra.mxu0 0
      %4083 = vmatprep.subr.bf16.mxu0 0
      %4084 = vmatpush1.bf16.msra.mxu0 0
      %4085 = vmatprep.subr.bf16.mxu0 0
      %4086 = vmatpush1.bf16.msra.mxu0 0
      %4087 = vmatprep.subr.bf16.mxu0 0
      %4088 = vmatpush1.bf16.msra.mxu0 0
      %4089 = vmatprep.mubr.bf16.mxu0 0
      %4090 = vmatmul.mubr.bf16.gmra.mrb[0].mxu0 %v4034
      %v4091 = vpop.f32.mrb[0].mxu0
      %v4092 = vadd.f32 %v4006, %v4091
      %v4093 = vpop.f32.mrb[0].mxu0
      %v4094 = vpop.f32.mrb[0].mxu0
      %v4095 = vadd.f32 %v4006, %v4094
      %v4096 = vpop.f32.mrb[0].mxu0
      %4097 = vmatprep.mubr.bf16.mxu0 0
      %4098 = vmatmul.mubr.bf16.gmra.mrb[0].mxu0 %v4037
      %v4099 = vpop.f32.mrb[0].mxu0
      %v4100 = vadd.f32 %v4006, %v4099
      %v4101 = vpop.f32.mrb[0].mxu0
      %v4102 = vpop.f32.mrb[0].mxu0
      %v4103 = vadd.f32 %v4006, %v4102
      %v4104 = vpop.f32.mrb[0].mxu0
      %4105 = vmatprep.mubr.bf16.mxu0 0
      %4106 = vmatmul.mubr.bf16.gmra.mrb[0].mxu0 %v4040
      %v4107 = vpop.f32.mrb[0].mxu0
      %v4108 = vadd.f32 %v4006, %v4107
      %v4109 = vpop.f32.mrb[0].mxu0
      %v4110 = vpop.f32.mrb[0].mxu0
      %v4111 = vadd.f32 %v4006, %v4110
      %v4112 = vpop.f32.mrb[0].mxu0
      %4113 = vmatprep.mubr.bf16.mxu0 0
      %4114 = vmatmul.mubr.bf16.gmra.mrb[0].mxu0 %v4043
      %v4115 = vpop.f32.mrb[0].mxu0
      %v4116 = vadd.f32 %v4006, %v4115
      %v4117 = vpop.f32.mrb[0].mxu0
      %v4118 = vpop.f32.mrb[0].mxu0
      %v4119 = vadd.f32 %v4006, %v4118
      %v4120 = vpop.f32.mrb[0].mxu0
      %4121 = vmatprep.mubr.bf16.mxu0 0
      %4122 = vmatmul.mubr.bf16.gmra.mrb[0].mxu0 %v4046
      %v4123 = vpop.f32.mrb[0].mxu0
      %v4124 = vadd.f32 %v4006, %v4123
      %v4125 = vpop.f32.mrb[0].mxu0
      %v4126 = vpop.f32.mrb[0].mxu0
      %v4127 = vadd.f32 %v4006, %v4126
      %v4128 = vpop.f32.mrb[0].mxu0
      %4129 = vmatprep.mubr.bf16.mxu0 0
      %4130 = vmatmul.mubr.bf16.gmra.mrb[0].mxu0 %v4049
      %v4131 = vpop.f32.mrb[0].mxu0
      %v4132 = vadd.f32 %v4006, %v4131
      %v4133 = vpop.f32.mrb[0].mxu0
      %v4134 = vpop.f32.mrb[0].mxu0
      %v4135 = vadd.f32 %v4006, %v4134
      %v4136 = vpop.f32.mrb[0].mxu0
      %4137 = vmatprep.mubr.bf16.mxu0 0
      %4138 = vmatmul.mubr.bf16.gmra.mrb[0].mxu0 %v4052
      %v4139 = vpop.f32.mrb[0].mxu0
      %v4140 = vadd.f32 %v4006, %v4139
      %v4141 = vpop.f32.mrb[0].mxu0
      %v4142 = vpop.f32.mrb[0].mxu0
      %v4143 = vadd.f32 %v4006, %v4142
      %v4144 = vpop.f32.mrb[0].mxu0
      %4145 = vmatprep.mubr.bf16.mxu0 0
      %4146 = vmatmul.mubr.bf16.gmra.mrb[0].mxu0 %v4055
      %v4147 = vpop.f32.mrb[0].mxu0
      %v4148 = vadd.f32 %v4006, %v4147
      %v4149 = vpop.f32.mrb[0].mxu0
      %v4150 = vpop.f32.mrb[0].mxu0
      %v4151 = vadd.f32 %v4006, %v4150
      %v4152 = vpop.f32.mrb[0].mxu0
      %4153 = vdwg.mxu0
      %v4154 = vadd.f32 %v3801, %v4092
      %v4155 = vadd.f32 %v3802, %v4095
      %v4156 = vadd.f32 %v3803, %v4100
      %v4157 = vadd.f32 %v3804, %v4103
      %v4158 = vadd.f32 %v3805, %v4108
      %v4159 = vadd.f32 %v3806, %v4111
      %v4160 = vadd.f32 %v3807, %v4116
      %v4161 = vadd.f32 %v3808, %v4119
      %v4162 = vadd.f32 %v3809, %v4124
      %v4163 = vadd.f32 %v3810, %v4127
      %v4164 = vadd.f32 %v3811, %v4132
      %v4165 = vadd.f32 %v3812, %v4135
      %v4166 = vadd.f32 %v3813, %v4140
      %v4167 = vadd.f32 %v3814, %v4143
      %v4168 = vadd.f32 %v3815, %v4148
      %v4169 = vadd.f32 %v3816, %v4151
      %v4170 = vsel %vm1039, %v4154, 0.0
      %4171 = vadd.xlane.f32.xlu0 %v4170
      %v4172 = vpop.xlane.xlu0 %4171
      %v4173 = vsel %vm1039, %v4155, 0.0
      %4174 = vadd.xlane.f32.xlu0 %v4173
      %v4175 = vpop.xlane.xlu0 %4174
      %v4176 = vsel %vm1039, %v4156, 0.0
      %4177 = vadd.xlane.f32.xlu0 %v4176
      %v4178 = vpop.xlane.xlu0 %4177
      %v4179 = vsel %vm1039, %v4157, 0.0
      %4180 = vadd.xlane.f32.xlu0 %v4179
      %v4181 = vpop.xlane.xlu0 %4180
      %v4182 = vsel %vm1039, %v4158, 0.0
      %4183 = vadd.xlane.f32.xlu0 %v4182
      %v4184 = vpop.xlane.xlu0 %4183
      %v4185 = vsel %vm1039, %v4159, 0.0
      %4186 = vadd.xlane.f32.xlu0 %v4185
      %v4187 = vpop.xlane.xlu0 %4186
      %v4188 = vsel %vm1039, %v4160, 0.0
      %4189 = vadd.xlane.f32.xlu0 %v4188
      %v4190 = vpop.xlane.xlu0 %4189
      %v4191 = vsel %vm1039, %v4161, 0.0
      %4192 = vadd.xlane.f32.xlu0 %v4191
      %v4193 = vpop.xlane.xlu0 %4192
      %v4194 = vsel %vm1039, %v4162, 0.0
      %4195 = vadd.xlane.f32.xlu0 %v4194
      %v4196 = vpop.xlane.xlu0 %4195
      %v4197 = vsel %vm1039, %v4163, 0.0
      %4198 = vadd.xlane.f32.xlu0 %v4197
      %v4199 = vpop.xlane.xlu0 %4198
      %v4200 = vsel %vm1039, %v4164, 0.0
      %4201 = vadd.xlane.f32.xlu0 %v4200
      %v4202 = vpop.xlane.xlu0 %4201
      %v4203 = vsel %vm1039, %v4165, 0.0
      %4204 = vadd.xlane.f32.xlu0 %v4203
      %v4205 = vpop.xlane.xlu0 %4204
      %v4206 = vsel %vm1039, %v4166, 0.0
      %4207 = vadd.xlane.f32.xlu0 %v4206
      %v4208 = vpop.xlane.xlu0 %4207
      %v4209 = vsel %vm1039, %v4167, 0.0
      %4210 = vadd.xlane.f32.xlu0 %v4209
      %v4211 = vpop.xlane.xlu0 %4210
      %v4212 = vsel %vm1039, %v4168, 0.0
      %4213 = vadd.xlane.f32.xlu0 %v4212
      %v4214 = vpop.xlane.xlu0 %4213
      %v4215 = vsel %vm1039, %v4169, 0.0
      %4216 = vadd.xlane.f32.xlu0 %v4215
      %v4217 = vpop.xlane.xlu0 %4216
      %v4218 = vmul.f32 %v4172, %v3610
      %v4219 = vmul.f32 %v4175, %v3610
      %v4220 = vmul.f32 %v4178, %v3610
      %v4221 = vmul.f32 %v4181, %v3610
      %v4222 = vmul.f32 %v4184, %v3610
      %v4223 = vmul.f32 %v4187, %v3610
      %v4224 = vmul.f32 %v4190, %v3610
      %v4225 = vmul.f32 %v4193, %v3610
      %v4226 = vmul.f32 %v4196, %v3610
      %v4227 = vmul.f32 %v4199, %v3610
      %v4228 = vmul.f32 %v4202, %v3610
      %v4229 = vmul.f32 %v4205, %v3610
      %v4230 = vmul.f32 %v4208, %v3610
      %v4231 = vmul.f32 %v4211, %v3610
      %v4232 = vmul.f32 %v4214, %v3610
      %v4233 = vmul.f32 %v4217, %v3610
      %v4234 = vsub.f32 %v4154, %v4218
      %v4235 = vsub.f32 %v4155, %v4219
      %v4236 = vsub.f32 %v4156, %v4220
      %v4237 = vsub.f32 %v4157, %v4221
      %v4238 = vsub.f32 %v4158, %v4222
      %v4239 = vsub.f32 %v4159, %v4223
      %v4240 = vsub.f32 %v4160, %v4224
      %v4241 = vsub.f32 %v4161, %v4225
      %v4242 = vsub.f32 %v4162, %v4226
      %v4243 = vsub.f32 %v4163, %v4227
      %v4244 = vsub.f32 %v4164, %v4228
      %v4245 = vsub.f32 %v4165, %v4229
      %v4246 = vsub.f32 %v4166, %v4230
      %v4247 = vsub.f32 %v4167, %v4231
      %v4248 = vsub.f32 %v4168, %v4232
      %v4249 = vsub.f32 %v4169, %v4233
      %v4250 = vmul.f32 %v4234, %v4234
      %v4251 = vmul.f32 %v4235, %v4235
      %v4252 = vmul.f32 %v4236, %v4236
      %v4253 = vmul.f32 %v4237, %v4237
      %v4254 = vmul.f32 %v4238, %v4238
      %v4255 = vmul.f32 %v4239, %v4239
      %v4256 = vmul.f32 %v4240, %v4240
      %v4257 = vmul.f32 %v4241, %v4241
      %v4258 = vmul.f32 %v4242, %v4242
      %v4259 = vmul.f32 %v4243, %v4243
      %v4260 = vmul.f32 %v4244, %v4244
      %v4261 = vmul.f32 %v4245, %v4245
      %v4262 = vmul.f32 %v4246, %v4246
      %v4263 = vmul.f32 %v4247, %v4247
      %v4264 = vmul.f32 %v4248, %v4248
      %v4265 = vmul.f32 %v4249, %v4249
      %v4266 = vsel %vm1039, %v4250, 0.0
      %4267 = vadd.xlane.f32.xlu0 %v4266
      %v4268 = vpop.xlane.xlu0 %4267
      %v4269 = vsel %vm1039, %v4251, 0.0
      %4270 = vadd.xlane.f32.xlu0 %v4269
      %v4271 = vpop.xlane.xlu0 %4270
      %v4272 = vsel %vm1039, %v4252, 0.0
      %4273 = vadd.xlane.f32.xlu0 %v4272
      %v4274 = vpop.xlane.xlu0 %4273
      %v4275 = vsel %vm1039, %v4253, 0.0
      %4276 = vadd.xlane.f32.xlu0 %v4275
      %v4277 = vpop.xlane.xlu0 %4276
      %v4278 = vsel %vm1039, %v4254, 0.0
      %4279 = vadd.xlane.f32.xlu0 %v4278
      %v4280 = vpop.xlane.xlu0 %4279
      %v4281 = vsel %vm1039, %v4255, 0.0
      %4282 = vadd.xlane.f32.xlu0 %v4281
      %v4283 = vpop.xlane.xlu0 %4282
      %v4284 = vsel %vm1039, %v4256, 0.0
      %4285 = vadd.xlane.f32.xlu0 %v4284
      %v4286 = vpop.xlane.xlu0 %4285
      %v4287 = vsel %vm1039, %v4257, 0.0
      %4288 = vadd.xlane.f32.xlu0 %v4287
      %v4289 = vpop.xlane.xlu0 %4288
      %v4290 = vsel %vm1039, %v4258, 0.0
      %4291 = vadd.xlane.f32.xlu0 %v4290
      %v4292 = vpop.xlane.xlu0 %4291
      %v4293 = vsel %vm1039, %v4259, 0.0
      %4294 = vadd.xlane.f32.xlu0 %v4293
      %v4295 = vpop.xlane.xlu0 %4294
      %v4296 = vsel %vm1039, %v4260, 0.0
      %4297 = vadd.xlane.f32.xlu0 %v4296
      %v4298 = vpop.xlane.xlu0 %4297
      %v4299 = vsel %vm1039, %v4261, 0.0
      %4300 = vadd.xlane.f32.xlu0 %v4299
      %v4301 = vpop.xlane.xlu0 %4300
      %v4302 = vsel %vm1039, %v4262, 0.0
      %4303 = vadd.xlane.f32.xlu0 %v4302
      %v4304 = vpop.xlane.xlu0 %4303
      %v4305 = vsel %vm1039, %v4263, 0.0
      %4306 = vadd.xlane.f32.xlu0 %v4305
      %v4307 = vpop.xlane.xlu0 %4306
      %v4308 = vsel %vm1039, %v4264, 0.0
      %4309 = vadd.xlane.f32.xlu0 %v4308
      %v4310 = vpop.xlane.xlu0 %4309
      %v4311 = vsel %vm1039, %v4265, 0.0
      %4312 = vadd.xlane.f32.xlu0 %v4311
      %v4313 = vpop.xlane.xlu0 %4312
      %v4314 = vmul.f32 %v4268, %v3610
      %v4315 = vmul.f32 %v4271, %v3610
      %v4316 = vmul.f32 %v4274, %v3610
      %v4317 = vmul.f32 %v4277, %v3610
      %v4318 = vmul.f32 %v4280, %v3610
      %v4319 = vmul.f32 %v4283, %v3610
      %v4320 = vmul.f32 %v4286, %v3610
      %v4321 = vmul.f32 %v4289, %v3610
      %v4322 = vmul.f32 %v4292, %v3610
      %v4323 = vmul.f32 %v4295, %v3610
      %v4324 = vmul.f32 %v4298, %v3610
      %v4325 = vmul.f32 %v4301, %v3610
      %v4326 = vmul.f32 %v4304, %v3610
      %v4327 = vmul.f32 %v4307, %v3610
      %v4328 = vmul.f32 %v4310, %v3610
      %v4329 = vmul.f32 %v4313, %v3610
      %v4330 = vadd.f32 %v4314, 1e-06
      %v4331 = vadd.f32 %v4315, 1e-06
      %v4332 = vadd.f32 %v4316, 1e-06
      %v4333 = vadd.f32 %v4317, 1e-06
      %v4334 = vadd.f32 %v4318, 1e-06
      %v4335 = vadd.f32 %v4319, 1e-06
      %v4336 = vadd.f32 %v4320, 1e-06
      %v4337 = vadd.f32 %v4321, 1e-06
      %v4338 = vadd.f32 %v4322, 1e-06
      %v4339 = vadd.f32 %v4323, 1e-06
      %v4340 = vadd.f32 %v4324, 1e-06
      %v4341 = vadd.f32 %v4325, 1e-06
      %v4342 = vadd.f32 %v4326, 1e-06
      %v4343 = vadd.f32 %v4327, 1e-06
      %v4344 = vadd.f32 %v4328, 1e-06
      %v4345 = vadd.f32 %v4329, 1e-06
      %v4346 = vrsqrt.pop %v4330
      %v4347 = vrsqrt.pop %v4331
      %v4348 = vrsqrt.pop %v4332
      %v4349 = vrsqrt.pop %v4333
      %v4350 = vrsqrt.pop %v4334
      %v4351 = vrsqrt.pop %v4335
      %v4352 = vrsqrt.pop %v4336
      %v4353 = vrsqrt.pop %v4337
      %v4354 = vrsqrt.pop %v4338
      %v4355 = vrsqrt.pop %v4339
      %v4356 = vrsqrt.pop %v4340
      %v4357 = vrsqrt.pop %v4341
      %v4358 = vrsqrt.pop %v4342
      %v4359 = vrsqrt.pop %v4343
      %v4360 = vrsqrt.pop %v4344
      %v4361 = vrsqrt.pop %v4345
      %v4362 = vmul.f32 %v4234, %v4346
      %v4363 = vmul.f32 %v4235, %v4347
      %v4364 = vmul.f32 %v4236, %v4348
      %v4365 = vmul.f32 %v4237, %v4349
      %v4366 = vmul.f32 %v4238, %v4350
      %v4367 = vmul.f32 %v4239, %v4351
      %v4368 = vmul.f32 %v4240, %v4352
      %v4369 = vmul.f32 %v4241, %v4353
      %v4370 = vmul.f32 %v4242, %v4354
      %v4371 = vmul.f32 %v4243, %v4355
      %v4372 = vmul.f32 %v4244, %v4356
      %v4373 = vmul.f32 %v4245, %v4357
      %v4374 = vmul.f32 %v4246, %v4358
      %v4375 = vmul.f32 %v4247, %v4359
      %v4376 = vmul.f32 %v4248, %v4360
      %v4377 = vmul.f32 %v4249, %v4361
      %v4378 = vld [vmem:[%s16] sm:$0x1]
      %v4380 = vlaneseq
      %v4381 = vshrl.u32 %v4380, 7
      %v4382 = vsub.s32 0, %v4381
      %v4383 = vrot.slane %v4378, %v4382
      %v4385 = vmul.f32 %v4362, %v4383
      %v4386 = vmul.f32 %v4363, %v4383
      %v4387 = vmul.f32 %v4364, %v4383
      %v4388 = vmul.f32 %v4365, %v4383
      %v4389 = vmul.f32 %v4366, %v4383
      %v4390 = vmul.f32 %v4367, %v4383
      %v4391 = vmul.f32 %v4368, %v4383
      %v4392 = vmul.f32 %v4369, %v4383
      %v4393 = vmul.f32 %v4370, %v4383
      %v4394 = vmul.f32 %v4371, %v4383
      %v4395 = vmul.f32 %v4372, %v4383
      %v4396 = vmul.f32 %v4373, %v4383
      %v4397 = vmul.f32 %v4374, %v4383
      %v4398 = vmul.f32 %v4375, %v4383
      %v4399 = vmul.f32 %v4376, %v4383
      %v4400 = vmul.f32 %v4377, %v4383
      %v4401 = vld [vmem:[%s17] sm:$0x1]
      %v4403 = vlaneseq
      %v4404 = vshrl.u32 %v4403, 7
      %v4405 = vsub.s32 0, %v4404
      %v4406 = vrot.slane %v4401, %v4405
      %v4408 = vadd.f32 %v4385, %v4406
      %v4409 = vadd.f32 %v4386, %v4406
      %v4410 = vadd.f32 %v4387, %v4406
      %v4411 = vadd.f32 %v4388, %v4406
      %v4412 = vadd.f32 %v4389, %v4406
      %v4413 = vadd.f32 %v4390, %v4406
      %v4414 = vadd.f32 %v4391, %v4406
      %v4415 = vadd.f32 %v4392, %v4406
      %v4416 = vadd.f32 %v4393, %v4406
      %v4417 = vadd.f32 %v4394, %v4406
      %v4418 = vadd.f32 %v4395, %v4406
      %v4419 = vadd.f32 %v4396, %v4406
      %v4420 = vadd.f32 %v4397, %v4406
      %v4421 = vadd.f32 %v4398, %v4406
      %v4422 = vadd.f32 %v4399, %v4406
      %v4423 = vadd.f32 %v4400, %v4406
      %4424 = vst.msk [vmem:[%s597] sm:$0xff] %vm1039, %v4408
      %4425 = vst.msk [vmem:[%s597 + $0x8] sm:$0xff] %vm1039, %v4409
      %4426 = vst.msk [vmem:[%s597 + $0x10] sm:$0xff] %vm1039, %v4410
      %4427 = vst.msk [vmem:[%s597 + $0x18] sm:$0xff] %vm1039, %v4411
      %4428 = vst.msk [vmem:[%s597 + $0x20] sm:$0xff] %vm1039, %v4412
      %4429 = vst.msk [vmem:[%s597 + $0x28] sm:$0xff] %vm1039, %v4413
      %4430 = vst.msk [vmem:[%s597 + $0x30] sm:$0xff] %vm1039, %v4414
      %4431 = vst.msk [vmem:[%s597 + $0x38] sm:$0xff] %vm1039, %v4415
      %4432 = vst.msk [vmem:[%s597 + $0x40] sm:$0xff] %vm1039, %v4416
      %4433 = vst.msk [vmem:[%s597 + $0x48] sm:$0xff] %vm1039, %v4417
      %4434 = vst.msk [vmem:[%s597 + $0x50] sm:$0xff] %vm1039, %v4418
      %4435 = vst.msk [vmem:[%s597 + $0x58] sm:$0xff] %vm1039, %v4419
      %4436 = vst.msk [vmem:[%s597 + $0x60] sm:$0xff] %vm1039, %v4420
      %4437 = vst.msk [vmem:[%s597 + $0x68] sm:$0xff] %vm1039, %v4421
      %4438 = vst.msk [vmem:[%s597 + $0x70] sm:$0xff] %vm1039, %v4422
      %4439 = vst.msk [vmem:[%s597 + $0x78] sm:$0xff] %vm1039, %v4423
      %s4440 = smul.u32 16, %s34
      %p4441 = scmp.lt.s32.totalorder %s33, 1
      %s4442 = scalar_select %p4441, %s33, 1
      %p4443 = scmp.lt.s32.totalorder %s4440, 15
      %s4444 = scalar_select %p4443, %s4440, 15
      %s4445 = smul.addr %s4442, 16
      %s4446 = sadd.s32 %s4444, %s4445
      %s4447 = smul.addr %s4446, 8
      %s4448 = scalar_lea.vmem %s18, %s4447
      // Predicated region
      $region97: #{tpu_custom_call.1} parent=91 // pred_check
        %p4449 = pneg %p444
      $region98: #{tpu_custom_call.1} parent=91 // pred_check_branch
        %4451 = sbr.rel (%p4449) target = $region100
      $region99: #{tpu_custom_call.1} parent=91 // pred_region
        %s4452 = smul.u32 16, %s34
      $region100: #{tpu_custom_call.1} parent=91 // pred_fallthru
        _
    $region92: #{tpu_custom_call.1} parent=5 // pred_fallthru
      _
    %p4453 = scmp.le.s32.totalorder 2, %s24
    // Predicated region
    $region101: #{tpu_custom_call.1} parent=5 // pred_check
      %p4454 = pneg %p4453
    $region102: #{tpu_custom_call.1} parent=5 // pred_check_branch
      %4456 = sbr.rel (%p4454) target = $region104
    $region103: #{tpu_custom_call.1} parent=5 // pred_region
      %s4457 = ssub.s32 %s24, 2
      // Predicated region
      $region105: #{tpu_custom_call.1} parent=103 // pred_check
        %p4458 = pneg %p450
      $region106: #{tpu_custom_call.1} parent=103 // pred_check_branch
        %4460 = sbr.rel (%p4458) target = $region108
      $region107: #{tpu_custom_call.1} parent=103 // pred_region
        %s4461 = smul.u32 16, %s36
        %p4462 = scmp.lt.s32.totalorder %s35, 1
        %s4463 = scalar_select %p4462, %s35, 1
        %p4464 = scmp.lt.s32.totalorder %s4461, 15
        %s4465 = scalar_select %p4464, %s4461, 15
        %s4466 = smul.addr %s4463, 16
        %s4467 = sadd.s32 %s4465, %s4466
        %s4468 = smul.addr %s4467, 8
        %s4469 = scalar_lea.vmem %s18, %s4468
      $region108: #{tpu_custom_call.1} parent=103 // pred_fallthru
        _
    $region104: #{tpu_custom_call.1} parent=5 // pred_fallthru
      _
  $region6: #{tpu_custom_call.1} parent=0 // loop_footer
    %s28 = sadd.s32 1, %s24
  $region7: #{tpu_custom_call.1} parent=0 // loop_footer_branch
    %23 = sbr.rel target = $region3
  $region8: #{tpu_custom_call.1} parent=0 // loop_exit
    _

</llo_original>
